<compile_context>
chip_gen: v5e
topology: v5e:2x2
jax: 0.10.0
libtpu: 0.0.40
codegen_flags: <defaults>
</compile_context>

<pallas_src>
import functools

import jax
import jax.numpy as jnp
from jax.experimental import pallas as pl
from jax.experimental.pallas import tpu as pltpu

EPS = 1e-5
# Right-sized scoped-VMEM limit (review item: 48 MiB starved v7x's 64 MiB part).
VMEM_LIMIT = 32 * 1024 * 1024


# ---------------------------------------------------------------- helpers ----
def _layernorm(x, g, b):
    mu = jnp.mean(x, axis=-1, keepdims=True)
    var = jnp.mean(jnp.square(x - mu), axis=-1, keepdims=True)
    return (x - mu) * jax.lax.rsqrt(var + EPS) * g + b


def _gelu(x):
    # TODO(synk): torch nn.GELU default is the exact erf form; tanh approximation used here.
    return jax.nn.gelu(x, approximate=True)


def _pick_row_tile(m, cap=512):
    """Largest sublane-aligned row tile (<= cap) that divides m; fall back to full m."""
    for t in (512, 256, 128, 64, 32, 16, 8):
        if t <= cap and m % t == 0:
            return t
    return m


def _pick_batch_tile(batch, n, c):
    """Largest divisor of `batch` whose f32 activation carry fits ~8 MiB, preferring to
    keep >=2 grid tiles on the parallel axis so both v7x TensorCores get work."""
    per_elem = n * c * 4
    cap = max(1, (8 << 20) // max(per_elem, 1))
    divisors = [t for t in range(1, batch + 1) if batch % t == 0 and t <= cap]
    if not divisors:
        divisors = [1]
    tile = max(divisors)
    if tile == batch and batch > 1:
        smaller = [t for t in divisors if t <= batch // 2]
        if smaller:
            tile = max(smaller)
    return tile


# ------------------------------------------------------------ mlp_s kernel ---
def _mlp_s_kernel(x_ref, g_ref, b_ref, w1_ref, b1_ref, w2_ref, b2_ref, o_ref):
    x = x_ref[...].astype(jnp.float32)                               # (TM, C)
    xn = _layernorm(x, g_ref[...], b_ref[...]).astype(jnp.bfloat16)
    h = _gelu(jnp.dot(xn, w1_ref[...], preferred_element_type=jnp.float32) + b1_ref[...])
    y = jnp.dot(h.astype(jnp.bfloat16), w2_ref[...],
                preferred_element_type=jnp.float32) + b2_ref[...]
    o_ref[...] = y.astype(o_ref.dtype)


def mlp_s(fea, p):
    B, N, C = fea.shape
    M = B * N
    x2 = fea.reshape(M, C)                                           # lane/sublane-dense slab
    TM = _pick_row_tile(M)

    row = pl.BlockSpec((TM, C), lambda i: (i, 0))
    const = lambda shape: pl.BlockSpec(shape, lambda i: (0, 0))      # resident weights

    out = pl.pallas_call(
        _mlp_s_kernel,
        out_shape=jax.ShapeDtypeStruct((M, C), fea.dtype),
        grid=(M // TM,),
        in_specs=[row, const((1, C)), const((1, C)),
                  const((C, C)), const((1, C)), const((C, C)), const((1, C))],
        out_specs=row,
        compiler_params=pltpu.CompilerParams(
            dimension_semantics=("parallel",),
            vmem_limit_bytes=VMEM_LIMIT),
    )(x2, p["ln_g"], p["ln_b"], p["w1"], p["b1"], p["w2"], p["b2"])
    return out.reshape(B, N, C)


# ------------------------------------------- fused transformer encoder -------
def _encoder_kernel(fea_ref, sal_ref, con_ref,
                    ln1g, ln1b, wqkv, wproj, bproj, ln2g, ln2b,
                    w1, b1, w2, b2, encg, encb,
                    o_ref, x_sc, av_sc, *, num_heads):
    l = pl.program_id(1)
    Bt, N, C = x_sc.shape
    N0 = fea_ref.shape[1]                       # N == N0 + 2
    Dh = C // num_heads

    @pl.when(l == 0)
    def _():                                    # compose [sal_token, fea, con_token] carry
        for b in range(Bt):
            x_sc[b, 0:1, :] = sal_ref[...].astype(jnp.float32)
            x_sc[b, 1:1 + N0, :] = fea_ref[b].astype(jnp.float32)
            x_sc[b, 1 + N0:N, :] = con_ref[...].astype(jnp.float32)

    # One ViT block for every batch element in the tile using the SAME resident weights.
    for b in range(Bt):
        x = x_sc[b]                             # (N, C) f32 activation carry

        # ---- multi-head self-attention (q-scale folded into wqkv columns) ----
        xn = _layernorm(x, ln1g[0], ln1b[0]).astype(jnp.bfloat16)
        qkv = jnp.dot(xn, wqkv[0], preferred_element_type=jnp.float32)   # (N, 3C) f32
        q = qkv[:, 0:C].astype(jnp.bfloat16)
        k = qkv[:, C:2 * C].astype(jnp.bfloat16)
        v = qkv[:, 2 * C:3 * C].astype(jnp.bfloat16)

        for h in range(num_heads):              # static unroll over heads
            qh = q[:, h * Dh:(h + 1) * Dh]
            kh = k[:, h * Dh:(h + 1) * Dh]
            vh = v[:, h * Dh:(h + 1) * Dh]
            # contraction on last dims of both operands (no explicit transpose emitted here;
            # materialize k^T once per layer if a bundle dump shows per-head vxpose).
            logits = jax.lax.dot_general(qh, kh, (((1,), (1,)), ((), ())),
                                         preferred_element_type=jnp.float32)   # (N, N)
            m = jnp.max(logits, axis=-1, keepdims=True)
            e = jnp.exp(logits - m)
            inv = pl.reciprocal(jnp.sum(e, axis=-1, keepdims=True), approx=True)
            p_attn = (e * inv).astype(jnp.bfloat16)
            av = jnp.dot(p_attn, vh, preferred_element_type=jnp.float32)        # (N, Dh)
            # assemble heads in a bf16 scratch so the projection is ONE K=C matmul
            av_sc[b, :, h * Dh:(h + 1) * Dh] = av.astype(jnp.bfloat16)

        attn_out = jnp.dot(av_sc[b], wproj[0], preferred_element_type=jnp.float32)
        x = x + attn_out + bproj[0]                                   # residual 1

        # ---- MLP ----
        xn2 = _layernorm(x, ln2g[0], ln2b[0]).astype(jnp.bfloat16)
        hmid = _gelu(jnp.dot(xn2, w1[0], preferred_element_type=jnp.float32) + b1[0])
        x = x + jnp.dot(hmid.astype(jnp.bfloat16), w2[0],
                        preferred_element_type=jnp.float32) + b2[0]   # residual 2
        x_sc[b] = x

    @pl.when(l == pl.num_programs(1) - 1)
    def _():                                    # fused final encoder LayerNorm
        for b in range(Bt):
            o_ref[b] = _layernorm(x_sc[b], encg[...], encb[...]).astype(o_ref.dtype)


def encoder(fea, sal_tok, con_tok, blk, enc_norm, *, num_heads):
    B, N0, C = fea.shape
    N = N0 + 2
    depth = blk["wqkv"].shape[0]
    H = blk["w1"].shape[-1]
    Bt = _pick_batch_tile(B, N, C)
    n_tiles = B // Bt

    fea_spec = pl.BlockSpec((Bt, N0, C), lambda bt, l: (bt, 0, 0))    # fetched once per tile
    out_spec = pl.BlockSpec((Bt, N, C), lambda bt, l: (bt, 0, 0))     # resident across depth
    tok = pl.BlockSpec((1, C), lambda bt, l: (0, 0))
    svec = lambda d: pl.BlockSpec((1, 1, d), lambda bt, l: (l, 0, 0))
    smat = lambda r, c: pl.BlockSpec((1, r, c), lambda bt, l: (l, 0, 0))
    gvec = pl.BlockSpec((1, C), lambda bt, l: (0, 0))

    kernel = functools.partial(_encoder_kernel, num_heads=num_heads)
    return pl.pallas_call(
        kernel,
        out_shape=jax.ShapeDtypeStruct((B, N, C), fea.dtype),
        grid=(n_tiles, depth),
        in_specs=[fea_spec, tok, tok,
                  svec(C), svec(C),             # ln1
                  smat(C, 3 * C),               # fused qkv (qkv_bias=False, scale folded)
                  smat(C, C), svec(C),          # attn proj
                  svec(C), svec(C),             # ln2
                  smat(C, H), svec(H),          # mlp fc1
                  smat(H, C), svec(C),          # mlp fc2
                  gvec, gvec],                  # final encoder norm
        out_specs=out_spec,
        scratch_shapes=[pltpu.VMEM((Bt, N, C), jnp.float32),          # activation carry
                        pltpu.VMEM((Bt, N, C), jnp.bfloat16)],        # head-assembly buffer
        compiler_params=pltpu.CompilerParams(
            dimension_semantics=("parallel", "arbitrary"),
            vmem_limit_bytes=VMEM_LIMIT),
    )(fea, sal_tok, con_tok,
      blk["ln1_g"], blk["ln1_b"], blk["wqkv"], blk["wproj"], blk["bproj"],
      blk["ln2_g"], blk["ln2_b"], blk["w1"], blk["b1"], blk["w2"], blk["b2"],
      enc_norm["g"], enc_norm["b"])


# -------------------------------- fused saliency + contour token inference ---
def _token_inf_kernel(x_ref,
                      s_lng, s_lnb, s_wq, s_wkv, s_wp, s_bp,
                      c_lng, c_lnb, c_wq, c_wkv, c_wp, c_bp,
                      sal_ref, con_ref):
    x = x_ref[0].astype(jnp.float32)                                  # (N, C)
    N, C = x.shape

    # LayerNorm statistics shared between the two branches (only gamma/beta differ).
    mu = jnp.mean(x, axis=-1, keepdims=True)
    var = jnp.mean(jnp.square(x - mu), axis=-1, keepdims=True)
    xc = (x - mu) * jax.lax.rsqrt(var + EPS)

    def infer(lng, lnb, wq, wkv, wp, bp, row):
        xn = xc * lng[...] + lnb[...]
        t = xn[row:row + 1, :].astype(jnp.bfloat16)                   # (1, C) token row
        q = jnp.dot(xn.astype(jnp.bfloat16), wq[...],
                    preferred_element_type=jnp.float32)               # (N, C), scale folded
        kv = jnp.dot(t, wkv[...], preferred_element_type=jnp.float32)  # (1, 2C) fused k|v
        kk = kv[:, 0:C]
        vv = kv[:, C:2 * C]
        logits = jnp.sum(q * kk, axis=-1, keepdims=True)              # (N, 1) == q @ k^T
        attn = jax.nn.sigmoid(logits)
        out = attn * vv                                               # == attn @ v, (N, C)
        out = jnp.dot(out.astype(jnp.bfloat16), wp[...],
                      preferred_element_type=jnp.float32) + bp[...]
        return out + x                                                # residual vs raw fea

    sal_ref[0] = infer(s_lng, s_lnb, s_wq, s_wkv, s_wp, s_bp, 0).astype(sal_ref.dtype)
    con_ref[0] = infer(c_lng, c_lnb, c_wq, c_wkv, c_wp, c_bp, N - 1).astype(con_ref.dtype)


def token_inference_pair(fea, sal_p, con_p):
    B, N, C = fea.shape
    act = pl.BlockSpec((1, N, C), lambda b: (b, 0, 0))
    vec = pl.BlockSpec((1, C), lambda b: (0, 0))
    mat = lambda r, c: pl.BlockSpec((r, c), lambda b: (0, 0))

    sal_full, con_full = pl.pallas_call(
        _token_inf_kernel,
        out_shape=(jax.ShapeDtypeStruct((B, N, C), fea.dtype),
                   jax.ShapeDtypeStruct((B, N, C), fea.dtype)),
        grid=(B,),
        in_specs=[act,
                  vec, vec, mat(C, C), mat(C, 2 * C), mat(C, C), vec,
                  vec, vec, mat(C, C), mat(C, 2 * C), mat(C, C), vec],
        out_specs=(act, act),
        compiler_params=pltpu.CompilerParams(
            dimension_semantics=("parallel",),
            vmem_limit_bytes=VMEM_LIMIT),
    )(fea,
      sal_p["ln_g"], sal_p["ln_b"], sal_p["wq"], sal_p["wkv"], sal_p["wp"], sal_p["bp"],
      con_p["ln_g"], con_p["ln_b"], con_p["wq"], con_p["wkv"], con_p["wp"], con_p["bp"])
    # row slice (1 : N-1) done outside the kernel to keep in-kernel access aligned
    return sal_full[:, 1:-1, :], con_full[:, 1:-1, :]


# ------------------------------------------------------------- parameters ----
def init_params(key, C, depth, mlp_ratio, num_heads):
    assert C % num_heads == 0
    H = int(C * mlp_ratio)
    keys = jax.random.split(key, 14)
    f32 = jnp.float32

    def lin(kk, shape):
        return jax.random.normal(kk, shape, f32) * 0.02

    attn_scale = (C // num_heads) ** -0.5
    wqkv = lin(keys[0], (depth, C, 3 * C))
    wqkv = wqkv.at[:, :, :C].multiply(attn_scale)       # fold q-scale into weights

    blocks = dict(
        ln1_g=jnp.ones((depth, 1, C), f32), ln1_b=jnp.zeros((depth, 1, C), f32),
        wqkv=wqkv.astype(jnp.bfloat16),
        wproj=lin(keys[1], (depth, C, C)).astype(jnp.bfloat16),
        bproj=jnp.zeros((depth, 1, C), f32),
        ln2_g=jnp.ones((depth, 1, C), f32), ln2_b=jnp.zeros((depth, 1, C), f32),
        w1=lin(keys[2], (depth, C, H)).astype(jnp.bfloat16),
        b1=jnp.zeros((depth, 1, H), f32),
        w2=lin(keys[3], (depth, H, C)).astype(jnp.bfloat16),
        b2=jnp.zeros((depth, 1, C), f32),
    )

    mlp_s_p = dict(
        ln_g=jnp.ones((1, C), f32), ln_b=jnp.zeros((1, C), f32),
        w1=lin(keys[4], (C, C)).astype(jnp.bfloat16), b1=jnp.zeros((1, C), f32),
        w2=lin(keys[5], (C, C)).astype(jnp.bfloat16), b2=jnp.zeros((1, C), f32))

    tok_scale = C ** -0.5                               # num_heads=1 -> head_dim = C
    def tok_params(k1, k2, k3, k4):
        wk = lin(k2, (C, C))
        wv = lin(k3, (C, C))
        return dict(
            ln_g=jnp.ones((1, C), f32), ln_b=jnp.zeros((1, C), f32),
            wq=(lin(k1, (C, C)) * tok_scale).astype(jnp.bfloat16),   # scale folded
            wkv=jnp.concatenate([wk, wv], axis=1).astype(jnp.bfloat16),
            wp=lin(k4, (C, C)).astype(jnp.bfloat16),
            bp=jnp.zeros((1, C), f32))

    return dict(
        mlp_s=mlp_s_p,
        saliency_token=jnp.zeros((1, C), f32),          # nn.Parameter(torch.zeros(1,1,C))
        contour_token=jnp.zeros((1, C), f32),
        blocks=blocks,
        enc_norm=dict(g=jnp.ones((1, C), f32), b=jnp.zeros((1, C), f32)),
        sal_pre=tok_params(keys[6], keys[7], keys[8], keys[9]),
        con_pre=tok_params(keys[10], keys[11], keys[12], keys[13]),
    )


# ---------------------------------------------------------- full forward -----
def token_transformer_forward(params, rgb_fea, *, num_heads):
    # fea_1_16 = mlp_s(norm(rgb_fea))
    fea = mlp_s(rgb_fea, params["mlp_s"])
    # [saliency_token, fea, contour_token] composed INSIDE the encoder kernel (no concat),
    # then all `depth` blocks + final norm run in one pallas_call.
    fea_1_16 = encoder(fea, params["saliency_token"], params["contour_token"],
                       params["blocks"], params["enc_norm"], num_heads=num_heads)
    saliency_tokens = fea_1_16[:, 0:1, :]
    contour_tokens = fea_1_16[:, -1:, :]
    saliency_fea, contour_fea = token_inference_pair(
        fea_1_16, params["sal_pre"], params["con_pre"])
    return saliency_fea, fea_1_16, saliency_tokens, contour_fea, contour_tokens


# ------------------------------------------------------------------ main -----
if __name__ == "__main__":
    # Small shapes consistent with the module: embed_dim=32 (vs 384),
    # depth=2 (vs 14), num_heads=2 (vs 6), mlp_ratio=3.0, seq=8, batch=2.
    B, N0, C = 2, 8, 32
    DEPTH, NUM_HEADS, MLP_RATIO = 2, 2, 3.0

    key = jax.random.PRNGKey(0)
    pkey, xkey = jax.random.split(key)
    params = init_params(pkey, C, DEPTH, MLP_RATIO, NUM_HEADS)
    rgb_fea = jax.random.normal(xkey, (B, N0, C), jnp.float32)

    fwd = jax.jit(functools.partial(token_transformer_forward, num_heads=NUM_HEADS))
    outs = jax.block_until_ready(fwd(params, rgb_fea))

    expected = [(B, N0, C), (B, N0 + 2, C), (B, 1, C), (B, N0, C), (B, 1, C)]
    for o, s in zip(outs, expected):
        assert o.shape == s, (o.shape, s)
        assert bool(jnp.all(jnp.isfinite(o)))
    print("KERNEL_OK")
</pallas_src>

<mosaic_0001>
module attributes {stable_mosaic.version = 11 : i64} {
  func.func @_mlp_s_kernel(%arg0: i32, %arg1: memref<16x32xf32, #tpu.memory_space<vmem>>, %arg2: memref<1x32xf32, #tpu.memory_space<vmem>>, %arg3: memref<1x32xf32, #tpu.memory_space<vmem>>, %arg4: memref<32x32xbf16, #tpu.memory_space<vmem>>, %arg5: memref<1x32xf32, #tpu.memory_space<vmem>>, %arg6: memref<32x32xbf16, #tpu.memory_space<vmem>>, %arg7: memref<1x32xf32, #tpu.memory_space<vmem>>, %arg8: memref<16x32xf32, #tpu.memory_space<vmem>>) attributes {dimension_semantics = [#tpu.dimension_semantics<parallel>], iteration_bounds = array<i64: 1>, scalar_prefetch = 0 : i64, scratch_operands = 0 : i64, tpu.core_type = #tpu.core_type<tc>, window_params = [{transform_indices = @transform_0, window_bounds = array<i64: 16, 32>}, {pipeline_mode = #tpu.pipeline_mode<synchronous>, transform_indices = @transform_1, window_bounds = array<i64: 1, 32>}, {pipeline_mode = #tpu.pipeline_mode<synchronous>, transform_indices = @transform_2, window_bounds = array<i64: 1, 32>}, {pipeline_mode = #tpu.pipeline_mode<synchronous>, transform_indices = @transform_3, window_bounds = array<i64: 32, 32>}, {pipeline_mode = #tpu.pipeline_mode<synchronous>, transform_indices = @transform_4, window_bounds = array<i64: 1, 32>}, {pipeline_mode = #tpu.pipeline_mode<synchronous>, transform_indices = @transform_5, window_bounds = array<i64: 32, 32>}, {pipeline_mode = #tpu.pipeline_mode<synchronous>, transform_indices = @transform_6, window_bounds = array<i64: 1, 32>}, {transform_indices = @transform_7, window_bounds = array<i64: 16, 32>}]} {
    %c0 = arith.constant 0 : index
    %c0_0 = arith.constant 0 : index
    %0 = vector.load %arg1[%c0, %c0_0] : memref<16x32xf32, #tpu.memory_space<vmem>>, vector<16x32xf32>
    %c0_1 = arith.constant 0 : index
    %c0_2 = arith.constant 0 : index
    %1 = vector.load %arg2[%c0_1, %c0_2] : memref<1x32xf32, #tpu.memory_space<vmem>>, vector<1x32xf32>
    %c0_3 = arith.constant 0 : index
    %c0_4 = arith.constant 0 : index
    %2 = vector.load %arg3[%c0_3, %c0_4] : memref<1x32xf32, #tpu.memory_space<vmem>>, vector<1x32xf32>
    %cst = arith.constant dense<0.000000e+00> : vector<16xf32>
    %3 = vector.multi_reduction <add>, %0, %cst [1] : vector<16x32xf32> to vector<16xf32>
    %4 = vector.shape_cast %3 : vector<16xf32> to vector<16x1xf32>
    %cst_5 = arith.constant 3.200000e+01 : f32
    %5 = vector.broadcast %cst_5 : f32 to vector<16x1xf32>
    %6 = arith.divf %4, %5 : vector<16x1xf32>
    %7 = vector.broadcast %6 : vector<16x1xf32> to vector<16x32xf32>
    %8 = arith.subf %0, %7 : vector<16x32xf32>
    %9 = arith.mulf %8, %8 : vector<16x32xf32>
    %cst_6 = arith.constant dense<0.000000e+00> : vector<16xf32>
    %10 = vector.multi_reduction <add>, %9, %cst_6 [1] : vector<16x32xf32> to vector<16xf32>
    %11 = vector.shape_cast %10 : vector<16xf32> to vector<16x1xf32>
    %cst_7 = arith.constant 3.200000e+01 : f32
    %12 = vector.broadcast %cst_7 : f32 to vector<16x1xf32>
    %13 = arith.divf %11, %12 : vector<16x1xf32>
    %14 = vector.broadcast %6 : vector<16x1xf32> to vector<16x32xf32>
    %15 = arith.subf %0, %14 : vector<16x32xf32>
    %cst_8 = arith.constant 9.99999974E-6 : f32
    %16 = vector.broadcast %cst_8 : f32 to vector<16x1xf32>
    %17 = arith.addf %13, %16 : vector<16x1xf32>
    %18 = math.rsqrt %17 : vector<16x1xf32>
    %19 = vector.broadcast %18 : vector<16x1xf32> to vector<16x32xf32>
    %20 = arith.mulf %15, %19 : vector<16x32xf32>
    %21 = vector.broadcast %1 : vector<1x32xf32> to vector<16x32xf32>
    %22 = arith.mulf %20, %21 : vector<16x32xf32>
    %23 = vector.broadcast %2 : vector<1x32xf32> to vector<16x32xf32>
    %24 = arith.addf %22, %23 : vector<16x32xf32>
    %25 = arith.truncf %24 : vector<16x32xf32> to vector<16x32xbf16>
    %c0_9 = arith.constant 0 : index
    %c0_10 = arith.constant 0 : index
    %26 = vector.load %arg4[%c0_9, %c0_10] : memref<32x32xbf16, #tpu.memory_space<vmem>>, vector<32x32xbf16>
    %cst_11 = arith.constant dense<0.000000e+00> : vector<16x32xf32>
    %27 = tpu.matmul %25, %26, %cst_11 {dimension_numbers = #tpu.dot_dimension_numbers<[1], [0], [0], [1], [0, 0, 1, 1], [], []>} : vector<16x32xbf16>, vector<32x32xbf16>, vector<16x32xf32> -> vector<16x32xf32>
    %c0_12 = arith.constant 0 : index
    %c0_13 = arith.constant 0 : index
    %28 = vector.load %arg5[%c0_12, %c0_13] : memref<1x32xf32, #tpu.memory_space<vmem>>, vector<1x32xf32>
    %29 = vector.broadcast %28 : vector<1x32xf32> to vector<16x32xf32>
    %30 = arith.addf %27, %29 : vector<16x32xf32>
    %31 = arith.mulf %30, %30 : vector<16x32xf32>
    %32 = arith.mulf %30, %31 : vector<16x32xf32>
    %cst_14 = arith.constant 4.471500e-02 : f32
    %33 = vector.broadcast %cst_14 : f32 to vector<16x32xf32>
    %34 = arith.mulf %33, %32 : vector<16x32xf32>
    %35 = arith.addf %30, %34 : vector<16x32xf32>
    %cst_15 = arith.constant 0.797884583 : f32
    %36 = vector.broadcast %cst_15 : f32 to vector<16x32xf32>
    %37 = arith.mulf %36, %35 : vector<16x32xf32>
    %38 = math.tanh %37 : vector<16x32xf32>
    %cst_16 = arith.constant 1.000000e+00 : f32
    %39 = vector.broadcast %cst_16 : f32 to vector<16x32xf32>
    %40 = arith.addf %39, %38 : vector<16x32xf32>
    %cst_17 = arith.constant 5.000000e-01 : f32
    %41 = vector.broadcast %cst_17 : f32 to vector<16x32xf32>
    %42 = arith.mulf %41, %40 : vector<16x32xf32>
    %43 = arith.mulf %30, %42 : vector<16x32xf32>
    %44 = arith.truncf %43 : vector<16x32xf32> to vector<16x32xbf16>
    %c0_18 = arith.constant 0 : index
    %c0_19 = arith.constant 0 : index
    %45 = vector.load %arg6[%c0_18, %c0_19] : memref<32x32xbf16, #tpu.memory_space<vmem>>, vector<32x32xbf16>
    %cst_20 = arith.constant dense<0.000000e+00> : vector<16x32xf32>
    %46 = tpu.matmul %44, %45, %cst_20 {dimension_numbers = #tpu.dot_dimension_numbers<[1], [0], [0], [1], [0, 0, 1, 1], [], []>} : vector<16x32xbf16>, vector<32x32xbf16>, vector<16x32xf32> -> vector<16x32xf32>
    %c0_21 = arith.constant 0 : index
    %c0_22 = arith.constant 0 : index
    %47 = vector.load %arg7[%c0_21, %c0_22] : memref<1x32xf32, #tpu.memory_space<vmem>>, vector<1x32xf32>
    %48 = vector.broadcast %47 : vector<1x32xf32> to vector<16x32xf32>
    %49 = arith.addf %46, %48 : vector<16x32xf32>
    %c0_23 = arith.constant 0 : index
    %c0_24 = arith.constant 0 : index
    %50 = vector.load %arg8[%c0_23, %c0_24] : memref<16x32xf32, #tpu.memory_space<vmem>>, vector<16x32xf32>
    tpu.vector_store %arg8[%c0_23, %c0_24], %49 {strides = array<i32>} : memref<16x32xf32, #tpu.memory_space<vmem>>, vector<16x32xf32>,
    return
  }
  func.func @transform_0(%arg0: i32) -> (i32, i32) {
    %c0_i32 = arith.constant 0 : i32
    %c0_i32_0 = arith.constant 0 : i32
    return %arg0, %c0_i32 : i32, i32
  }
  func.func @transform_1(%arg0: i32) -> (i32, i32) {
    %c0_i32 = arith.constant 0 : i32
    %c0_i32_0 = arith.constant 0 : i32
    %c0_i32_1 = arith.constant 0 : i32
    return %c0_i32, %c0_i32_0 : i32, i32
  }
  func.func @transform_2(%arg0: i32) -> (i32, i32) {
    %c0_i32 = arith.constant 0 : i32
    %c0_i32_0 = arith.constant 0 : i32
    %c0_i32_1 = arith.constant 0 : i32
    return %c0_i32, %c0_i32_0 : i32, i32
  }
  func.func @transform_3(%arg0: i32) -> (i32, i32) {
    %c0_i32 = arith.constant 0 : i32
    %c0_i32_0 = arith.constant 0 : i32
    %c0_i32_1 = arith.constant 0 : i32
    return %c0_i32, %c0_i32_0 : i32, i32
  }
  func.func @transform_4(%arg0: i32) -> (i32, i32) {
    %c0_i32 = arith.constant 0 : i32
    %c0_i32_0 = arith.constant 0 : i32
    %c0_i32_1 = arith.constant 0 : i32
    return %c0_i32, %c0_i32_0 : i32, i32
  }
  func.func @transform_5(%arg0: i32) -> (i32, i32) {
    %c0_i32 = arith.constant 0 : i32
    %c0_i32_0 = arith.constant 0 : i32
    %c0_i32_1 = arith.constant 0 : i32
    return %c0_i32, %c0_i32_0 : i32, i32
  }
  func.func @transform_6(%arg0: i32) -> (i32, i32) {
    %c0_i32 = arith.constant 0 : i32
    %c0_i32_0 = arith.constant 0 : i32
    %c0_i32_1 = arith.constant 0 : i32
    return %c0_i32, %c0_i32_0 : i32, i32
  }
  func.func @transform_7(%arg0: i32) -> (i32, i32) {
    %c0_i32 = arith.constant 0 : i32
    %c0_i32_0 = arith.constant 0 : i32
    return %arg0, %c0_i32 : i32, i32
  }
}

module attributes {stable_mosaic.version = 11 : i64} {
  func.func @_encoder_kernel(%arg0: i32, %arg1: i32, %arg2: memref<1x8x32xf32, #tpu.memory_space<vmem>>, %arg3: memref<1x32xf32, #tpu.memory_space<vmem>>, %arg4: memref<1x32xf32, #tpu.memory_space<vmem>>, %arg5: memref<1x1x32xf32, #tpu.memory_space<vmem>>, %arg6: memref<1x1x32xf32, #tpu.memory_space<vmem>>, %arg7: memref<1x32x96xbf16, #tpu.memory_space<vmem>>, %arg8: memref<1x32x32xbf16, #tpu.memory_space<vmem>>, %arg9: memref<1x1x32xf32, #tpu.memory_space<vmem>>, %arg10: memref<1x1x32xf32, #tpu.memory_space<vmem>>, %arg11: memref<1x1x32xf32, #tpu.memory_space<vmem>>, %arg12: memref<1x32x96xbf16, #tpu.memory_space<vmem>>, %arg13: memref<1x1x96xf32, #tpu.memory_space<vmem>>, %arg14: memref<1x96x32xbf16, #tpu.memory_space<vmem>>, %arg15: memref<1x1x32xf32, #tpu.memory_space<vmem>>, %arg16: memref<1x32xf32, #tpu.memory_space<vmem>>, %arg17: memref<1x32xf32, #tpu.memory_space<vmem>>, %arg18: memref<1x10x32xf32, #tpu.memory_space<vmem>>, %arg19: memref<1x10x32xf32, #tpu.memory_space<vmem>>, %arg20: memref<1x10x32xbf16, #tpu.memory_space<vmem>>) attributes {dimension_semantics = [#tpu.dimension_semantics<parallel>, #tpu.dimension_semantics<arbitrary>], iteration_bounds = array<i64: 2, 2>, scalar_prefetch = 0 : i64, scratch_operands = 2 : i64, tpu.core_type = #tpu.core_type<tc>, window_params = [{transform_indices = @transform_0, window_bounds = array<i64: 1, 8, 32>}, {pipeline_mode = #tpu.pipeline_mode<synchronous>, transform_indices = @transform_1, window_bounds = array<i64: 1, 32>}, {pipeline_mode = #tpu.pipeline_mode<synchronous>, transform_indices = @transform_2, window_bounds = array<i64: 1, 32>}, {transform_indices = @transform_3, window_bounds = array<i64: 1, 1, 32>}, {transform_indices = @transform_4, window_bounds = array<i64: 1, 1, 32>}, {transform_indices = @transform_5, window_bounds = array<i64: 1, 32, 96>}, {transform_indices = @transform_6, window_bounds = array<i64: 1, 32, 32>}, {transform_indices = @transform_7, window_bounds = array<i64: 1, 1, 32>}, {transform_indices = @transform_8, window_bounds = array<i64: 1, 1, 32>}, {transform_indices = @transform_9, window_bounds = array<i64: 1, 1, 32>}, {transform_indices = @transform_10, window_bounds = array<i64: 1, 32, 96>}, {transform_indices = @transform_11, window_bounds = array<i64: 1, 1, 96>}, {transform_indices = @transform_12, window_bounds = array<i64: 1, 96, 32>}, {transform_indices = @transform_13, window_bounds = array<i64: 1, 1, 32>}, {pipeline_mode = #tpu.pipeline_mode<synchronous>, transform_indices = @transform_14, window_bounds = array<i64: 1, 32>}, {pipeline_mode = #tpu.pipeline_mode<synchronous>, transform_indices = @transform_15, window_bounds = array<i64: 1, 32>}, {transform_indices = @transform_16, window_bounds = array<i64: 1, 10, 32>}]} {
    %c0_i32 = arith.constant 0 : i32
    %0 = arith.cmpi eq, %arg1, %c0_i32 : i32
    %1 = arith.extui %0 : i1 to i32
    %c0_i32_0 = arith.constant 0 : i32
    %2 = arith.cmpi ne, %1, %c0_i32_0 : i32
    scf.if %2 {
      %c0_73 = arith.constant 0 : index
      %c0_74 = arith.constant 0 : index
      %153 = vector.load %arg3[%c0_73, %c0_74] : memref<1x32xf32, #tpu.memory_space<vmem>>, vector<1x32xf32>
      %c0_75 = arith.constant 0 : index
      %c0_76 = arith.constant 0 : index
      %c0_77 = arith.constant 0 : index
      %154 = vector.load %arg19[%c0_75, %c0_76, %c0_77] : memref<1x10x32xf32, #tpu.memory_space<vmem>>, vector<1x1x32xf32>
      %155 = vector.shape_cast %154 : vector<1x1x32xf32> to vector<1x32xf32>
      %156 = vector.shape_cast %153 : vector<1x32xf32> to vector<1x1x32xf32>
      tpu.vector_store %arg19[%c0_75, %c0_76, %c0_77], %156 {strides = array<i32>} : memref<1x10x32xf32, #tpu.memory_space<vmem>>, vector<1x1x32xf32>,
      %c0_78 = arith.constant 0 : index
      %c0_79 = arith.constant 0 : index
      %c0_80 = arith.constant 0 : index
      %157 = vector.load %arg2[%c0_78, %c0_79, %c0_80] : memref<1x8x32xf32, #tpu.memory_space<vmem>>, vector<1x8x32xf32>
      %158 = vector.shape_cast %157 : vector<1x8x32xf32> to vector<8x32xf32>
      %c0_81 = arith.constant 0 : index
      %c1 = arith.constant 1 : index
      %c0_82 = arith.constant 0 : index
      %159 = vector.load %arg19[%c0_81, %c1, %c0_82] : memref<1x10x32xf32, #tpu.memory_space<vmem>>, vector<1x8x32xf32>
      %160 = vector.shape_cast %159 : vector<1x8x32xf32> to vector<8x32xf32>
      %161 = vector.shape_cast %158 : vector<8x32xf32> to vector<1x8x32xf32>
      tpu.vector_store %arg19[%c0_81, %c1, %c0_82], %161 {strides = array<i32>} : memref<1x10x32xf32, #tpu.memory_space<vmem>>, vector<1x8x32xf32>,
      %c0_83 = arith.constant 0 : index
      %c0_84 = arith.constant 0 : index
      %162 = vector.load %arg4[%c0_83, %c0_84] : memref<1x32xf32, #tpu.memory_space<vmem>>, vector<1x32xf32>
      %c0_85 = arith.constant 0 : index
      %c9 = arith.constant 9 : index
      %c0_86 = arith.constant 0 : index
      %163 = vector.load %arg19[%c0_85, %c9, %c0_86] : memref<1x10x32xf32, #tpu.memory_space<vmem>>, vector<1x1x32xf32>
      %164 = vector.shape_cast %163 : vector<1x1x32xf32> to vector<1x32xf32>
      %165 = vector.shape_cast %162 : vector<1x32xf32> to vector<1x1x32xf32>
      tpu.vector_store %arg19[%c0_85, %c9, %c0_86], %165 {strides = array<i32>} : memref<1x10x32xf32, #tpu.memory_space<vmem>>, vector<1x1x32xf32>,
    } else {
    }
    %c0 = arith.constant 0 : index
    %c0_1 = arith.constant 0 : index
    %c0_2 = arith.constant 0 : index
    %3 = vector.load %arg19[%c0, %c0_1, %c0_2] : memref<1x10x32xf32, #tpu.memory_space<vmem>>, vector<1x10x32xf32>
    %4 = vector.shape_cast %3 : vector<1x10x32xf32> to vector<10x32xf32>
    %c0_3 = arith.constant 0 : index
    %c0_4 = arith.constant 0 : index
    %c0_5 = arith.constant 0 : index
    %5 = vector.load %arg5[%c0_3, %c0_4, %c0_5] : memref<1x1x32xf32, #tpu.memory_space<vmem>>, vector<1x1x32xf32>
    %6 = vector.shape_cast %5 : vector<1x1x32xf32> to vector<1x32xf32>
    %c0_6 = arith.constant 0 : index
    %c0_7 = arith.constant 0 : index
    %c0_8 = arith.constant 0 : index
    %7 = vector.load %arg6[%c0_6, %c0_7, %c0_8] : memref<1x1x32xf32, #tpu.memory_space<vmem>>, vector<1x1x32xf32>
    %8 = vector.shape_cast %7 : vector<1x1x32xf32> to vector<1x32xf32>
    %cst = arith.constant dense<0.000000e+00> : vector<10xf32>
    %9 = vector.multi_reduction <add>, %4, %cst [1] : vector<10x32xf32> to vector<10xf32>
    %10 = vector.shape_cast %9 : vector<10xf32> to vector<10x1xf32>
    %cst_9 = arith.constant 3.200000e+01 : f32
    %11 = vector.broadcast %cst_9 : f32 to vector<10x1xf32>
    %12 = arith.divf %10, %11 : vector<10x1xf32>
    %13 = vector.broadcast %12 : vector<10x1xf32> to vector<10x32xf32>
    %14 = arith.subf %4, %13 : vector<10x32xf32>
    %15 = arith.mulf %14, %14 : vector<10x32xf32>
    %cst_10 = arith.constant dense<0.000000e+00> : vector<10xf32>
    %16 = vector.multi_reduction <add>, %15, %cst_10 [1] : vector<10x32xf32> to vector<10xf32>
    %17 = vector.shape_cast %16 : vector<10xf32> to vector<10x1xf32>
    %cst_11 = arith.constant 3.200000e+01 : f32
    %18 = vector.broadcast %cst_11 : f32 to vector<10x1xf32>
    %19 = arith.divf %17, %18 : vector<10x1xf32>
    %20 = vector.broadcast %12 : vector<10x1xf32> to vector<10x32xf32>
    %21 = arith.subf %4, %20 : vector<10x32xf32>
    %cst_12 = arith.constant 9.99999974E-6 : f32
    %22 = vector.broadcast %cst_12 : f32 to vector<10x1xf32>
    %23 = arith.addf %19, %22 : vector<10x1xf32>
    %24 = math.rsqrt %23 : vector<10x1xf32>
    %25 = vector.broadcast %24 : vector<10x1xf32> to vector<10x32xf32>
    %26 = arith.mulf %21, %25 : vector<10x32xf32>
    %27 = vector.broadcast %6 : vector<1x32xf32> to vector<10x32xf32>
    %28 = arith.mulf %26, %27 : vector<10x32xf32>
    %29 = vector.broadcast %8 : vector<1x32xf32> to vector<10x32xf32>
    %30 = arith.addf %28, %29 : vector<10x32xf32>
    %31 = arith.truncf %30 : vector<10x32xf32> to vector<10x32xbf16>
    %c0_13 = arith.constant 0 : index
    %c0_14 = arith.constant 0 : index
    %c0_15 = arith.constant 0 : index
    %32 = vector.load %arg7[%c0_13, %c0_14, %c0_15] : memref<1x32x96xbf16, #tpu.memory_space<vmem>>, vector<1x32x96xbf16>
    %33 = vector.shape_cast %32 : vector<1x32x96xbf16> to vector<32x96xbf16>
    %cst_16 = arith.constant dense<0.000000e+00> : vector<10x96xf32>
    %34 = tpu.matmul %31, %33, %cst_16 {dimension_numbers = #tpu.dot_dimension_numbers<[1], [0], [0], [1], [0, 0, 1, 1], [], []>} : vector<10x32xbf16>, vector<32x96xbf16>, vector<10x96xf32> -> vector<10x96xf32>
    %35 = vector.extract_strided_slice %34 {offsets = [0, 0], sizes = [10, 32], strides = [1, 1]} : vector<10x96xf32> to vector<10x32xf32>
    %36 = arith.truncf %35 : vector<10x32xf32> to vector<10x32xbf16>
    %37 = vector.extract_strided_slice %34 {offsets = [0, 32], sizes = [10, 32], strides = [1, 1]} : vector<10x96xf32> to vector<10x32xf32>
    %38 = arith.truncf %37 : vector<10x32xf32> to vector<10x32xbf16>
    %39 = vector.extract_strided_slice %34 {offsets = [0, 64], sizes = [10, 32], strides = [1, 1]} : vector<10x96xf32> to vector<10x32xf32>
    %40 = arith.truncf %39 : vector<10x32xf32> to vector<10x32xbf16>
    %41 = vector.extract_strided_slice %36 {offsets = [0, 0], sizes = [10, 16], strides = [1, 1]} : vector<10x32xbf16> to vector<10x16xbf16>
    %42 = vector.extract_strided_slice %38 {offsets = [0, 0], sizes = [10, 16], strides = [1, 1]} : vector<10x32xbf16> to vector<10x16xbf16>
    %43 = vector.extract_strided_slice %40 {offsets = [0, 0], sizes = [10, 16], strides = [1, 1]} : vector<10x32xbf16> to vector<10x16xbf16>
    %cst_17 = arith.constant dense<0.000000e+00> : vector<10x10xf32>
    %44 = tpu.matmul %41, %42, %cst_17 {dimension_numbers = #tpu.dot_dimension_numbers<[1], [1], [0], [0], [0, 0, 1, 0], [], []>} : vector<10x16xbf16>, vector<10x16xbf16>, vector<10x10xf32> -> vector<10x10xf32>
    %cst_18 = arith.constant dense<0xFF800000> : vector<10xf32>
    %45 = vector.multi_reduction <maximumf>, %44, %cst_18 [1] : vector<10x10xf32> to vector<10xf32>
    %46 = vector.shape_cast %45 : vector<10xf32> to vector<10x1xf32>
    %47 = vector.broadcast %46 : vector<10x1xf32> to vector<10x10xf32>
    %48 = arith.subf %44, %47 : vector<10x10xf32>
    %49 = math.exp %48 : vector<10x10xf32>
    %cst_19 = arith.constant dense<0.000000e+00> : vector<10xf32>
    %50 = vector.multi_reduction <add>, %49, %cst_19 [1] : vector<10x10xf32> to vector<10xf32>
    %51 = vector.shape_cast %50 : vector<10xf32> to vector<10x1xf32>
    %52 = tpu.reciprocal %51 {approx = true} : vector<10x1xf32> -> vector<10x1xf32>
    %53 = vector.broadcast %52 : vector<10x1xf32> to vector<10x10xf32>
    %54 = arith.mulf %49, %53 : vector<10x10xf32>
    %55 = arith.truncf %54 : vector<10x10xf32> to vector<10x10xbf16>
    %cst_20 = arith.constant dense<0.000000e+00> : vector<10x16xf32>
    %56 = tpu.matmul %55, %43, %cst_20 {dimension_numbers = #tpu.dot_dimension_numbers<[1], [0], [0], [1], [0, 0, 1, 1], [], []>} : vector<10x10xbf16>, vector<10x16xbf16>, vector<10x16xf32> -> vector<10x16xf32>
    %57 = arith.truncf %56 : vector<10x16xf32> to vector<10x16xbf16>
    %c0_21 = arith.constant 0 : index
    %c0_22 = arith.constant 0 : index
    %c0_23 = arith.constant 0 : index
    %58 = vector.load %arg20[%c0_21, %c0_22, %c0_23] : memref<1x10x32xbf16, #tpu.memory_space<vmem>>, vector<1x10x16xbf16>
    %59 = vector.shape_cast %58 : vector<1x10x16xbf16> to vector<10x16xbf16>
    %60 = vector.shape_cast %57 : vector<10x16xbf16> to vector<1x10x16xbf16>
    tpu.vector_store %arg20[%c0_21, %c0_22, %c0_23], %60 {strides = array<i32>} : memref<1x10x32xbf16, #tpu.memory_space<vmem>>, vector<1x10x16xbf16>,
    %61 = vector.extract_strided_slice %36 {offsets = [0, 16], sizes = [10, 16], strides = [1, 1]} : vector<10x32xbf16> to vector<10x16xbf16>
    %62 = vector.extract_strided_slice %38 {offsets = [0, 16], sizes = [10, 16], strides = [1, 1]} : vector<10x32xbf16> to vector<10x16xbf16>
    %63 = vector.extract_strided_slice %40 {offsets = [0, 16], sizes = [10, 16], strides = [1, 1]} : vector<10x32xbf16> to vector<10x16xbf16>
    %cst_24 = arith.constant dense<0.000000e+00> : vector<10x10xf32>
    %64 = tpu.matmul %61, %62, %cst_24 {dimension_numbers = #tpu.dot_dimension_numbers<[1], [1], [0], [0], [0, 0, 1, 0], [], []>} : vector<10x16xbf16>, vector<10x16xbf16>, vector<10x10xf32> -> vector<10x10xf32>
    %cst_25 = arith.constant dense<0xFF800000> : vector<10xf32>
    %65 = vector.multi_reduction <maximumf>, %64, %cst_25 [1] : vector<10x10xf32> to vector<10xf32>
    %66 = vector.shape_cast %65 : vector<10xf32> to vector<10x1xf32>
    %67 = vector.broadcast %66 : vector<10x1xf32> to vector<10x10xf32>
    %68 = arith.subf %64, %67 : vector<10x10xf32>
    %69 = math.exp %68 : vector<10x10xf32>
    %cst_26 = arith.constant dense<0.000000e+00> : vector<10xf32>
    %70 = vector.multi_reduction <add>, %69, %cst_26 [1] : vector<10x10xf32> to vector<10xf32>
    %71 = vector.shape_cast %70 : vector<10xf32> to vector<10x1xf32>
    %72 = tpu.reciprocal %71 {approx = true} : vector<10x1xf32> -> vector<10x1xf32>
    %73 = vector.broadcast %72 : vector<10x1xf32> to vector<10x10xf32>
    %74 = arith.mulf %69, %73 : vector<10x10xf32>
    %75 = arith.truncf %74 : vector<10x10xf32> to vector<10x10xbf16>
    %cst_27 = arith.constant dense<0.000000e+00> : vector<10x16xf32>
    %76 = tpu.matmul %75, %63, %cst_27 {dimension_numbers = #tpu.dot_dimension_numbers<[1], [0], [0], [1], [0, 0, 1, 1], [], []>} : vector<10x10xbf16>, vector<10x16xbf16>, vector<10x16xf32> -> vector<10x16xf32>
    %77 = arith.truncf %76 : vector<10x16xf32> to vector<10x16xbf16>
    %c0_28 = arith.constant 0 : index
    %c0_29 = arith.constant 0 : index
    %c16 = arith.constant 16 : index
    %78 = vector.load %arg20[%c0_28, %c0_29, %c16] : memref<1x10x32xbf16, #tpu.memory_space<vmem>>, vector<1x10x16xbf16>
    %79 = vector.shape_cast %78 : vector<1x10x16xbf16> to vector<10x16xbf16>
    %80 = vector.shape_cast %77 : vector<10x16xbf16> to vector<1x10x16xbf16>
    tpu.vector_store %arg20[%c0_28, %c0_29, %c16], %80 {strides = array<i32>} : memref<1x10x32xbf16, #tpu.memory_space<vmem>>, vector<1x10x16xbf16>,
    %c0_30 = arith.constant 0 : index
    %c0_31 = arith.constant 0 : index
    %c0_32 = arith.constant 0 : index
    %81 = vector.load %arg20[%c0_30, %c0_31, %c0_32] : memref<1x10x32xbf16, #tpu.memory_space<vmem>>, vector<1x10x32xbf16>
    %82 = vector.shape_cast %81 : vector<1x10x32xbf16> to vector<10x32xbf16>
    %c0_33 = arith.constant 0 : index
    %c0_34 = arith.constant 0 : index
    %c0_35 = arith.constant 0 : index
    %83 = vector.load %arg8[%c0_33, %c0_34, %c0_35] : memref<1x32x32xbf16, #tpu.memory_space<vmem>>, vector<1x32x32xbf16>
    %84 = vector.shape_cast %83 : vector<1x32x32xbf16> to vector<32x32xbf16>
    %cst_36 = arith.constant dense<0.000000e+00> : vector<10x32xf32>
    %85 = tpu.matmul %82, %84, %cst_36 {dimension_numbers = #tpu.dot_dimension_numbers<[1], [0], [0], [1], [0, 0, 1, 1], [], []>} : vector<10x32xbf16>, vector<32x32xbf16>, vector<10x32xf32> -> vector<10x32xf32>
    %86 = arith.addf %4, %85 : vector<10x32xf32>
    %c0_37 = arith.constant 0 : index
    %c0_38 = arith.constant 0 : index
    %c0_39 = arith.constant 0 : index
    %87 = vector.load %arg9[%c0_37, %c0_38, %c0_39] : memref<1x1x32xf32, #tpu.memory_space<vmem>>, vector<1x1x32xf32>
    %88 = vector.shape_cast %87 : vector<1x1x32xf32> to vector<1x32xf32>
    %89 = vector.broadcast %88 : vector<1x32xf32> to vector<10x32xf32>
    %90 = arith.addf %86, %89 : vector<10x32xf32>
    %c0_40 = arith.constant 0 : index
    %c0_41 = arith.constant 0 : index
    %c0_42 = arith.constant 0 : index
    %91 = vector.load %arg10[%c0_40, %c0_41, %c0_42] : memref<1x1x32xf32, #tpu.memory_space<vmem>>, vector<1x1x32xf32>
    %92 = vector.shape_cast %91 : vector<1x1x32xf32> to vector<1x32xf32>
    %c0_43 = arith.constant 0 : index
    %c0_44 = arith.constant 0 : index
    %c0_45 = arith.constant 0 : index
    %93 = vector.load %arg11[%c0_43, %c0_44, %c0_45] : memref<1x1x32xf32, #tpu.memory_space<vmem>>, vector<1x1x32xf32>
    %94 = vector.shape_cast %93 : vector<1x1x32xf32> to vector<1x32xf32>
    %cst_46 = arith.constant dense<0.000000e+00> : vector<10xf32>
    %95 = vector.multi_reduction <add>, %90, %cst_46 [1] : vector<10x32xf32> to vector<10xf32>
    %96 = vector.shape_cast %95 : vector<10xf32> to vector<10x1xf32>
    %cst_47 = arith.constant 3.200000e+01 : f32
    %97 = vector.broadcast %cst_47 : f32 to vector<10x1xf32>
    %98 = arith.divf %96, %97 : vector<10x1xf32>
    %99 = vector.broadcast %98 : vector<10x1xf32> to vector<10x32xf32>
    %100 = arith.subf %90, %99 : vector<10x32xf32>
    %101 = arith.mulf %100, %100 : vector<10x32xf32>
    %cst_48 = arith.constant dense<0.000000e+00> : vector<10xf32>
    %102 = vector.multi_reduction <add>, %101, %cst_48 [1] : vector<10x32xf32> to vector<10xf32>
    %103 = vector.shape_cast %102 : vector<10xf32> to vector<10x1xf32>
    %cst_49 = arith.constant 3.200000e+01 : f32
    %104 = vector.broadcast %cst_49 : f32 to vector<10x1xf32>
    %105 = arith.divf %103, %104 : vector<10x1xf32>
    %106 = vector.broadcast %98 : vector<10x1xf32> to vector<10x32xf32>
    %107 = arith.subf %90, %106 : vector<10x32xf32>
    %cst_50 = arith.constant 9.99999974E-6 : f32
    %108 = vector.broadcast %cst_50 : f32 to vector<10x1xf32>
    %109 = arith.addf %105, %108 : vector<10x1xf32>
    %110 = math.rsqrt %109 : vector<10x1xf32>
    %111 = vector.broadcast %110 : vector<10x1xf32> to vector<10x32xf32>
    %112 = arith.mulf %107, %111 : vector<10x32xf32>
    %113 = vector.broadcast %92 : vector<1x32xf32> to vector<10x32xf32>
    %114 = arith.mulf %112, %113 : vector<10x32xf32>
    %115 = vector.broadcast %94 : vector<1x32xf32> to vector<10x32xf32>
    %116 = arith.addf %114, %115 : vector<10x32xf32>
    %117 = arith.truncf %116 : vector<10x32xf32> to vector<10x32xbf16>
    %c0_51 = arith.constant 0 : index
    %c0_52 = arith.constant 0 : index
    %c0_53 = arith.constant 0 : index
    %118 = vector.load %arg12[%c0_51, %c0_52, %c0_53] : memref<1x32x96xbf16, #tpu.memory_space<vmem>>, vector<1x32x96xbf16>
    %119 = vector.shape_cast %118 : vector<1x32x96xbf16> to vector<32x96xbf16>
    %cst_54 = arith.constant dense<0.000000e+00> : vector<10x96xf32>
    %120 = tpu.matmul %117, %119, %cst_54 {dimension_numbers = #tpu.dot_dimension_numbers<[1], [0], [0], [1], [0, 0, 1, 1], [], []>} : vector<10x32xbf16>, vector<32x96xbf16>, vector<10x96xf32> -> vector<10x96xf32>
    %c0_55 = arith.constant 0 : index
    %c0_56 = arith.constant 0 : index
    %c0_57 = arith.constant 0 : index
    %121 = vector.load %arg13[%c0_55, %c0_56, %c0_57] : memref<1x1x96xf32, #tpu.memory_space<vmem>>, vector<1x1x96xf32>
    %122 = vector.shape_cast %121 : vector<1x1x96xf32> to vector<1x96xf32>
    %123 = vector.broadcast %122 : vector<1x96xf32> to vector<10x96xf32>
    %124 = arith.addf %120, %123 : vector<10x96xf32>
    %125 = arith.mulf %124, %124 : vector<10x96xf32>
    %126 = arith.mulf %124, %125 : vector<10x96xf32>
    %cst_58 = arith.constant 4.471500e-02 : f32
    %127 = vector.broadcast %cst_58 : f32 to vector<10x96xf32>
    %128 = arith.mulf %127, %126 : vector<10x96xf32>
    %129 = arith.addf %124, %128 : vector<10x96xf32>
    %cst_59 = arith.constant 0.797884583 : f32
    %130 = vector.broadcast %cst_59 : f32 to vector<10x96xf32>
    %131 = arith.mulf %130, %129 : vector<10x96xf32>
    %132 = math.tanh %131 : vector<10x96xf32>
    %cst_60 = arith.constant 1.000000e+00 : f32
    %133 = vector.broadcast %cst_60 : f32 to vector<10x96xf32>
    %134 = arith.addf %133, %132 : vector<10x96xf32>
    %cst_61 = arith.constant 5.000000e-01 : f32
    %135 = vector.broadcast %cst_61 : f32 to vector<10x96xf32>
    %136 = arith.mulf %135, %134 : vector<10x96xf32>
    %137 = arith.mulf %124, %136 : vector<10x96xf32>
    %138 = arith.truncf %137 : vector<10x96xf32> to vector<10x96xbf16>
    %c0_62 = arith.constant 0 : index
    %c0_63 = arith.constant 0 : index
    %c0_64 = arith.constant 0 : index
    %139 = vector.load %arg14[%c0_62, %c0_63, %c0_64] : memref<1x96x32xbf16, #tpu.memory_space<vmem>>, vector<1x96x32xbf16>
    %140 = vector.shape_cast %139 : vector<1x96x32xbf16> to vector<96x32xbf16>
    %cst_65 = arith.constant dense<0.000000e+00> : vector<10x32xf32>
    %141 = tpu.matmul %138, %140, %cst_65 {dimension_numbers = #tpu.dot_dimension_numbers<[1], [0], [0], [1], [0, 0, 1, 1], [], []>} : vector<10x96xbf16>, vector<96x32xbf16>, vector<10x32xf32> -> vector<10x32xf32>
    %142 = arith.addf %90, %141 : vector<10x32xf32>
    %c0_66 = arith.constant 0 : index
    %c0_67 = arith.constant 0 : index
    %c0_68 = arith.constant 0 : index
    %143 = vector.load %arg15[%c0_66, %c0_67, %c0_68] : memref<1x1x32xf32, #tpu.memory_space<vmem>>, vector<1x1x32xf32>
    %144 = vector.shape_cast %143 : vector<1x1x32xf32> to vector<1x32xf32>
    %145 = vector.broadcast %144 : vector<1x32xf32> to vector<10x32xf32>
    %146 = arith.addf %142, %145 : vector<10x32xf32>
    %c0_69 = arith.constant 0 : index
    %c0_70 = arith.constant 0 : index
    %c0_71 = arith.constant 0 : index
    %147 = vector.load %arg19[%c0_69, %c0_70, %c0_71] : memref<1x10x32xf32, #tpu.memory_space<vmem>>, vector<1x10x32xf32>
    %148 = vector.shape_cast %147 : vector<1x10x32xf32> to vector<10x32xf32>
    %149 = vector.shape_cast %146 : vector<10x32xf32> to vector<1x10x32xf32>
    tpu.vector_store %arg19[%c0_69, %c0_70, %c0_71], %149 {strides = array<i32>} : memref<1x10x32xf32, #tpu.memory_space<vmem>>, vector<1x10x32xf32>,
    %c1_i32 = arith.constant 1 : i32
    %150 = arith.cmpi eq, %arg1, %c1_i32 : i32
    %151 = arith.extui %150 : i1 to i32
    %c0_i32_72 = arith.constant 0 : i32
    %152 = arith.cmpi ne, %151, %c0_i32_72 : i32
    scf.if %152 {
      %c0_73 = arith.constant 0 : index
      %c0_74 = arith.constant 0 : index
      %c0_75 = arith.constant 0 : index
      %153 = vector.load %arg19[%c0_73, %c0_74, %c0_75] : memref<1x10x32xf32, #tpu.memory_space<vmem>>, vector<1x10x32xf32>
      %154 = vector.shape_cast %153 : vector<1x10x32xf32> to vector<10x32xf32>
      %c0_76 = arith.constant 0 : index
      %c0_77 = arith.constant 0 : index
      %155 = vector.load %arg16[%c0_76, %c0_77] : memref<1x32xf32, #tpu.memory_space<vmem>>, vector<1x32xf32>
      %c0_78 = arith.constant 0 : index
      %c0_79 = arith.constant 0 : index
      %156 = vector.load %arg17[%c0_78, %c0_79] : memref<1x32xf32, #tpu.memory_space<vmem>>, vector<1x32xf32>
      %cst_80 = arith.constant dense<0.000000e+00> : vector<10xf32>
      %157 = vector.multi_reduction <add>, %154, %cst_80 [1] : vector<10x32xf32> to vector<10xf32>
      %158 = vector.shape_cast %157 : vector<10xf32> to vector<10x1xf32>
      %cst_81 = arith.constant 3.200000e+01 : f32
      %159 = vector.broadcast %cst_81 : f32 to vector<10x1xf32>
      %160 = arith.divf %158, %159 : vector<10x1xf32>
      %161 = vector.broadcast %160 : vector<10x1xf32> to vector<10x32xf32>
      %162 = arith.subf %154, %161 : vector<10x32xf32>
      %163 = arith.mulf %162, %162 : vector<10x32xf32>
      %cst_82 = arith.constant dense<0.000000e+00> : vector<10xf32>
      %164 = vector.multi_reduction <add>, %163, %cst_82 [1] : vector<10x32xf32> to vector<10xf32>
      %165 = vector.shape_cast %164 : vector<10xf32> to vector<10x1xf32>
      %cst_83 = arith.constant 3.200000e+01 : f32
      %166 = vector.broadcast %cst_83 : f32 to vector<10x1xf32>
      %167 = arith.divf %165, %166 : vector<10x1xf32>
      %168 = vector.broadcast %160 : vector<10x1xf32> to vector<10x32xf32>
      %169 = arith.subf %154, %168 : vector<10x32xf32>
      %cst_84 = arith.constant 9.99999974E-6 : f32
      %170 = vector.broadcast %cst_84 : f32 to vector<10x1xf32>
      %171 = arith.addf %167, %170 : vector<10x1xf32>
      %172 = math.rsqrt %171 : vector<10x1xf32>
      %173 = vector.broadcast %172 : vector<10x1xf32> to vector<10x32xf32>
      %174 = arith.mulf %169, %173 : vector<10x32xf32>
      %175 = vector.broadcast %155 : vector<1x32xf32> to vector<10x32xf32>
      %176 = arith.mulf %174, %175 : vector<10x32xf32>
      %177 = vector.broadcast %156 : vector<1x32xf32> to vector<10x32xf32>
      %178 = arith.addf %176, %177 : vector<10x32xf32>
      %c0_85 = arith.constant 0 : index
      %c0_86 = arith.constant 0 : index
      %c0_87 = arith.constant 0 : index
      %179 = vector.load %arg18[%c0_85, %c0_86, %c0_87] : memref<1x10x32xf32, #tpu.memory_space<vmem>>, vector<1x10x32xf32>
      %180 = vector.shape_cast %179 : vector<1x10x32xf32> to vector<10x32xf32>
      %181 = vector.shape_cast %178 : vector<10x32xf32> to vector<1x10x32xf32>
      tpu.vector_store %arg18[%c0_85, %c0_86, %c0_87], %181 {strides = array<i32>} : memref<1x10x32xf32, #tpu.memory_space<vmem>>, vector<1x10x32xf32>,
    } else {
    }
    return
  }
  func.func @transform_0(%arg0: i32, %arg1: i32) -> (i32, i32, i32) {
    %c0_i32 = arith.constant 0 : i32
    %c0_i32_0 = arith.constant 0 : i32
    %c0_i32_1 = arith.constant 0 : i32
    return %arg0, %c0_i32, %c0_i32_0 : i32, i32, i32
  }
  func.func @transform_1(%arg0: i32, %arg1: i32) -> (i32, i32) {
    %c0_i32 = arith.constant 0 : i32
    %c0_i32_0 = arith.constant 0 : i32
    %c0_i32_1 = arith.constant 0 : i32
    return %c0_i32, %c0_i32_0 : i32, i32
  }
  func.func @transform_2(%arg0: i32, %arg1: i32) -> (i32, i32) {
    %c0_i32 = arith.constant 0 : i32
    %c0_i32_0 = arith.constant 0 : i32
    %c0_i32_1 = arith.constant 0 : i32
    return %c0_i32, %c0_i32_0 : i32, i32
  }
  func.func @transform_3(%arg0: i32, %arg1: i32) -> (i32, i32, i32) {
    %c0_i32 = arith.constant 0 : i32
    %c0_i32_0 = arith.constant 0 : i32
    %c0_i32_1 = arith.constant 0 : i32
    return %arg1, %c0_i32, %c0_i32_0 : i32, i32, i32
  }
  func.func @transform_4(%arg0: i32, %arg1: i32) -> (i32, i32, i32) {
    %c0_i32 = arith.constant 0 : i32
    %c0_i32_0 = arith.constant 0 : i32
    %c0_i32_1 = arith.constant 0 : i32
    return %arg1, %c0_i32, %c0_i32_0 : i32, i32, i32
  }
  func.func @transform_5(%arg0: i32, %arg1: i32) -> (i32, i32, i32) {
    %c0_i32 = arith.constant 0 : i32
    %c0_i32_0 = arith.constant 0 : i32
    %c0_i32_1 = arith.constant 0 : i32
    return %arg1, %c0_i32, %c0_i32_0 : i32, i32, i32
  }
  func.func @transform_6(%arg0: i32, %arg1: i32) -> (i32, i32, i32) {
    %c0_i32 = arith.constant 0 : i32
    %c0_i32_0 = arith.constant 0 : i32
    %c0_i32_1 = arith.constant 0 : i32
    return %arg1, %c0_i32, %c0_i32_0 : i32, i32, i32
  }
  func.func @transform_7(%arg0: i32, %arg1: i32) -> (i32, i32, i32) {
    %c0_i32 = arith.constant 0 : i32
    %c0_i32_0 = arith.constant 0 : i32
    %c0_i32_1 = arith.constant 0 : i32
    return %arg1, %c0_i32, %c0_i32_0 : i32, i32, i32
  }
  func.func @transform_8(%arg0: i32, %arg1: i32) -> (i32, i32, i32) {
    %c0_i32 = arith.constant 0 : i32
    %c0_i32_0 = arith.constant 0 : i32
    %c0_i32_1 = arith.constant 0 : i32
    return %arg1, %c0_i32, %c0_i32_0 : i32, i32, i32
  }
  func.func @transform_9(%arg0: i32, %arg1: i32) -> (i32, i32, i32) {
    %c0_i32 = arith.constant 0 : i32
    %c0_i32_0 = arith.constant 0 : i32
    %c0_i32_1 = arith.constant 0 : i32
    return %arg1, %c0_i32, %c0_i32_0 : i32, i32, i32
  }
  func.func @transform_10(%arg0: i32, %arg1: i32) -> (i32, i32, i32) {
    %c0_i32 = arith.constant 0 : i32
    %c0_i32_0 = arith.constant 0 : i32
    %c0_i32_1 = arith.constant 0 : i32
    return %arg1, %c0_i32, %c0_i32_0 : i32, i32, i32
  }
  func.func @transform_11(%arg0: i32, %arg1: i32) -> (i32, i32, i32) {
    %c0_i32 = arith.constant 0 : i32
    %c0_i32_0 = arith.constant 0 : i32
    %c0_i32_1 = arith.constant 0 : i32
    return %arg1, %c0_i32, %c0_i32_0 : i32, i32, i32
  }
  func.func @transform_12(%arg0: i32, %arg1: i32) -> (i32, i32, i32) {
    %c0_i32 = arith.constant 0 : i32
    %c0_i32_0 = arith.constant 0 : i32
    %c0_i32_1 = arith.constant 0 : i32
    return %arg1, %c0_i32, %c0_i32_0 : i32, i32, i32
  }
  func.func @transform_13(%arg0: i32, %arg1: i32) -> (i32, i32, i32) {
    %c0_i32 = arith.constant 0 : i32
    %c0_i32_0 = arith.constant 0 : i32
    %c0_i32_1 = arith.constant 0 : i32
    return %arg1, %c0_i32, %c0_i32_0 : i32, i32, i32
  }
  func.func @transform_14(%arg0: i32, %arg1: i32) -> (i32, i32) {
    %c0_i32 = arith.constant 0 : i32
    %c0_i32_0 = arith.constant 0 : i32
    %c0_i32_1 = arith.constant 0 : i32
    return %c0_i32, %c0_i32_0 : i32, i32
  }
  func.func @transform_15(%arg0: i32, %arg1: i32) -> (i32, i32) {
    %c0_i32 = arith.constant 0 : i32
    %c0_i32_0 = arith.constant 0 : i32
    %c0_i32_1 = arith.constant 0 : i32
    return %c0_i32, %c0_i32_0 : i32, i32
  }
  func.func @transform_16(%arg0: i32, %arg1: i32) -> (i32, i32, i32) {
    %c0_i32 = arith.constant 0 : i32
    %c0_i32_0 = arith.constant 0 : i32
    %c0_i32_1 = arith.constant 0 : i32
    return %arg0, %c0_i32, %c0_i32_0 : i32, i32, i32
  }
}

module attributes {stable_mosaic.version = 11 : i64} {
  func.func @_token_inf_kernel(%arg0: i32, %arg1: memref<1x10x32xf32, #tpu.memory_space<vmem>>, %arg2: memref<1x32xf32, #tpu.memory_space<vmem>>, %arg3: memref<1x32xf32, #tpu.memory_space<vmem>>, %arg4: memref<32x32xbf16, #tpu.memory_space<vmem>>, %arg5: memref<32x64xbf16, #tpu.memory_space<vmem>>, %arg6: memref<32x32xbf16, #tpu.memory_space<vmem>>, %arg7: memref<1x32xf32, #tpu.memory_space<vmem>>, %arg8: memref<1x32xf32, #tpu.memory_space<vmem>>, %arg9: memref<1x32xf32, #tpu.memory_space<vmem>>, %arg10: memref<32x32xbf16, #tpu.memory_space<vmem>>, %arg11: memref<32x64xbf16, #tpu.memory_space<vmem>>, %arg12: memref<32x32xbf16, #tpu.memory_space<vmem>>, %arg13: memref<1x32xf32, #tpu.memory_space<vmem>>, %arg14: memref<1x10x32xf32, #tpu.memory_space<vmem>>, %arg15: memref<1x10x32xf32, #tpu.memory_space<vmem>>) attributes {dimension_semantics = [#tpu.dimension_semantics<parallel>], iteration_bounds = array<i64: 2>, scalar_prefetch = 0 : i64, scratch_operands = 0 : i64, tpu.core_type = #tpu.core_type<tc>, window_params = [{transform_indices = @transform_0, window_bounds = array<i64: 1, 10, 32>}, {pipeline_mode = #tpu.pipeline_mode<synchronous>, transform_indices = @transform_1, window_bounds = array<i64: 1, 32>}, {pipeline_mode = #tpu.pipeline_mode<synchronous>, transform_indices = @transform_2, window_bounds = array<i64: 1, 32>}, {pipeline_mode = #tpu.pipeline_mode<synchronous>, transform_indices = @transform_3, window_bounds = array<i64: 32, 32>}, {pipeline_mode = #tpu.pipeline_mode<synchronous>, transform_indices = @transform_4, window_bounds = array<i64: 32, 64>}, {pipeline_mode = #tpu.pipeline_mode<synchronous>, transform_indices = @transform_5, window_bounds = array<i64: 32, 32>}, {pipeline_mode = #tpu.pipeline_mode<synchronous>, transform_indices = @transform_6, window_bounds = array<i64: 1, 32>}, {pipeline_mode = #tpu.pipeline_mode<synchronous>, transform_indices = @transform_7, window_bounds = array<i64: 1, 32>}, {pipeline_mode = #tpu.pipeline_mode<synchronous>, transform_indices = @transform_8, window_bounds = array<i64: 1, 32>}, {pipeline_mode = #tpu.pipeline_mode<synchronous>, transform_indices = @transform_9, window_bounds = array<i64: 32, 32>}, {pipeline_mode = #tpu.pipeline_mode<synchronous>, transform_indices = @transform_10, window_bounds = array<i64: 32, 64>}, {pipeline_mode = #tpu.pipeline_mode<synchronous>, transform_indices = @transform_11, window_bounds = array<i64: 32, 32>}, {pipeline_mode = #tpu.pipeline_mode<synchronous>, transform_indices = @transform_12, window_bounds = array<i64: 1, 32>}, {transform_indices = @transform_13, window_bounds = array<i64: 1, 10, 32>}, {transform_indices = @transform_14, window_bounds = array<i64: 1, 10, 32>}]} {
    %c0 = arith.constant 0 : index
    %c0_0 = arith.constant 0 : index
    %c0_1 = arith.constant 0 : index
    %0 = vector.load %arg1[%c0, %c0_0, %c0_1] : memref<1x10x32xf32, #tpu.memory_space<vmem>>, vector<1x10x32xf32>
    %1 = vector.shape_cast %0 : vector<1x10x32xf32> to vector<10x32xf32>
    %cst = arith.constant dense<0.000000e+00> : vector<10xf32>
    %2 = vector.multi_reduction <add>, %1, %cst [1] : vector<10x32xf32> to vector<10xf32>
    %3 = vector.shape_cast %2 : vector<10xf32> to vector<10x1xf32>
    %cst_2 = arith.constant 3.200000e+01 : f32
    %4 = vector.broadcast %cst_2 : f32 to vector<10x1xf32>
    %5 = arith.divf %3, %4 : vector<10x1xf32>
    %6 = vector.broadcast %5 : vector<10x1xf32> to vector<10x32xf32>
    %7 = arith.subf %1, %6 : vector<10x32xf32>
    %8 = arith.mulf %7, %7 : vector<10x32xf32>
    %cst_3 = arith.constant dense<0.000000e+00> : vector<10xf32>
    %9 = vector.multi_reduction <add>, %8, %cst_3 [1] : vector<10x32xf32> to vector<10xf32>
    %10 = vector.shape_cast %9 : vector<10xf32> to vector<10x1xf32>
    %cst_4 = arith.constant 3.200000e+01 : f32
    %11 = vector.broadcast %cst_4 : f32 to vector<10x1xf32>
    %12 = arith.divf %10, %11 : vector<10x1xf32>
    %13 = vector.broadcast %5 : vector<10x1xf32> to vector<10x32xf32>
    %14 = arith.subf %1, %13 : vector<10x32xf32>
    %cst_5 = arith.constant 9.99999974E-6 : f32
    %15 = vector.broadcast %cst_5 : f32 to vector<10x1xf32>
    %16 = arith.addf %12, %15 : vector<10x1xf32>
    %17 = math.rsqrt %16 : vector<10x1xf32>
    %18 = vector.broadcast %17 : vector<10x1xf32> to vector<10x32xf32>
    %19 = arith.mulf %14, %18 : vector<10x32xf32>
    %c0_6 = arith.constant 0 : index
    %c0_7 = arith.constant 0 : index
    %20 = vector.load %arg2[%c0_6, %c0_7] : memref<1x32xf32, #tpu.memory_space<vmem>>, vector<1x32xf32>
    %21 = vector.broadcast %20 : vector<1x32xf32> to vector<10x32xf32>
    %22 = arith.mulf %19, %21 : vector<10x32xf32>
    %c0_8 = arith.constant 0 : index
    %c0_9 = arith.constant 0 : index
    %23 = vector.load %arg3[%c0_8, %c0_9] : memref<1x32xf32, #tpu.memory_space<vmem>>, vector<1x32xf32>
    %24 = vector.broadcast %23 : vector<1x32xf32> to vector<10x32xf32>
    %25 = arith.addf %22, %24 : vector<10x32xf32>
    %26 = vector.extract_strided_slice %25 {offsets = [0, 0], sizes = [1, 32], strides = [1, 1]} : vector<10x32xf32> to vector<1x32xf32>
    %27 = arith.truncf %26 : vector<1x32xf32> to vector<1x32xbf16>
    %28 = arith.truncf %25 : vector<10x32xf32> to vector<10x32xbf16>
    %c0_10 = arith.constant 0 : index
    %c0_11 = arith.constant 0 : index
    %29 = vector.load %arg4[%c0_10, %c0_11] : memref<32x32xbf16, #tpu.memory_space<vmem>>, vector<32x32xbf16>
    %cst_12 = arith.constant dense<0.000000e+00> : vector<10x32xf32>
    %30 = tpu.matmul %28, %29, %cst_12 {dimension_numbers = #tpu.dot_dimension_numbers<[1], [0], [0], [1], [0, 0, 1, 1], [], []>} : vector<10x32xbf16>, vector<32x32xbf16>, vector<10x32xf32> -> vector<10x32xf32>
    %c0_13 = arith.constant 0 : index
    %c0_14 = arith.constant 0 : index
    %31 = vector.load %arg5[%c0_13, %c0_14] : memref<32x64xbf16, #tpu.memory_space<vmem>>, vector<32x64xbf16>
    %cst_15 = arith.constant dense<0.000000e+00> : vector<1x64xf32>
    %32 = tpu.matmul %27, %31, %cst_15 {dimension_numbers = #tpu.dot_dimension_numbers<[1], [0], [0], [1], [0, 0, 1, 1], [], []>} : vector<1x32xbf16>, vector<32x64xbf16>, vector<1x64xf32> -> vector<1x64xf32>
    %33 = vector.extract_strided_slice %32 {offsets = [0, 0], sizes = [1, 32], strides = [1, 1]} : vector<1x64xf32> to vector<1x32xf32>
    %34 = vector.extract_strided_slice %32 {offsets = [0, 32], sizes = [1, 32], strides = [1, 1]} : vector<1x64xf32> to vector<1x32xf32>
    %35 = vector.broadcast %33 : vector<1x32xf32> to vector<10x32xf32>
    %36 = arith.mulf %30, %35 : vector<10x32xf32>
    %cst_16 = arith.constant dense<0.000000e+00> : vector<10xf32>
    %37 = vector.multi_reduction <add>, %36, %cst_16 [1] : vector<10x32xf32> to vector<10xf32>
    %38 = vector.shape_cast %37 : vector<10xf32> to vector<10x1xf32>
    %39 = arith.negf %38 : vector<10x1xf32>
    %40 = math.exp %39 : vector<10x1xf32>
    %cst_17 = arith.constant 1.000000e+00 : f32
    %41 = vector.broadcast %cst_17 : f32 to vector<10x1xf32>
    %42 = arith.addf %41, %40 : vector<10x1xf32>
    %43 = arith.divf %41, %42 : vector<10x1xf32>
    %44 = vector.broadcast %43 : vector<10x1xf32> to vector<10x32xf32>
    %45 = vector.broadcast %34 : vector<1x32xf32> to vector<10x32xf32>
    %46 = arith.mulf %44, %45 : vector<10x32xf32>
    %47 = arith.truncf %46 : vector<10x32xf32> to vector<10x32xbf16>
    %c0_18 = arith.constant 0 : index
    %c0_19 = arith.constant 0 : index
    %48 = vector.load %arg6[%c0_18, %c0_19] : memref<32x32xbf16, #tpu.memory_space<vmem>>, vector<32x32xbf16>
    %cst_20 = arith.constant dense<0.000000e+00> : vector<10x32xf32>
    %49 = tpu.matmul %47, %48, %cst_20 {dimension_numbers = #tpu.dot_dimension_numbers<[1], [0], [0], [1], [0, 0, 1, 1], [], []>} : vector<10x32xbf16>, vector<32x32xbf16>, vector<10x32xf32> -> vector<10x32xf32>
    %c0_21 = arith.constant 0 : index
    %c0_22 = arith.constant 0 : index
    %50 = vector.load %arg7[%c0_21, %c0_22] : memref<1x32xf32, #tpu.memory_space<vmem>>, vector<1x32xf32>
    %51 = vector.broadcast %50 : vector<1x32xf32> to vector<10x32xf32>
    %52 = arith.addf %49, %51 : vector<10x32xf32>
    %53 = arith.addf %52, %1 : vector<10x32xf32>
    %c0_23 = arith.constant 0 : index
    %c0_24 = arith.constant 0 : index
    %c0_25 = arith.constant 0 : index
    %54 = vector.load %arg14[%c0_23, %c0_24, %c0_25] : memref<1x10x32xf32, #tpu.memory_space<vmem>>, vector<1x10x32xf32>
    %55 = vector.shape_cast %54 : vector<1x10x32xf32> to vector<10x32xf32>
    %56 = vector.shape_cast %53 : vector<10x32xf32> to vector<1x10x32xf32>
    tpu.vector_store %arg14[%c0_23, %c0_24, %c0_25], %56 {strides = array<i32>} : memref<1x10x32xf32, #tpu.memory_space<vmem>>, vector<1x10x32xf32>,
    %c0_26 = arith.constant 0 : index
    %c0_27 = arith.constant 0 : index
    %57 = vector.load %arg8[%c0_26, %c0_27] : memref<1x32xf32, #tpu.memory_space<vmem>>, vector<1x32xf32>
    %58 = vector.broadcast %57 : vector<1x32xf32> to vector<10x32xf32>
    %59 = arith.mulf %19, %58 : vector<10x32xf32>
    %c0_28 = arith.constant 0 : index
    %c0_29 = arith.constant 0 : index
    %60 = vector.load %arg9[%c0_28, %c0_29] : memref<1x32xf32, #tpu.memory_space<vmem>>, vector<1x32xf32>
    %61 = vector.broadcast %60 : vector<1x32xf32> to vector<10x32xf32>
    %62 = arith.addf %59, %61 : vector<10x32xf32>
    %63 = vector.extract_strided_slice %62 {offsets = [9, 0], sizes = [1, 32], strides = [1, 1]} : vector<10x32xf32> to vector<1x32xf32>
    %64 = arith.truncf %63 : vector<1x32xf32> to vector<1x32xbf16>
    %65 = arith.truncf %62 : vector<10x32xf32> to vector<10x32xbf16>
    %c0_30 = arith.constant 0 : index
    %c0_31 = arith.constant 0 : index
    %66 = vector.load %arg10[%c0_30, %c0_31] : memref<32x32xbf16, #tpu.memory_space<vmem>>, vector<32x32xbf16>
    %cst_32 = arith.constant dense<0.000000e+00> : vector<10x32xf32>
    %67 = tpu.matmul %65, %66, %cst_32 {dimension_numbers = #tpu.dot_dimension_numbers<[1], [0], [0], [1], [0, 0, 1, 1], [], []>} : vector<10x32xbf16>, vector<32x32xbf16>, vector<10x32xf32> -> vector<10x32xf32>
    %c0_33 = arith.constant 0 : index
    %c0_34 = arith.constant 0 : index
    %68 = vector.load %arg11[%c0_33, %c0_34] : memref<32x64xbf16, #tpu.memory_space<vmem>>, vector<32x64xbf16>
    %cst_35 = arith.constant dense<0.000000e+00> : vector<1x64xf32>
    %69 = tpu.matmul %64, %68, %cst_35 {dimension_numbers = #tpu.dot_dimension_numbers<[1], [0], [0], [1], [0, 0, 1, 1], [], []>} : vector<1x32xbf16>, vector<32x64xbf16>, vector<1x64xf32> -> vector<1x64xf32>
    %70 = vector.extract_strided_slice %69 {offsets = [0, 0], sizes = [1, 32], strides = [1, 1]} : vector<1x64xf32> to vector<1x32xf32>
    %71 = vector.extract_strided_slice %69 {offsets = [0, 32], sizes = [1, 32], strides = [1, 1]} : vector<1x64xf32> to vector<1x32xf32>
    %72 = vector.broadcast %70 : vector<1x32xf32> to vector<10x32xf32>
    %73 = arith.mulf %67, %72 : vector<10x32xf32>
    %cst_36 = arith.constant dense<0.000000e+00> : vector<10xf32>
    %74 = vector.multi_reduction <add>, %73, %cst_36 [1] : vector<10x32xf32> to vector<10xf32>
    %75 = vector.shape_cast %74 : vector<10xf32> to vector<10x1xf32>
    %76 = arith.negf %75 : vector<10x1xf32>
    %77 = math.exp %76 : vector<10x1xf32>
    %cst_37 = arith.constant 1.000000e+00 : f32
    %78 = vector.broadcast %cst_37 : f32 to vector<10x1xf32>
    %79 = arith.addf %78, %77 : vector<10x1xf32>
    %80 = arith.divf %78, %79 : vector<10x1xf32>
    %81 = vector.broadcast %80 : vector<10x1xf32> to vector<10x32xf32>
    %82 = vector.broadcast %71 : vector<1x32xf32> to vector<10x32xf32>
    %83 = arith.mulf %81, %82 : vector<10x32xf32>
    %84 = arith.truncf %83 : vector<10x32xf32> to vector<10x32xbf16>
    %c0_38 = arith.constant 0 : index
    %c0_39 = arith.constant 0 : index
    %85 = vector.load %arg12[%c0_38, %c0_39] : memref<32x32xbf16, #tpu.memory_space<vmem>>, vector<32x32xbf16>
    %cst_40 = arith.constant dense<0.000000e+00> : vector<10x32xf32>
    %86 = tpu.matmul %84, %85, %cst_40 {dimension_numbers = #tpu.dot_dimension_numbers<[1], [0], [0], [1], [0, 0, 1, 1], [], []>} : vector<10x32xbf16>, vector<32x32xbf16>, vector<10x32xf32> -> vector<10x32xf32>
    %c0_41 = arith.constant 0 : index
    %c0_42 = arith.constant 0 : index
    %87 = vector.load %arg13[%c0_41, %c0_42] : memref<1x32xf32, #tpu.memory_space<vmem>>, vector<1x32xf32>
    %88 = vector.broadcast %87 : vector<1x32xf32> to vector<10x32xf32>
    %89 = arith.addf %86, %88 : vector<10x32xf32>
    %90 = arith.addf %89, %1 : vector<10x32xf32>
    %c0_43 = arith.constant 0 : index
    %c0_44 = arith.constant 0 : index
    %c0_45 = arith.constant 0 : index
    %91 = vector.load %arg15[%c0_43, %c0_44, %c0_45] : memref<1x10x32xf32, #tpu.memory_space<vmem>>, vector<1x10x32xf32>
    %92 = vector.shape_cast %91 : vector<1x10x32xf32> to vector<10x32xf32>
    %93 = vector.shape_cast %90 : vector<10x32xf32> to vector<1x10x32xf32>
    tpu.vector_store %arg15[%c0_43, %c0_44, %c0_45], %93 {strides = array<i32>} : memref<1x10x32xf32, #tpu.memory_space<vmem>>, vector<1x10x32xf32>,
    return
  }
  func.func @transform_0(%arg0: i32) -> (i32, i32, i32) {
    %c0_i32 = arith.constant 0 : i32
    %c0_i32_0 = arith.constant 0 : i32
    %c0_i32_1 = arith.constant 0 : i32
    return %arg0, %c0_i32, %c0_i32_0 : i32, i32, i32
  }
  func.func @transform_1(%arg0: i32) -> (i32, i32) {
    %c0_i32 = arith.constant 0 : i32
    %c0_i32_0 = arith.constant 0 : i32
    %c0_i32_1 = arith.constant 0 : i32
    return %c0_i32, %c0_i32_0 : i32, i32
  }
  func.func @transform_2(%arg0: i32) -> (i32, i32) {
    %c0_i32 = arith.constant 0 : i32
    %c0_i32_0 = arith.constant 0 : i32
    %c0_i32_1 = arith.constant 0 : i32
    return %c0_i32, %c0_i32_0 : i32, i32
  }
  func.func @transform_3(%arg0: i32) -> (i32, i32) {
    %c0_i32 = arith.constant 0 : i32
    %c0_i32_0 = arith.constant 0 : i32
    %c0_i32_1 = arith.constant 0 : i32
    return %c0_i32, %c0_i32_0 : i32, i32
  }
  func.func @transform_4(%arg0: i32) -> (i32, i32) {
    %c0_i32 = arith.constant 0 : i32
    %c0_i32_0 = arith.constant 0 : i32
    %c0_i32_1 = arith.constant 0 : i32
    return %c0_i32, %c0_i32_0 : i32, i32
  }
  func.func @transform_5(%arg0: i32) -> (i32, i32) {
    %c0_i32 = arith.constant 0 : i32
    %c0_i32_0 = arith.constant 0 : i32
    %c0_i32_1 = arith.constant 0 : i32
    return %c0_i32, %c0_i32_0 : i32, i32
  }
  func.func @transform_6(%arg0: i32) -> (i32, i32) {
    %c0_i32 = arith.constant 0 : i32
    %c0_i32_0 = arith.constant 0 : i32
    %c0_i32_1 = arith.constant 0 : i32
    return %c0_i32, %c0_i32_0 : i32, i32
  }
  func.func @transform_7(%arg0: i32) -> (i32, i32) {
    %c0_i32 = arith.constant 0 : i32
    %c0_i32_0 = arith.constant 0 : i32
    %c0_i32_1 = arith.constant 0 : i32
    return %c0_i32, %c0_i32_0 : i32, i32
  }
  func.func @transform_8(%arg0: i32) -> (i32, i32) {
    %c0_i32 = arith.constant 0 : i32
    %c0_i32_0 = arith.constant 0 : i32
    %c0_i32_1 = arith.constant 0 : i32
    return %c0_i32, %c0_i32_0 : i32, i32
  }
  func.func @transform_9(%arg0: i32) -> (i32, i32) {
    %c0_i32 = arith.constant 0 : i32
    %c0_i32_0 = arith.constant 0 : i32
    %c0_i32_1 = arith.constant 0 : i32
    return %c0_i32, %c0_i32_0 : i32, i32
  }
  func.func @transform_10(%arg0: i32) -> (i32, i32) {
    %c0_i32 = arith.constant 0 : i32
    %c0_i32_0 = arith.constant 0 : i32
    %c0_i32_1 = arith.constant 0 : i32
    return %c0_i32, %c0_i32_0 : i32, i32
  }
  func.func @transform_11(%arg0: i32) -> (i32, i32) {
    %c0_i32 = arith.constant 0 : i32
    %c0_i32_0 = arith.constant 0 : i32
    %c0_i32_1 = arith.constant 0 : i32
    return %c0_i32, %c0_i32_0 : i32, i32
  }
  func.func @transform_12(%arg0: i32) -> (i32, i32) {
    %c0_i32 = arith.constant 0 : i32
    %c0_i32_0 = arith.constant 0 : i32
    %c0_i32_1 = arith.constant 0 : i32
    return %c0_i32, %c0_i32_0 : i32, i32
  }
  func.func @transform_13(%arg0: i32) -> (i32, i32, i32) {
    %c0_i32 = arith.constant 0 : i32
    %c0_i32_0 = arith.constant 0 : i32
    %c0_i32_1 = arith.constant 0 : i32
    return %arg0, %c0_i32, %c0_i32_0 : i32, i32, i32
  }
  func.func @transform_14(%arg0: i32) -> (i32, i32, i32) {
    %c0_i32 = arith.constant 0 : i32
    %c0_i32_0 = arith.constant 0 : i32
    %c0_i32_1 = arith.constant 0 : i32
    return %arg0, %c0_i32, %c0_i32_0 : i32, i32, i32
  }
}

</mosaic_0001>

<llo_original>
// kernel: token_transformer_forward.3
$region0: #{token_transformer_forward.3}
  #allocation0 [shape = 'u32[]', space=smem, size = 0x4, offset = 0x4, fixed_abs, tag = 'smem constant byte address 0x4 - core index']
  #allocation1 [shape = 'u32[72,128]{1,0:T(1,128)}', space=vmem, size = 0x9000, scoped, tag = 'internal scratch']
  %s0 = inlined_call_operand.vmem [shape: f32[16,32], index: 0, kind: input, shape index: {}]
  %s1 = inlined_call_operand.vmem [shape: f32[1,32], index: 1, kind: input, shape index: {}]
  %s2 = inlined_call_operand.vmem [shape: f32[1,32], index: 2, kind: input, shape index: {}]
  %s3 = inlined_call_operand.hbm [shape: bf16[32,32], index: 3, kind: input, shape index: {}]
  %s4 = inlined_call_operand.vmem [shape: f32[1,32], index: 4, kind: input, shape index: {}]
  %s5 = inlined_call_operand.hbm [shape: bf16[32,32], index: 5, kind: input, shape index: {}]
  %s6 = inlined_call_operand.vmem [shape: f32[1,32], index: 6, kind: input, shape index: {}]
  %s7 = inlined_call_operand.vmem [shape: f32[16,32], index: 7, kind: output, shape index: {}]
  %s8 = sld [smem:[#allocation0]]
  $region46: #{token_transformer_forward.3} parent=0
    _
  %s10 = ssub.s32 1, %s8
  %s11 = scalar_select 0, %s10, %s8
  $region1: #{token_transformer_forward.3} parent=0
    #allocation2 [shape = 'u8[8192]{0}', space=vmem, size = 0x2000, scoped, tag = 'input window, operand 3, single buffered']
    #allocation3 [shape = 's32[1]{0}', space=sflag, size = 0x4, scoped, tag = 'scoped memory for token_transformer_forward.3']
    #allocation4 [shape = 'u8[8192]{0}', space=vmem, size = 0x2000, scoped, tag = 'input window, operand 5, single buffered']
    #allocation5 [shape = 's32[1]{0}', space=sflag, size = 0x4, scoped, tag = 'scoped memory for token_transformer_forward.3']
    %12 = vsyncpa [#allocation3], 0
    %13 = vsyncpa [#allocation5], 0
    // Predicated region
    $region2: #{token_transformer_forward.3} parent=1 // pred_check
      _
    $region3: #{token_transformer_forward.3} parent=1 // pred_check_branch
      %15 = sbr.rel (0) target = $region5
    $region4: #{token_transformer_forward.3} parent=1 // pred_region
      _
    $region5: #{token_transformer_forward.3} parent=1 // pred_fallthru
      _
    // Predicated region
    $region6: #{token_transformer_forward.3} parent=1 // pred_check
      _
    $region7: #{token_transformer_forward.3} parent=1 // pred_check_branch
      %17 = sbr.rel (0) target = $region9
    $region8: #{token_transformer_forward.3} parent=1 // pred_region
      _
    $region9: #{token_transformer_forward.3} parent=1 // pred_fallthru
      _
    // Predicated region
    $region10: #{token_transformer_forward.3} parent=1 // pred_check
      _
    $region11: #{token_transformer_forward.3} parent=1 // pred_check_branch
      %19 = sbr.rel (0) target = $region13
    $region12: #{token_transformer_forward.3} parent=1 // pred_region
      _
    $region13: #{token_transformer_forward.3} parent=1 // pred_fallthru
      _
    // Predicated region
    $region14: #{token_transformer_forward.3} parent=1 // pred_check
      _
    $region15: #{token_transformer_forward.3} parent=1 // pred_check_branch
      %21 = sbr.rel (0) target = $region17
    $region16: #{token_transformer_forward.3} parent=1 // pred_region
      %23 = vsyncadd [#allocation3], 0
      %s24 = sshll.u32 %s3, 4
      %s25 = int_to_ptr.hbm [resolvable:$true] %s24
      %s26 = sshll.u32 [#allocation2], 4
      %s27 = int_to_ptr.vmem [resolvable:$true] %s26
      %32 = dma.hbm_to_vmem [thread:$0]  %s25, 256, %s27, [#allocation3], 64, 64, 4
    $region17: #{token_transformer_forward.3} parent=1 // pred_fallthru
      _
    // Predicated region
    $region18: #{token_transformer_forward.3} parent=1 // pred_check
      _
    $region19: #{token_transformer_forward.3} parent=1 // pred_check_branch
      %34 = sbr.rel (0) target = $region21
    $region20: #{token_transformer_forward.3} parent=1 // pred_region
      _
    $region21: #{token_transformer_forward.3} parent=1 // pred_fallthru
      _
    // Predicated region
    $region22: #{token_transformer_forward.3} parent=1 // pred_check
      _
    $region23: #{token_transformer_forward.3} parent=1 // pred_check_branch
      %36 = sbr.rel (0) target = $region25
    $region24: #{token_transformer_forward.3} parent=1 // pred_region
      %38 = vsyncadd [#allocation5], 0
      %s39 = sshll.u32 %s5, 4
      %s40 = int_to_ptr.hbm [resolvable:$true] %s39
      %s41 = sshll.u32 [#allocation4], 4
      %s42 = int_to_ptr.vmem [resolvable:$true] %s41
      %47 = dma.hbm_to_vmem [thread:$0]  %s40, 256, %s42, [#allocation5], 64, 64, 4
    $region25: #{token_transformer_forward.3} parent=1 // pred_fallthru
      _
    // Predicated region
    $region26: #{token_transformer_forward.3} parent=1 // pred_check
      _
    $region27: #{token_transformer_forward.3} parent=1 // pred_check_branch
      %49 = sbr.rel (0) target = $region29
    $region28: #{token_transformer_forward.3} parent=1 // pred_region
      _
    $region29: #{token_transformer_forward.3} parent=1 // pred_fallthru
      _
    // Predicated region
    $region30: #{token_transformer_forward.3} parent=1 // pred_check
      _
    $region31: #{token_transformer_forward.3} parent=1 // pred_check_branch
      %51 = sbr.rel (0) target = $region33
    $region32: #{token_transformer_forward.3} parent=1 // pred_region
      %53 = dma.done [#allocation3], 256
    $region33: #{token_transformer_forward.3} parent=1 // pred_fallthru
      _
    // Predicated region
    $region34: #{token_transformer_forward.3} parent=1 // pred_check
      _
    $region35: #{token_transformer_forward.3} parent=1 // pred_check_branch
      %55 = sbr.rel (0) target = $region37
    $region36: #{token_transformer_forward.3} parent=1 // pred_region
      %57 = dma.done [#allocation5], 256
    $region37: #{token_transformer_forward.3} parent=1 // pred_fallthru
      _
    %v59 = vld [vmem:[%s0] sm:$0xff]
    %v60 = vld [vmem:[%s0 + $0x8] sm:$0xff]
    %v61 = vld [vmem:[%s1] sm:$0x1]
    %v62 = vld [vmem:[%s2] sm:$0x1]
    %vm63 = vcmask 261120
    %v64 = vsel %vm63, %v59, 0.0
    %65 = vadd.xlane.f32.xlu0 %v64
    %v66 = vpop.xlane.xlu0 %65
    %v67 = vsel %vm63, %v60, 0.0
    %68 = vadd.xlane.f32.xlu0 %v67
    %v69 = vpop.xlane.xlu0 %68
    %v70 = vrcp.pop 32.0
    %v71 = vmul.f32 32.0, %v70
    %v72 = vsub.f32 1.0, %v71
    %v73 = vmul.f32 %v70, %v72
    %v74 = vadd.f32 %v70, %v73
    %vm75 = vweird.f32 %v70
    %v76 = vsel %vm75, %v70, %v74
    %v77 = vmul.f32 %v66, %v76
    %v78 = vmul.f32 %v69, %v76
    %v79 = vsub.f32 %v59, %v77
    %v80 = vsub.f32 %v60, %v78
    %v81 = vmul.f32 %v79, %v79
    %v82 = vmul.f32 %v80, %v80
    %v83 = vsel %vm63, %v81, 0.0
    %84 = vadd.xlane.f32.xlu0 %v83
    %v85 = vpop.xlane.xlu0 %84
    %v86 = vsel %vm63, %v82, 0.0
    %87 = vadd.xlane.f32.xlu0 %v86
    %v88 = vpop.xlane.xlu0 %87
    %v89 = vmul.f32 %v85, %v76
    %v90 = vmul.f32 %v88, %v76
    %v91 = vadd.f32 %v89, 1e-05
    %v92 = vadd.f32 %v90, 1e-05
    %v93 = vrsqrt.pop %v91
    %v94 = vmul.f32 %v93, %v91
    %v95 = vmul.f32 %v94, %v93
    %v96 = vmul.f32 0.5, %v95
    %v97 = vsub.f32 1.5, %v96
    %v98 = vmul.f32 %v93, %v97
    %vm99 = vweird.f32 %v91
    %vm100 = vweird.f32 %v93
    %vm101 = vmor %vm99, %vm100
    %v102 = vsel %vm101, %v93, %v98
    %v103 = vrsqrt.pop %v92
    %v104 = vmul.f32 %v103, %v92
    %v105 = vmul.f32 %v104, %v103
    %v106 = vmul.f32 0.5, %v105
    %v107 = vsub.f32 1.5, %v106
    %v108 = vmul.f32 %v103, %v107
    %vm109 = vweird.f32 %v92
    %vm110 = vweird.f32 %v103
    %vm111 = vmor %vm109, %vm110
    %v112 = vsel %vm111, %v103, %v108
    %v113 = vmul.f32 %v79, %v102
    %v114 = vmul.f32 %v80, %v112
    %v116 = vperm.slane %v61, 0
    %v118 = vmul.f32 %v113, %v116
    %v119 = vmul.f32 %v114, %v116
    %v121 = vperm.slane %v62, 0
    %v123 = vadd.f32 %v118, %v121
    %v124 = vadd.f32 %v119, %v121
    %v125 = vpack.c.bf16 %v124, %v123
    %v126 = vld [vmem:[#allocation2] sm:$0xf]
    %v127 = vld [vmem:[#allocation2 + $0x4] sm:$0xf]
    %v128 = vld [vmem:[#allocation2 + $0x8] sm:$0xf]
    %v129 = vld [vmem:[#allocation2 + $0xc] sm:$0xf]
    %v130 = vld [vmem:[%s4] sm:$0x1]
    %v132 = vperm.slane %v130, 0
    %v138 = vunpack.c.l.b16 %v126
    %v139 = vunpack.c.l.b16 %v127
    %v140 = vunpack.c.l.b16 %v128
    %v141 = vunpack.c.l.b16 %v129
    %v142 = vpack.c.b16 %v139, %v138
    %v143 = vpack.c.b16 %v141, %v140
    %v147 = vsel %vm63, %v125, 0
    %149 = vmatpush.bf16.msra.mxu0 0
    %150 = vmatpush.bf16.msra.mxu0 0
    %151 = vmatpush.bf16.msra.mxu0 0
    %152 = vmatpush.bf16.msra.mxu0 0
    %153 = vmatpush.bf16.msra.mxu0 0
    %154 = vmatpush.bf16.msra.mxu0 0
    %155 = vmatpush.bf16.msra.mxu0 %v143
    %156 = vmatpush.bf16.msra.mxu0 %v142
    %157 = vmatmul.bf16.gmra.mxu0 %v147
    %v158 = vpop.f32.mrf.mxu0
    %v159 = vadd.f32 %v132, %v158
    %v160 = vpop.f32.mrf.mxu0
    %v161 = vadd.f32 %v132, %v160
    %162 = vdwg.mxu0
    %v163 = vmul.f32 %v159, %v159
    %v164 = vmul.f32 %v161, %v161
    %v165 = vmul.f32 %v159, %v163
    %v166 = vmul.f32 %v161, %v164
    %v167 = vmul.f32 %v165, 0.044715
    %v168 = vmul.f32 %v166, 0.044715
    %v169 = vadd.f32 %v159, %v167
    %v170 = vadd.f32 %v161, %v168
    %v171 = vmul.f32 %v169, 0.7978846
    %v172 = vmul.f32 %v170, 0.7978846
    %v173 = vtanh.pop %v171
    %v174 = vtanh.pop %v172
    %v175 = vadd.f32 %v173, 1.0
    %v176 = vadd.f32 %v174, 1.0
    %v177 = vmul.f32 %v175, 0.5
    %v178 = vmul.f32 %v176, 0.5
    %v179 = vmul.f32 %v159, %v177
    %v180 = vmul.f32 %v161, %v178
    %v181 = vpack.c.bf16 %v180, %v179
    %v182 = vld [vmem:[#allocation4] sm:$0xf]
    %v183 = vld [vmem:[#allocation4 + $0x4] sm:$0xf]
    %v184 = vld [vmem:[#allocation4 + $0x8] sm:$0xf]
    %v185 = vld [vmem:[#allocation4 + $0xc] sm:$0xf]
    %v186 = vld [vmem:[%s6] sm:$0x1]
    %v188 = vperm.slane %v186, 0
    %v194 = vunpack.c.l.b16 %v182
    %v195 = vunpack.c.l.b16 %v183
    %v196 = vunpack.c.l.b16 %v184
    %v197 = vunpack.c.l.b16 %v185
    %v198 = vpack.c.b16 %v195, %v194
    %v199 = vpack.c.b16 %v197, %v196
    %v203 = vsel %vm63, %v181, 0
    %205 = vmatpush.bf16.msra.mxu0 0
    %206 = vmatpush.bf16.msra.mxu0 0
    %207 = vmatpush.bf16.msra.mxu0 0
    %208 = vmatpush.bf16.msra.mxu0 0
    %209 = vmatpush.bf16.msra.mxu0 0
    %210 = vmatpush.bf16.msra.mxu0 0
    %211 = vmatpush.bf16.msra.mxu0 %v199
    %212 = vmatpush.bf16.msra.mxu0 %v198
    %213 = vmatmul.bf16.gmra.mxu0 %v203
    %v214 = vpop.f32.mrf.mxu0
    %v215 = vadd.f32 %v188, %v214
    %v216 = vpop.f32.mrf.mxu0
    %v217 = vadd.f32 %v188, %v216
    %218 = vdwg.mxu0
    %219 = vst.msk [vmem:[%s7] sm:$0xff] %vm63, %v215
    %220 = vst.msk [vmem:[%s7 + $0x8] sm:$0xff] %vm63, %v217
    // Predicated region
    $region38: #{token_transformer_forward.3} parent=1 // pred_check
      _
    $region39: #{token_transformer_forward.3} parent=1 // pred_check_branch
      %222 = sbr.rel (0) target = $region41
    $region40: #{token_transformer_forward.3} parent=1 // pred_region
      _
    $region41: #{token_transformer_forward.3} parent=1 // pred_fallthru
      _
    // Predicated region
    $region42: #{token_transformer_forward.3} parent=1 // pred_check
      _
    $region43: #{token_transformer_forward.3} parent=1 // pred_check_branch
      %224 = sbr.rel (0) target = $region45
    $region44: #{token_transformer_forward.3} parent=1 // pred_region
      _
    $region45: #{token_transformer_forward.3} parent=1 // pred_fallthru
      _
    %225 = vsyncpa [#allocation3], 1
    %226 = vsyncpa [#allocation5], 1

// kernel: token_transformer_forward.5
$region0: #{token_transformer_forward.5}
  #allocation0 [shape = 'u32[]', space=smem, size = 0x4, offset = 0x4, fixed_abs, tag = 'smem constant byte address 0x4 - core index']
  #allocation1 [shape = 'u32[72,128]{1,0:T(1,128)}', space=vmem, size = 0x9000, scoped, tag = 'internal scratch']
  %s0 = inlined_call_operand.vmem [shape: f32[2,10,32], index: 0, kind: input, shape index: {}]
  %s1 = inlined_call_operand.vmem [shape: f32[1,32], index: 1, kind: input, shape index: {}]
  %s2 = inlined_call_operand.vmem [shape: f32[1,32], index: 2, kind: input, shape index: {}]
  %s3 = inlined_call_operand.vmem [shape: bf16[32,32], index: 3, kind: input, shape index: {}]
  %s4 = inlined_call_operand.vmem [shape: bf16[32,64], index: 4, kind: input, shape index: {}]
  %s5 = inlined_call_operand.vmem [shape: bf16[32,32], index: 5, kind: input, shape index: {}]
  %s6 = inlined_call_operand.hbm [shape: f32[1,32], index: 6, kind: input, shape index: {}]
  %s7 = inlined_call_operand.hbm [shape: f32[1,32], index: 7, kind: input, shape index: {}]
  %s8 = inlined_call_operand.hbm [shape: f32[1,32], index: 8, kind: input, shape index: {}]
  %s9 = inlined_call_operand.vmem [shape: bf16[32,32], index: 9, kind: input, shape index: {}]
  %s10 = inlined_call_operand.vmem [shape: bf16[32,64], index: 10, kind: input, shape index: {}]
  %s11 = inlined_call_operand.vmem [shape: bf16[32,32], index: 11, kind: input, shape index: {}]
  %s12 = inlined_call_operand.hbm [shape: f32[1,32], index: 12, kind: input, shape index: {}]
  %s13 = inlined_call_operand.vmem [shape: f32[2,10,32], index: 13, kind: output, shape index: {0}]
  %s14 = inlined_call_operand.vmem [shape: f32[2,10,32], index: 14, kind: output, shape index: {1}]
  %15 = xla_tuple %s13, %s14
  %s16 = sld [smem:[#allocation0]]
  $region109: #{token_transformer_forward.5} parent=0
    _
  %s18 = ssub.s32 1, %s16
  %s19 = scalar_select 0, %s18, %s16
  $region1: #{token_transformer_forward.5} parent=0
    #allocation2 [shape = 'u8[512]{0}', space=vmem, size = 0x400, scoped, tag = 'input window, operand 6, single buffered']
    #allocation3 [shape = 's32[2]{0}', space=sflag, size = 0x8, scoped, tag = 'scoped memory for token_transformer_forward.5']
    #allocation4 [shape = 'u8[512]{0}', space=vmem, size = 0x400, scoped, tag = 'input window, operand 7, single buffered']
    #allocation5 [shape = 's32[1]{0}', space=sflag, size = 0x4, scoped, tag = 'scoped memory for token_transformer_forward.5']
    #allocation6 [shape = 'u8[512]{0}', space=vmem, size = 0x400, scoped, tag = 'input window, operand 8, single buffered']
    #allocation7 [shape = 'u8[512]{0}', space=vmem, size = 0x400, scoped, tag = 'input window, operand 12, single buffered']
    #allocation8 [shape = 's32[1]{0}', space=sflag, size = 0x4, scoped, tag = 'scoped memory for token_transformer_forward.5']
    %20 = vsyncpa [#allocation3], 0
    %21 = vsyncpa [#allocation5], 0
    %22 = vsyncpa [#allocation8], 0
    loop: start=0, step=1, limit=4
    $region2: #{token_transformer_forward.5} parent=1 // loop_pre_header
      _
    $region3: #{token_transformer_forward.5} parent=1 // loop_header
      %s24 = sphi 0, %s28
      %p25 = scmp.ge.s32.totalorder %s24, 4
      %s34 = sphi 0, %s36
      %s37 = sphi 0, %s34
      %s38 = sphi 0, %s37
      %s54 = sphi 0, %s38
      %s58 = sphi 0, %s58
      %s60 = sphi 0, %s58
      %s61 = sphi 0, %s60
      %s75 = sphi 0, %s61
      %s79 = sphi 0, %s79
      %s81 = sphi 0, %s79
      %s82 = sphi 0, %s81
      %s96 = sphi 0, %s82
      %s100 = sphi 0, %s100
      %s102 = sphi 0, %s100
      %s103 = sphi 0, %s102
      %s117 = sphi 0, %s103
      %s121 = sphi 0, %s121
      %s123 = sphi 0, %s121
      %s124 = sphi 0, %s123
      %s138 = sphi 0, %s124
      %s142 = sphi 0, %s142
      %s144 = sphi 0, %s142
      %s145 = sphi 0, %s144
      %s159 = sphi 0, %s145
      %s163 = sphi 0, %s163
      %s165 = sphi 0, %s163
      %s166 = sphi 0, %s165
      %s180 = sphi 0, %s166
      %s184 = sphi 0, %s184
      %s186 = sphi 0, %s184
      %s187 = sphi 0, %s186
      %s201 = sphi 0, %s187
      %s205 = sphi 0, %s205
      %s207 = sphi 0, %s205
      %s208 = sphi 0, %s207
      %s222 = sphi 0, %s208
      %s226 = sphi 0, %s226
      %s228 = sphi 0, %s226
      %s229 = sphi 0, %s228
      %s243 = sphi 0, %s229
      %s247 = sphi 0, %s247
      %s249 = sphi 0, %s247
      %s250 = sphi 0, %s249
      %s264 = sphi 0, %s250
      %s268 = sphi 0, %s268
      %s270 = sphi 0, %s268
      %s271 = sphi 0, %s270
      %s285 = sphi 0, %s271
      %s289 = sphi 0, %s289
      %s291 = sphi 0, %s289
      %s292 = sphi 0, %s291
      %s306 = sphi 0, %s292
      %s312 = sphi 0, %s314
      %s315 = sphi 0, %s312
      %s316 = sphi 0, %s315
      %s332 = sphi 0, %s316
      %s338 = sphi 0, %s340
      %s341 = sphi 0, %s338
      %s342 = sphi 0, %s341
      %s358 = sphi 0, %s342
    $region4: #{token_transformer_forward.5} parent=1 // loop_header_branch
      %27 = sbr.rel (%p25) target = $region8
    $region5: #{token_transformer_forward.5} parent=1 // loop_body
      %s29 = ssub.s32 %s24, 1
      %s30 = ssub.s32 %s24, 2
      %s31 = sadd.s32 %s24, 1
      %s32 = ssub.s32 %s24, %s31
      %p33 = scmp.eq.s32.totalorder %s32, 0
      %s35 = sadd.s32 %s34, 1
      %s36 = scalar_select %p33, %s34, %s35
      %p39 = pneg %p33
      %p40 = scmp.eq.s32.totalorder %s24, 1
      %p41 = por %p39, %p40
      %p42 = scmp.ne.s32.totalorder %s34, %s37
      %p43 = scmp.eq.s32.totalorder %s24, 0
      %p44 = por %p42, %p43
      %p45 = scmp.ne.s32.totalorder %s34, %s37
      %p46 = scmp.eq.s32.totalorder %s29, 1
      %p47 = por %p45, %p46
      %p48 = scmp.ne.s32.totalorder %s37, %s38
      %p49 = scmp.eq.s32.totalorder %s29, 0
      %p50 = por %p48, %p49
      %p51 = scmp.ne.s32.totalorder %s37, %s38
      %p52 = scmp.eq.s32.totalorder %s30, 1
      %p53 = por %p51, %p52
      %p55 = scmp.ne.s32.totalorder %s38, %s54
      %p56 = scmp.eq.s32.totalorder %s30, 0
      %p57 = por %p55, %p56
      %s59 = sadd.s32 %s58, 1
      %p62 = scmp.eq.s32.totalorder %s24, 1
      %p63 = scmp.ne.s32.totalorder %s58, %s60
      %p64 = scmp.eq.s32.totalorder %s24, 0
      %p65 = por %p63, %p64
      %p66 = scmp.ne.s32.totalorder %s58, %s60
      %p67 = scmp.eq.s32.totalorder %s29, 1
      %p68 = por %p66, %p67
      %p69 = scmp.ne.s32.totalorder %s60, %s61
      %p70 = scmp.eq.s32.totalorder %s29, 0
      %p71 = por %p69, %p70
      %p72 = scmp.ne.s32.totalorder %s60, %s61
      %p73 = scmp.eq.s32.totalorder %s30, 1
      %p74 = por %p72, %p73
      %p76 = scmp.ne.s32.totalorder %s61, %s75
      %p77 = scmp.eq.s32.totalorder %s30, 0
      %p78 = por %p76, %p77
      %s80 = sadd.s32 %s79, 1
      %p83 = scmp.eq.s32.totalorder %s24, 1
      %p84 = scmp.ne.s32.totalorder %s79, %s81
      %p85 = scmp.eq.s32.totalorder %s24, 0
      %p86 = por %p84, %p85
      %p87 = scmp.ne.s32.totalorder %s79, %s81
      %p88 = scmp.eq.s32.totalorder %s29, 1
      %p89 = por %p87, %p88
      %p90 = scmp.ne.s32.totalorder %s81, %s82
      %p91 = scmp.eq.s32.totalorder %s29, 0
      %p92 = por %p90, %p91
      %p93 = scmp.ne.s32.totalorder %s81, %s82
      %p94 = scmp.eq.s32.totalorder %s30, 1
      %p95 = por %p93, %p94
      %p97 = scmp.ne.s32.totalorder %s82, %s96
      %p98 = scmp.eq.s32.totalorder %s30, 0
      %p99 = por %p97, %p98
      %s101 = sadd.s32 %s100, 1
      %p104 = scmp.eq.s32.totalorder %s24, 1
      %p105 = scmp.ne.s32.totalorder %s100, %s102
      %p106 = scmp.eq.s32.totalorder %s24, 0
      %p107 = por %p105, %p106
      %p108 = scmp.ne.s32.totalorder %s100, %s102
      %p109 = scmp.eq.s32.totalorder %s29, 1
      %p110 = por %p108, %p109
      %p111 = scmp.ne.s32.totalorder %s102, %s103
      %p112 = scmp.eq.s32.totalorder %s29, 0
      %p113 = por %p111, %p112
      %p114 = scmp.ne.s32.totalorder %s102, %s103
      %p115 = scmp.eq.s32.totalorder %s30, 1
      %p116 = por %p114, %p115
      %p118 = scmp.ne.s32.totalorder %s103, %s117
      %p119 = scmp.eq.s32.totalorder %s30, 0
      %p120 = por %p118, %p119
      %s122 = sadd.s32 %s121, 1
      %p125 = scmp.eq.s32.totalorder %s24, 1
      %p126 = scmp.ne.s32.totalorder %s121, %s123
      %p127 = scmp.eq.s32.totalorder %s24, 0
      %p128 = por %p126, %p127
      %p129 = scmp.ne.s32.totalorder %s121, %s123
      %p130 = scmp.eq.s32.totalorder %s29, 1
      %p131 = por %p129, %p130
      %p132 = scmp.ne.s32.totalorder %s123, %s124
      %p133 = scmp.eq.s32.totalorder %s29, 0
      %p134 = por %p132, %p133
      %p135 = scmp.ne.s32.totalorder %s123, %s124
      %p136 = scmp.eq.s32.totalorder %s30, 1
      %p137 = por %p135, %p136
      %p139 = scmp.ne.s32.totalorder %s124, %s138
      %p140 = scmp.eq.s32.totalorder %s30, 0
      %p141 = por %p139, %p140
      %s143 = sadd.s32 %s142, 1
      %p146 = scmp.eq.s32.totalorder %s24, 1
      %p147 = scmp.ne.s32.totalorder %s142, %s144
      %p148 = scmp.eq.s32.totalorder %s24, 0
      %p149 = por %p147, %p148
      %p150 = scmp.ne.s32.totalorder %s142, %s144
      %p151 = scmp.eq.s32.totalorder %s29, 1
      %p152 = por %p150, %p151
      %p153 = scmp.ne.s32.totalorder %s144, %s145
      %p154 = scmp.eq.s32.totalorder %s29, 0
      %p155 = por %p153, %p154
      %p156 = scmp.ne.s32.totalorder %s144, %s145
      %p157 = scmp.eq.s32.totalorder %s30, 1
      %p158 = por %p156, %p157
      %p160 = scmp.ne.s32.totalorder %s145, %s159
      %p161 = scmp.eq.s32.totalorder %s30, 0
      %p162 = por %p160, %p161
      %s164 = sadd.s32 %s163, 1
      %p167 = scmp.eq.s32.totalorder %s24, 1
      %p168 = scmp.ne.s32.totalorder %s163, %s165
      %p169 = scmp.eq.s32.totalorder %s24, 0
      %p170 = por %p168, %p169
      %p171 = scmp.ne.s32.totalorder %s163, %s165
      %p172 = scmp.eq.s32.totalorder %s29, 1
      %p173 = por %p171, %p172
      %p174 = scmp.ne.s32.totalorder %s165, %s166
      %p175 = scmp.eq.s32.totalorder %s29, 0
      %p176 = por %p174, %p175
      %p177 = scmp.ne.s32.totalorder %s165, %s166
      %p178 = scmp.eq.s32.totalorder %s30, 1
      %p179 = por %p177, %p178
      %p181 = scmp.ne.s32.totalorder %s166, %s180
      %p182 = scmp.eq.s32.totalorder %s30, 0
      %p183 = por %p181, %p182
      %s185 = sadd.s32 %s184, 1
      %p188 = scmp.eq.s32.totalorder %s24, 1
      %p189 = scmp.ne.s32.totalorder %s184, %s186
      %p190 = scmp.eq.s32.totalorder %s24, 0
      %p191 = por %p189, %p190
      %p192 = scmp.ne.s32.totalorder %s184, %s186
      %p193 = scmp.eq.s32.totalorder %s29, 1
      %p194 = por %p192, %p193
      %p195 = scmp.ne.s32.totalorder %s186, %s187
      %p196 = scmp.eq.s32.totalorder %s29, 0
      %p197 = por %p195, %p196
      %p198 = scmp.ne.s32.totalorder %s186, %s187
      %p199 = scmp.eq.s32.totalorder %s30, 1
      %p200 = por %p198, %p199
      %p202 = scmp.ne.s32.totalorder %s187, %s201
      %p203 = scmp.eq.s32.totalorder %s30, 0
      %p204 = por %p202, %p203
      %s206 = sadd.s32 %s205, 1
      %p209 = scmp.eq.s32.totalorder %s24, 1
      %p210 = scmp.ne.s32.totalorder %s205, %s207
      %p211 = scmp.eq.s32.totalorder %s24, 0
      %p212 = por %p210, %p211
      %p213 = scmp.ne.s32.totalorder %s205, %s207
      %p214 = scmp.eq.s32.totalorder %s29, 1
      %p215 = por %p213, %p214
      %p216 = scmp.ne.s32.totalorder %s207, %s208
      %p217 = scmp.eq.s32.totalorder %s29, 0
      %p218 = por %p216, %p217
      %p219 = scmp.ne.s32.totalorder %s207, %s208
      %p220 = scmp.eq.s32.totalorder %s30, 1
      %p221 = por %p219, %p220
      %p223 = scmp.ne.s32.totalorder %s208, %s222
      %p224 = scmp.eq.s32.totalorder %s30, 0
      %p225 = por %p223, %p224
      %s227 = sadd.s32 %s226, 1
      %p230 = scmp.eq.s32.totalorder %s24, 1
      %p231 = scmp.ne.s32.totalorder %s226, %s228
      %p232 = scmp.eq.s32.totalorder %s24, 0
      %p233 = por %p231, %p232
      %p234 = scmp.ne.s32.totalorder %s226, %s228
      %p235 = scmp.eq.s32.totalorder %s29, 1
      %p236 = por %p234, %p235
      %p237 = scmp.ne.s32.totalorder %s228, %s229
      %p238 = scmp.eq.s32.totalorder %s29, 0
      %p239 = por %p237, %p238
      %p240 = scmp.ne.s32.totalorder %s228, %s229
      %p241 = scmp.eq.s32.totalorder %s30, 1
      %p242 = por %p240, %p241
      %p244 = scmp.ne.s32.totalorder %s229, %s243
      %p245 = scmp.eq.s32.totalorder %s30, 0
      %p246 = por %p244, %p245
      %s248 = sadd.s32 %s247, 1
      %p251 = scmp.eq.s32.totalorder %s24, 1
      %p252 = scmp.ne.s32.totalorder %s247, %s249
      %p253 = scmp.eq.s32.totalorder %s24, 0
      %p254 = por %p252, %p253
      %p255 = scmp.ne.s32.totalorder %s247, %s249
      %p256 = scmp.eq.s32.totalorder %s29, 1
      %p257 = por %p255, %p256
      %p258 = scmp.ne.s32.totalorder %s249, %s250
      %p259 = scmp.eq.s32.totalorder %s29, 0
      %p260 = por %p258, %p259
      %p261 = scmp.ne.s32.totalorder %s249, %s250
      %p262 = scmp.eq.s32.totalorder %s30, 1
      %p263 = por %p261, %p262
      %p265 = scmp.ne.s32.totalorder %s250, %s264
      %p266 = scmp.eq.s32.totalorder %s30, 0
      %p267 = por %p265, %p266
      %s269 = sadd.s32 %s268, 1
      %p272 = scmp.eq.s32.totalorder %s24, 1
      %p273 = scmp.ne.s32.totalorder %s268, %s270
      %p274 = scmp.eq.s32.totalorder %s24, 0
      %p275 = por %p273, %p274
      %p276 = scmp.ne.s32.totalorder %s268, %s270
      %p277 = scmp.eq.s32.totalorder %s29, 1
      %p278 = por %p276, %p277
      %p279 = scmp.ne.s32.totalorder %s270, %s271
      %p280 = scmp.eq.s32.totalorder %s29, 0
      %p281 = por %p279, %p280
      %p282 = scmp.ne.s32.totalorder %s270, %s271
      %p283 = scmp.eq.s32.totalorder %s30, 1
      %p284 = por %p282, %p283
      %p286 = scmp.ne.s32.totalorder %s271, %s285
      %p287 = scmp.eq.s32.totalorder %s30, 0
      %p288 = por %p286, %p287
      %s290 = sadd.s32 %s289, 1
      %p293 = scmp.eq.s32.totalorder %s24, 1
      %p294 = scmp.ne.s32.totalorder %s289, %s291
      %p295 = scmp.eq.s32.totalorder %s24, 0
      %p296 = por %p294, %p295
      %p297 = scmp.ne.s32.totalorder %s289, %s291
      %p298 = scmp.eq.s32.totalorder %s29, 1
      %p299 = por %p297, %p298
      %p300 = scmp.ne.s32.totalorder %s291, %s292
      %p301 = scmp.eq.s32.totalorder %s29, 0
      %p302 = por %p300, %p301
      %p303 = scmp.ne.s32.totalorder %s291, %s292
      %p304 = scmp.eq.s32.totalorder %s30, 1
      %p305 = por %p303, %p304
      %p307 = scmp.ne.s32.totalorder %s292, %s306
      %p308 = scmp.eq.s32.totalorder %s30, 0
      %p309 = por %p307, %p308
      %s310 = ssub.s32 %s24, %s31
      %p311 = scmp.eq.s32.totalorder %s310, 0
      %s313 = sadd.s32 %s312, 1
      %s314 = scalar_select %p311, %s312, %s313
      %p317 = pneg %p311
      %p318 = scmp.eq.s32.totalorder %s24, 1
      %p319 = por %p317, %p318
      %p320 = scmp.ne.s32.totalorder %s312, %s315
      %p321 = scmp.eq.s32.totalorder %s24, 0
      %p322 = por %p320, %p321
      %p323 = scmp.ne.s32.totalorder %s312, %s315
      %p324 = scmp.eq.s32.totalorder %s29, 1
      %p325 = por %p323, %p324
      %p326 = scmp.ne.s32.totalorder %s315, %s316
      %p327 = scmp.eq.s32.totalorder %s29, 0
      %p328 = por %p326, %p327
      %p329 = scmp.ne.s32.totalorder %s315, %s316
      %p330 = scmp.eq.s32.totalorder %s30, 1
      %p331 = por %p329, %p330
      %p333 = scmp.ne.s32.totalorder %s316, %s332
      %p334 = scmp.eq.s32.totalorder %s30, 0
      %p335 = por %p333, %p334
      %s336 = ssub.s32 %s24, %s31
      %p337 = scmp.eq.s32.totalorder %s336, 0
      %s339 = sadd.s32 %s338, 1
      %s340 = scalar_select %p337, %s338, %s339
      %p343 = pneg %p337
      %p344 = scmp.eq.s32.totalorder %s24, 1
      %p345 = por %p343, %p344
      %p346 = scmp.ne.s32.totalorder %s338, %s341
      %p347 = scmp.eq.s32.totalorder %s24, 0
      %p348 = por %p346, %p347
      %p349 = scmp.ne.s32.totalorder %s338, %s341
      %p350 = scmp.eq.s32.totalorder %s29, 1
      %p351 = por %p349, %p350
      %p352 = scmp.ne.s32.totalorder %s341, %s342
      %p353 = scmp.eq.s32.totalorder %s29, 0
      %p354 = por %p352, %p353
      %p355 = scmp.ne.s32.totalorder %s341, %s342
      %p356 = scmp.eq.s32.totalorder %s30, 1
      %p357 = por %p355, %p356
      %p359 = scmp.ne.s32.totalorder %s342, %s358
      %p360 = scmp.eq.s32.totalorder %s30, 0
      %p361 = por %p359, %p360
      %p362 = scmp.le.s32.totalorder 1, %s24
      %p363 = scmp.lt.s32.totalorder %s24, 3
      %p364 = pnand %p362, %p363
      %p365 = pneg %p364
      // Predicated region
      $region9: #{token_transformer_forward.5} parent=5 // pred_check
        _
      $region10: #{token_transformer_forward.5} parent=5 // pred_check_branch
        %367 = sbr.rel (%p364) target = $region12
      $region11: #{token_transformer_forward.5} parent=5 // pred_region
        %s368 = ssub.s32 %s24, 1
        // Predicated region
        $region13: #{token_transformer_forward.5} parent=11 // pred_check
          %p369 = pneg %p71
        $region14: #{token_transformer_forward.5} parent=11 // pred_check_branch
          %371 = sbr.rel (%p369) target = $region16
        $region15: #{token_transformer_forward.5} parent=11 // pred_region
          _
        $region16: #{token_transformer_forward.5} parent=11 // pred_fallthru
          _
        // Predicated region
        $region17: #{token_transformer_forward.5} parent=11 // pred_check
          %p372 = pneg %p92
        $region18: #{token_transformer_forward.5} parent=11 // pred_check_branch
          %374 = sbr.rel (%p372) target = $region20
        $region19: #{token_transformer_forward.5} parent=11 // pred_region
          _
        $region20: #{token_transformer_forward.5} parent=11 // pred_fallthru
          _
        // Predicated region
        $region21: #{token_transformer_forward.5} parent=11 // pred_check
          %p375 = pneg %p113
        $region22: #{token_transformer_forward.5} parent=11 // pred_check_branch
          %377 = sbr.rel (%p375) target = $region24
        $region23: #{token_transformer_forward.5} parent=11 // pred_region
          _
        $region24: #{token_transformer_forward.5} parent=11 // pred_fallthru
          _
        // Predicated region
        $region25: #{token_transformer_forward.5} parent=11 // pred_check
          %p378 = pneg %p134
        $region26: #{token_transformer_forward.5} parent=11 // pred_check_branch
          %380 = sbr.rel (%p378) target = $region28
        $region27: #{token_transformer_forward.5} parent=11 // pred_region
          _
        $region28: #{token_transformer_forward.5} parent=11 // pred_fallthru
          _
        // Predicated region
        $region29: #{token_transformer_forward.5} parent=11 // pred_check
          %p381 = pneg %p155
        $region30: #{token_transformer_forward.5} parent=11 // pred_check_branch
          %383 = sbr.rel (%p381) target = $region32
        $region31: #{token_transformer_forward.5} parent=11 // pred_region
          _
        $region32: #{token_transformer_forward.5} parent=11 // pred_fallthru
          _
        // Predicated region
        $region33: #{token_transformer_forward.5} parent=11 // pred_check
          %p384 = pneg %p176
        $region34: #{token_transformer_forward.5} parent=11 // pred_check_branch
          %386 = sbr.rel (%p384) target = $region36
        $region35: #{token_transformer_forward.5} parent=11 // pred_region
          %388 = vsyncadd [#allocation3], 0
          %s390 = sshll.u32 %s6, 4
          %s391 = int_to_ptr.hbm [resolvable:$true] %s390
          %s392 = sshll.u32 [#allocation2], 4
          %s393 = int_to_ptr.vmem [resolvable:$true] %s392
          %395 = dma.hbm_to_vmem [thread:$0]  %s391, 16, %s393, [#allocation3]
        $region36: #{token_transformer_forward.5} parent=11 // pred_fallthru
          _
        // Predicated region
        $region37: #{token_transformer_forward.5} parent=11 // pred_check
          %p396 = pneg %p197
        $region38: #{token_transformer_forward.5} parent=11 // pred_check_branch
          %398 = sbr.rel (%p396) target = $region40
        $region39: #{token_transformer_forward.5} parent=11 // pred_region
          %400 = vsyncadd [#allocation5], 0
          %s402 = sshll.u32 %s7, 4
          %s403 = int_to_ptr.hbm [resolvable:$true] %s402
          %s404 = sshll.u32 [#allocation4], 4
          %s405 = int_to_ptr.vmem [resolvable:$true] %s404
          %407 = dma.hbm_to_vmem [thread:$0]  %s403, 16, %s405, [#allocation5]
        $region40: #{token_transformer_forward.5} parent=11 // pred_fallthru
          _
        // Predicated region
        $region41: #{token_transformer_forward.5} parent=11 // pred_check
          %p408 = pneg %p218
        $region42: #{token_transformer_forward.5} parent=11 // pred_check_branch
          %410 = sbr.rel (%p408) target = $region44
        $region43: #{token_transformer_forward.5} parent=11 // pred_region
          %412 = vsyncadd [#allocation5], 0
          %s414 = sshll.u32 %s8, 4
          %s415 = int_to_ptr.hbm [resolvable:$true] %s414
          %s416 = sshll.u32 [#allocation6], 4
          %s417 = int_to_ptr.vmem [resolvable:$true] %s416
          %419 = dma.hbm_to_vmem [thread:$0]  %s415, 16, %s417, [#allocation5]
        $region44: #{token_transformer_forward.5} parent=11 // pred_fallthru
          _
        // Predicated region
        $region45: #{token_transformer_forward.5} parent=11 // pred_check
          %p420 = pneg %p239
        $region46: #{token_transformer_forward.5} parent=11 // pred_check_branch
          %422 = sbr.rel (%p420) target = $region48
        $region47: #{token_transformer_forward.5} parent=11 // pred_region
          _
        $region48: #{token_transformer_forward.5} parent=11 // pred_fallthru
          _
        // Predicated region
        $region49: #{token_transformer_forward.5} parent=11 // pred_check
          %p423 = pneg %p260
        $region50: #{token_transformer_forward.5} parent=11 // pred_check_branch
          %425 = sbr.rel (%p423) target = $region52
        $region51: #{token_transformer_forward.5} parent=11 // pred_region
          _
        $region52: #{token_transformer_forward.5} parent=11 // pred_fallthru
          _
        // Predicated region
        $region53: #{token_transformer_forward.5} parent=11 // pred_check
          %p426 = pneg %p281
        $region54: #{token_transformer_forward.5} parent=11 // pred_check_branch
          %428 = sbr.rel (%p426) target = $region56
        $region55: #{token_transformer_forward.5} parent=11 // pred_region
          _
        $region56: #{token_transformer_forward.5} parent=11 // pred_fallthru
          _
        // Predicated region
        $region57: #{token_transformer_forward.5} parent=11 // pred_check
          %p429 = pneg %p302
        $region58: #{token_transformer_forward.5} parent=11 // pred_check_branch
          %431 = sbr.rel (%p429) target = $region60
        $region59: #{token_transformer_forward.5} parent=11 // pred_region
          %433 = vsyncadd [#allocation8], 0
          %s435 = sshll.u32 %s12, 4
          %s436 = int_to_ptr.hbm [resolvable:$true] %s435
          %s437 = sshll.u32 [#allocation7], 4
          %s438 = int_to_ptr.vmem [resolvable:$true] %s437
          %440 = dma.hbm_to_vmem [thread:$0]  %s436, 16, %s438, [#allocation8]
        $region60: #{token_transformer_forward.5} parent=11 // pred_fallthru
          _
      $region12: #{token_transformer_forward.5} parent=5 // pred_fallthru
        _
      %p441 = scmp.lt.s32.totalorder %s24, 2
      // Predicated region
      $region61: #{token_transformer_forward.5} parent=5 // pred_check
        %p442 = pneg %p441
      $region62: #{token_transformer_forward.5} parent=5 // pred_check_branch
        %444 = sbr.rel (%p442) target = $region64
      $region63: #{token_transformer_forward.5} parent=5 // pred_region
        // Predicated region
        $region65: #{token_transformer_forward.5} parent=63 // pred_check
          %p445 = pneg %p44
        $region66: #{token_transformer_forward.5} parent=63 // pred_check_branch
          %447 = sbr.rel (%p445) target = $region68
        $region67: #{token_transformer_forward.5} parent=63 // pred_region
          %p448 = scmp.lt.s32.totalorder %s24, 1
          %s449 = scalar_select %p448, %s24, 1
          %s450 = smul.addr %s449, 2
          %s451 = smul.addr %s450, 8
          %s452 = scalar_lea.vmem %s0, %s451
        $region68: #{token_transformer_forward.5} parent=63 // pred_fallthru
          _
      $region64: #{token_transformer_forward.5} parent=5 // pred_fallthru
        _
      %p453 = scmp.le.s32.totalorder 1, %s24
      %p454 = scmp.lt.s32.totalorder %s24, 3
      %p455 = pnand %p453, %p454
      %p456 = pneg %p455
      // Predicated region
      $region69: #{token_transformer_forward.5} parent=5 // pred_check
        _
      $region70: #{token_transformer_forward.5} parent=5 // pred_check_branch
        %458 = sbr.rel (%p455) target = $region72
      $region71: #{token_transformer_forward.5} parent=5 // pred_region
        %s459 = ssub.s32 %s24, 1
        // Predicated region
        $region73: #{token_transformer_forward.5} parent=71 // pred_check
          %p460 = pneg %p176
        $region74: #{token_transformer_forward.5} parent=71 // pred_check_branch
          %462 = sbr.rel (%p460) target = $region76
        $region75: #{token_transformer_forward.5} parent=71 // pred_region
          %464 = dma.done [#allocation3], 16
        $region76: #{token_transformer_forward.5} parent=71 // pred_fallthru
          _
        // Predicated region
        $region77: #{token_transformer_forward.5} parent=71 // pred_check
          %p465 = pneg %p197
        $region78: #{token_transformer_forward.5} parent=71 // pred_check_branch
          %467 = sbr.rel (%p465) target = $region80
        $region79: #{token_transformer_forward.5} parent=71 // pred_region
          %469 = dma.done [#allocation5], 16
        $region80: #{token_transformer_forward.5} parent=71 // pred_fallthru
          _
        // Predicated region
        $region81: #{token_transformer_forward.5} parent=71 // pred_check
          %p470 = pneg %p218
        $region82: #{token_transformer_forward.5} parent=71 // pred_check_branch
          %472 = sbr.rel (%p470) target = $region84
        $region83: #{token_transformer_forward.5} parent=71 // pred_region
          %474 = dma.done [#allocation5], 16
        $region84: #{token_transformer_forward.5} parent=71 // pred_fallthru
          _
        // Predicated region
        $region85: #{token_transformer_forward.5} parent=71 // pred_check
          %p475 = pneg %p302
        $region86: #{token_transformer_forward.5} parent=71 // pred_check_branch
          %477 = sbr.rel (%p475) target = $region88
        $region87: #{token_transformer_forward.5} parent=71 // pred_region
          %479 = dma.done [#allocation8], 16
        $region88: #{token_transformer_forward.5} parent=71 // pred_fallthru
          _
        %p480 = scmp.lt.s32.totalorder %s29, 1
        %s481 = scalar_select %p480, %s29, 1
        %s482 = smul.addr %s481, 2
        %s483 = smul.addr %s482, 8
        %s484 = scalar_lea.vmem %s0, %s483
        %p485 = pneg %p50
        %p486 = pneg %p47
        %p487 = pneg %p71
        %p488 = pneg %p68
        %p489 = pneg %p92
        %p490 = pneg %p89
        %p491 = pneg %p113
        %p492 = pneg %p110
        %p493 = pneg %p134
        %p494 = pneg %p131
        %p495 = pneg %p155
        %p496 = pneg %p152
        %p497 = pneg %p176
        %p498 = pneg %p173
        %p499 = pneg %p197
        %p500 = pneg %p194
        %p501 = pneg %p218
        %p502 = pneg %p215
        %p503 = pneg %p239
        %p504 = pneg %p236
        %p505 = pneg %p260
        %p506 = pneg %p257
        %p507 = pneg %p281
        %p508 = pneg %p278
        %p509 = pneg %p302
        %p510 = pneg %p299
        %p511 = pneg %p328
        %p512 = pneg %p325
        %p513 = scmp.lt.s32.totalorder %s29, 1
        %s514 = scalar_select %p513, %s29, 1
        %s515 = smul.addr %s514, 2
        %s516 = smul.addr %s515, 8
        %s517 = scalar_lea.vmem %s13, %s516
        %p518 = pneg %p354
        %p519 = pneg %p351
        %p520 = scmp.lt.s32.totalorder %s29, 1
        %s521 = scalar_select %p520, %s29, 1
        %s522 = smul.addr %s521, 2
        %s523 = smul.addr %s522, 8
        %s524 = scalar_lea.vmem %s14, %s523
        %p525 = scmp.lt.s32.totalorder %s29, 1
        %s526 = scalar_select %p525, %s29, 1
        %s527 = smul.addr %s526, 2
        %s528 = smul.addr %s527, 8
        %s529 = scalar_lea.vmem %s0, %s528
        %p530 = scmp.lt.s32.totalorder %s29, 1
        %s531 = scalar_select %p530, %s29, 1
        %s532 = smul.addr %s531, 2
        %s533 = smul.addr %s532, 8
        %s534 = scalar_lea.vmem %s13, %s533
        %p535 = scmp.lt.s32.totalorder %s29, 1
        %s536 = scalar_select %p535, %s29, 1
        %s537 = smul.addr %s536, 2
        %s538 = smul.addr %s537, 8
        %s539 = scalar_lea.vmem %s14, %s538
        %v541 = vld [vmem:[%s529] sm:$0xff]
        %v542 = vld [vmem:[%s529 + $0x8] sm:$0x3]
        %vm543 = vcmask 261120
        %v544 = vsel %vm543, %v541, 0.0
        %545 = vadd.xlane.f32.xlu0 %v544
        %v546 = vpop.xlane.xlu0 %545
        %vm547 = vcmask 254976
        %v548 = vsel %vm547, %v542, 0.0
        %549 = vadd.xlane.f32.xlu0 %v548
        %v550 = vpop.xlane.xlu0 %549
        %v551 = vrcp.pop 32.0
        %v552 = vmul.f32 32.0, %v551
        %v553 = vsub.f32 1.0, %v552
        %v554 = vmul.f32 %v551, %v553
        %v555 = vadd.f32 %v551, %v554
        %vm556 = vweird.f32 %v551
        %v557 = vsel %vm556, %v551, %v555
        %v558 = vmul.f32 %v546, %v557
        %v559 = vmul.f32 %v550, %v557
        %v560 = vsub.f32 %v541, %v558
        %v561 = vsub.f32 %v542, %v559
        %v562 = vmul.f32 %v560, %v560
        %v563 = vmul.f32 %v561, %v561
        %v564 = vsel %vm543, %v562, 0.0
        %565 = vadd.xlane.f32.xlu0 %v564
        %v566 = vpop.xlane.xlu0 %565
        %v567 = vsel %vm547, %v563, 0.0
        %568 = vadd.xlane.f32.xlu0 %v567
        %v569 = vpop.xlane.xlu0 %568
        %v570 = vmul.f32 %v566, %v557
        %v571 = vmul.f32 %v569, %v557
        %v572 = vadd.f32 %v570, 1e-05
        %v573 = vadd.f32 %v571, 1e-05
        %v574 = vrsqrt.pop %v572
        %v575 = vmul.f32 %v574, %v572
        %v576 = vmul.f32 %v575, %v574
        %v577 = vmul.f32 0.5, %v576
        %v578 = vsub.f32 1.5, %v577
        %v579 = vmul.f32 %v574, %v578
        %vm580 = vweird.f32 %v572
        %vm581 = vweird.f32 %v574
        %vm582 = vmor %vm580, %vm581
        %v583 = vsel %vm582, %v574, %v579
        %v584 = vrsqrt.pop %v573
        %v585 = vmul.f32 %v584, %v573
        %v586 = vmul.f32 %v585, %v584
        %v587 = vmul.f32 0.5, %v586
        %v588 = vsub.f32 1.5, %v587
        %v589 = vmul.f32 %v584, %v588
        %vm590 = vweird.f32 %v573
        %vm591 = vweird.f32 %v584
        %vm592 = vmor %vm590, %vm591
        %v593 = vsel %vm592, %v584, %v589
        %v594 = vmul.f32 %v560, %v583
        %v595 = vmul.f32 %v561, %v593
        %v596 = vld [vmem:[%s1] sm:$0x1]
        %v598 = vperm.slane %v596, 0
        %v600 = vmul.f32 %v594, %v598
        %v601 = vmul.f32 %v595, %v598
        %v602 = vld [vmem:[%s2] sm:$0x1]
        %v604 = vperm.slane %v602, 0
        %v606 = vadd.f32 %v600, %v604
        %v607 = vadd.f32 %v601, %v604
        %v608 = vpack.c.bf16 %v606, %v606
        %v609 = vpack.c.bf16 %v607, %v606
        %v610 = vld [vmem:[%s3] sm:$0xf]
        %v611 = vld [vmem:[%s3 + $0x4] sm:$0xf]
        %v612 = vld [vmem:[%s3 + $0x8] sm:$0xf]
        %v613 = vld [vmem:[%s3 + $0xc] sm:$0xf]
        %v618 = vunpack.c.l.b16 %v610
        %v619 = vunpack.c.l.b16 %v611
        %v620 = vunpack.c.l.b16 %v612
        %v621 = vunpack.c.l.b16 %v613
        %v622 = vpack.c.b16 %v619, %v618
        %v623 = vpack.c.b16 %v621, %v620
        %v627 = vsel %vm543, %v609, 0
        %629 = vmatpush.bf16.msra.mxu0 0
        %630 = vmatpush.bf16.msra.mxu0 0
        %631 = vmatpush.bf16.msra.mxu0 0
        %632 = vmatpush.bf16.msra.mxu0 0
        %633 = vmatpush.bf16.msra.mxu0 0
        %634 = vmatpush.bf16.msra.mxu0 0
        %635 = vmatpush.bf16.msra.mxu0 %v623
        %636 = vmatpush.bf16.msra.mxu0 %v622
        %637 = vmatmul.bf16.gmra.mxu0 %v627
        %v638 = vpop.f32.mrf.mxu0
        %v639 = vadd.f32 0.0, %v638
        %v640 = vpop.f32.mrf.mxu0
        %v641 = vadd.f32 0.0, %v640
        %642 = vdwg.mxu0
        %v643 = vld [vmem:[%s4] sm:$0xf]
        %v644 = vld [vmem:[%s4 + $0x4] sm:$0xf]
        %v645 = vld [vmem:[%s4 + $0x8] sm:$0xf]
        %v646 = vld [vmem:[%s4 + $0xc] sm:$0xf]
        %v651 = vunpack.c.l.b16 %v643
        %v652 = vunpack.c.l.b16 %v644
        %v653 = vunpack.c.l.b16 %v645
        %v654 = vunpack.c.l.b16 %v646
        %v655 = vpack.c.b16 %v652, %v651
        %v656 = vpack.c.b16 %v654, %v653
        %v660 = vsel %vm543, %v608, 0
        %662 = vmatpush.bf16.msra.mxu0 0
        %663 = vmatpush.bf16.msra.mxu0 0
        %664 = vmatpush.bf16.msra.mxu0 0
        %665 = vmatpush.bf16.msra.mxu0 0
        %666 = vmatpush.bf16.msra.mxu0 0
        %667 = vmatpush.bf16.msra.mxu0 0
        %668 = vmatpush.bf16.msra.mxu0 %v656
        %669 = vmatpush.bf16.msra.mxu0 %v655
        %670 = vmatmul.bf16.gmra.mxu0 %v660
        %v671 = vpop.f32.mrf.mxu0
        %v672 = vadd.f32 0.0, %v671
        %v673 = vpop.f32.mrf.mxu0
        %674 = vdwg.mxu0
        %v675 = vperm.slane %v672, 0
        %v676 = vmul.f32 %v639, %v675
        %v677 = vmul.f32 %v641, %v675
        %v678 = vsel %vm543, %v676, 0.0
        %679 = vadd.xlane.f32.xlu0 %v678
        %v680 = vpop.xlane.xlu0 %679
        %v681 = vsel %vm547, %v677, 0.0
        %682 = vadd.xlane.f32.xlu0 %v681
        %v683 = vpop.xlane.xlu0 %682
        %v684 = vxor.u32 %v680, 2147483648
        %v685 = vxor.u32 %v683, 2147483648
        %v686 = vmul.f32 %v684, 1.442695
        %v687 = vpow.pop %v686
        %v688 = vmul.f32 %v685, 1.442695
        %v689 = vpow.pop %v688
        %v690 = vadd.f32 %v687, 1.0
        %v691 = vadd.f32 %v689, 1.0
        %v692 = vrcp.pop %v690
        %v693 = vmul.f32 %v690, %v692
        %v694 = vsub.f32 1.0, %v693
        %v695 = vmul.f32 %v692, %v694
        %v696 = vadd.f32 %v692, %v695
        %vm697 = vweird.f32 %v690
        %vm698 = vweird.f32 %v692
        %vm699 = vmor %vm697, %vm698
        %v700 = vsel %vm699, %v692, %v696
        %v701 = vand.u32 2147483647, %v690
        %vm702 = vcmp.eq.f32.partialorder %v701, 8.507059e+37
        %v703 = vand.u32 %v690, 2147483648
        %v704 = vor.u32 1.1754944e-38, %v703
        %v705 = vsel %vm702, %v704, %v700
        %v706 = vmul.f32 1.0, %v705
        %v707 = vrcp.pop %v691
        %v708 = vmul.f32 %v691, %v707
        %v709 = vsub.f32 1.0, %v708
        %v710 = vmul.f32 %v707, %v709
        %v711 = vadd.f32 %v707, %v710
        %vm712 = vweird.f32 %v691
        %vm713 = vweird.f32 %v707
        %vm714 = vmor %vm712, %vm713
        %v715 = vsel %vm714, %v707, %v711
        %v716 = vand.u32 2147483647, %v691
        %vm717 = vcmp.eq.f32.partialorder %v716, 8.507059e+37
        %v718 = vand.u32 %v691, 2147483648
        %v719 = vor.u32 1.1754944e-38, %v718
        %v720 = vsel %vm717, %v719, %v715
        %v721 = vmul.f32 1.0, %v720
        %v722 = vmul.f32 %v706, %v675
        %v723 = vmul.f32 %v721, %v675
        %v724 = vpack.c.bf16 %v723, %v722
        %v725 = vld [vmem:[%s5] sm:$0xf]
        %v726 = vld [vmem:[%s5 + $0x4] sm:$0xf]
        %v727 = vld [vmem:[%s5 + $0x8] sm:$0xf]
        %v728 = vld [vmem:[%s5 + $0xc] sm:$0xf]
        %v729 = vld [vmem:[#allocation2] sm:$0x1]
        %v731 = vperm.slane %v729, 0
        %734 = vrot.lane.b32.xlu0 %v724, 96
        %v735 = vpop.permute.xlu0 %734
        %v740 = vunpack.c.l.b16 %v725
        %v741 = vunpack.c.l.b16 %v726
        %v742 = vunpack.c.l.b16 %v727
        %v743 = vunpack.c.l.b16 %v728
        %v744 = vpack.c.b16 %v741, %v740
        %v745 = vpack.c.b16 %v743, %v742
        %v749 = vsel %vm543, %v735, 0
        %751 = vmatpush.bf16.msra.mxu0 0
        %752 = vmatpush.bf16.msra.mxu0 0
        %753 = vmatpush.bf16.msra.mxu0 0
        %754 = vmatpush.bf16.msra.mxu0 0
        %755 = vmatpush.bf16.msra.mxu0 0
        %756 = vmatpush.bf16.msra.mxu0 0
        %757 = vmatpush.bf16.msra.mxu0 %v745
        %758 = vmatpush.bf16.msra.mxu0 %v744
        %759 = vmatmul.bf16.gmra.mxu0 %v749
        %v760 = vpop.f32.mrf.mxu0
        %v761 = vadd.f32 %v731, %v760
        %v762 = vpop.f32.mrf.mxu0
        %v763 = vadd.f32 %v731, %v762
        %764 = vdwg.mxu0
        %v765 = vadd.f32 %v761, %v541
        %v766 = vadd.f32 %v763, %v542
        %767 = vst.msk [vmem:[%s534] sm:$0xff] %vm543, %v765
        %768 = vst.msk [vmem:[%s534 + $0x8] sm:$0x3] %vm547, %v766
        %v769 = vld [vmem:[#allocation4] sm:$0x1]
        %v771 = vperm.slane %v769, 0
        %v773 = vmul.f32 %v594, %v771
        %v774 = vmul.f32 %v595, %v771
        %v775 = vld [vmem:[#allocation6] sm:$0x1]
        %v777 = vperm.slane %v775, 0
        %v779 = vadd.f32 %v773, %v777
        %v780 = vadd.f32 %v774, %v777
        %v781 = vpack.c.bf16 %v780, %v780
        %v782 = vpack.c.bf16 %v780, %v779
        %v783 = vld [vmem:[%s9] sm:$0xf]
        %v784 = vld [vmem:[%s9 + $0x4] sm:$0xf]
        %v785 = vld [vmem:[%s9 + $0x8] sm:$0xf]
        %v786 = vld [vmem:[%s9 + $0xc] sm:$0xf]
        %v791 = vunpack.c.l.b16 %v783
        %v792 = vunpack.c.l.b16 %v784
        %v793 = vunpack.c.l.b16 %v785
        %v794 = vunpack.c.l.b16 %v786
        %v795 = vpack.c.b16 %v792, %v791
        %v796 = vpack.c.b16 %v794, %v793
        %v800 = vsel %vm543, %v782, 0
        %802 = vmatpush.bf16.msra.mxu0 0
        %803 = vmatpush.bf16.msra.mxu0 0
        %804 = vmatpush.bf16.msra.mxu0 0
        %805 = vmatpush.bf16.msra.mxu0 0
        %806 = vmatpush.bf16.msra.mxu0 0
        %807 = vmatpush.bf16.msra.mxu0 0
        %808 = vmatpush.bf16.msra.mxu0 %v796
        %809 = vmatpush.bf16.msra.mxu0 %v795
        %810 = vmatmul.bf16.gmra.mxu0 %v800
        %v811 = vpop.f32.mrf.mxu0
        %v812 = vadd.f32 0.0, %v811
        %v813 = vpop.f32.mrf.mxu0
        %v814 = vadd.f32 0.0, %v813
        %815 = vdwg.mxu0
        %v816 = vld [vmem:[%s10] sm:$0xf]
        %v817 = vld [vmem:[%s10 + $0x4] sm:$0xf]
        %v818 = vld [vmem:[%s10 + $0x8] sm:$0xf]
        %v819 = vld [vmem:[%s10 + $0xc] sm:$0xf]
        %v821 = vshrl.u32 %v781, 16
        %v827 = vunpack.c.l.b16 %v816
        %v828 = vunpack.c.l.b16 %v817
        %v829 = vunpack.c.l.b16 %v818
        %v830 = vunpack.c.l.b16 %v819
        %v831 = vpack.c.b16 %v828, %v827
        %v832 = vpack.c.b16 %v830, %v829
        %v836 = vsel %vm543, %v821, 0
        %838 = vmatpush.bf16.msra.mxu0 0
        %839 = vmatpush.bf16.msra.mxu0 0
        %840 = vmatpush.bf16.msra.mxu0 0
        %841 = vmatpush.bf16.msra.mxu0 0
        %842 = vmatpush.bf16.msra.mxu0 0
        %843 = vmatpush.bf16.msra.mxu0 0
        %844 = vmatpush.bf16.msra.mxu0 %v832
        %845 = vmatpush.bf16.msra.mxu0 %v831
        %846 = vmatmul.bf16.gmra.mxu0 %v836
        %v847 = vpop.f32.mrf.mxu0
        %v848 = vadd.f32 0.0, %v847
        %v849 = vpop.f32.mrf.mxu0
        %850 = vdwg.mxu0
        %v851 = vperm.slane %v848, 0
        %v852 = vmul.f32 %v812, %v851
        %v853 = vmul.f32 %v814, %v851
        %v854 = vsel %vm543, %v852, 0.0
        %855 = vadd.xlane.f32.xlu0 %v854
        %v856 = vpop.xlane.xlu0 %855
        %v857 = vsel %vm547, %v853, 0.0
        %858 = vadd.xlane.f32.xlu0 %v857
        %v859 = vpop.xlane.xlu0 %858
        %v860 = vxor.u32 %v856, 2147483648
        %v861 = vxor.u32 %v859, 2147483648
        %v862 = vmul.f32 %v860, 1.442695
        %v863 = vpow.pop %v862
        %v864 = vmul.f32 %v861, 1.442695
        %v865 = vpow.pop %v864
        %v866 = vadd.f32 %v863, 1.0
        %v867 = vadd.f32 %v865, 1.0
        %v868 = vrcp.pop %v866
        %v869 = vmul.f32 %v866, %v868
        %v870 = vsub.f32 1.0, %v869
        %v871 = vmul.f32 %v868, %v870
        %v872 = vadd.f32 %v868, %v871
        %vm873 = vweird.f32 %v866
        %vm874 = vweird.f32 %v868
        %vm875 = vmor %vm873, %vm874
        %v876 = vsel %vm875, %v868, %v872
        %v877 = vand.u32 2147483647, %v866
        %vm878 = vcmp.eq.f32.partialorder %v877, 8.507059e+37
        %v879 = vand.u32 %v866, 2147483648
        %v880 = vor.u32 1.1754944e-38, %v879
        %v881 = vsel %vm878, %v880, %v876
        %v882 = vmul.f32 1.0, %v881
        %v883 = vrcp.pop %v867
        %v884 = vmul.f32 %v867, %v883
        %v885 = vsub.f32 1.0, %v884
        %v886 = vmul.f32 %v883, %v885
        %v887 = vadd.f32 %v883, %v886
        %vm888 = vweird.f32 %v867
        %vm889 = vweird.f32 %v883
        %vm890 = vmor %vm888, %vm889
        %v891 = vsel %vm890, %v883, %v887
        %v892 = vand.u32 2147483647, %v867
        %vm893 = vcmp.eq.f32.partialorder %v892, 8.507059e+37
        %v894 = vand.u32 %v867, 2147483648
        %v895 = vor.u32 1.1754944e-38, %v894
        %v896 = vsel %vm893, %v895, %v891
        %v897 = vmul.f32 1.0, %v896
        %v898 = vmul.f32 %v882, %v851
        %v899 = vmul.f32 %v897, %v851
        %v900 = vpack.c.bf16 %v899, %v898
        %v901 = vld [vmem:[%s11] sm:$0xf]
        %v902 = vld [vmem:[%s11 + $0x4] sm:$0xf]
        %v903 = vld [vmem:[%s11 + $0x8] sm:$0xf]
        %v904 = vld [vmem:[%s11 + $0xc] sm:$0xf]
        %v905 = vld [vmem:[#allocation7] sm:$0x1]
        %v907 = vperm.slane %v905, 0
        %910 = vrot.lane.b32.xlu0 %v900, 96
        %v911 = vpop.permute.xlu0 %910
        %v916 = vunpack.c.l.b16 %v901
        %v917 = vunpack.c.l.b16 %v902
        %v918 = vunpack.c.l.b16 %v903
        %v919 = vunpack.c.l.b16 %v904
        %v920 = vpack.c.b16 %v917, %v916
        %v921 = vpack.c.b16 %v919, %v918
        %v925 = vsel %vm543, %v911, 0
        %927 = vmatpush.bf16.msra.mxu0 0
        %928 = vmatpush.bf16.msra.mxu0 0
        %929 = vmatpush.bf16.msra.mxu0 0
        %930 = vmatpush.bf16.msra.mxu0 0
        %931 = vmatpush.bf16.msra.mxu0 0
        %932 = vmatpush.bf16.msra.mxu0 0
        %933 = vmatpush.bf16.msra.mxu0 %v921
        %934 = vmatpush.bf16.msra.mxu0 %v920
        %935 = vmatmul.bf16.gmra.mxu0 %v925
        %v936 = vpop.f32.mrf.mxu0
        %v937 = vadd.f32 %v907, %v936
        %v938 = vpop.f32.mrf.mxu0
        %v939 = vadd.f32 %v907, %v938
        %940 = vdwg.mxu0
        %v941 = vadd.f32 %v937, %v541
        %v942 = vadd.f32 %v939, %v542
        %943 = vst.msk [vmem:[%s539] sm:$0xff] %vm543, %v941
        %944 = vst.msk [vmem:[%s539 + $0x8] sm:$0x3] %vm547, %v942
        %p945 = scmp.lt.s32.totalorder %s29, 1
        %s946 = scalar_select %p945, %s29, 1
        %s947 = smul.addr %s946, 2
        %s948 = smul.addr %s947, 8
        %s949 = scalar_lea.vmem %s13, %s948
        %p950 = scmp.lt.s32.totalorder %s29, 1
        %s951 = scalar_select %p950, %s29, 1
        %s952 = smul.addr %s951, 2
        %s953 = smul.addr %s952, 8
        %s954 = scalar_lea.vmem %s14, %s953
        // Predicated region
        $region89: #{token_transformer_forward.5} parent=71 // pred_check
          %p955 = pneg %p325
        $region90: #{token_transformer_forward.5} parent=71 // pred_check_branch
          %957 = sbr.rel (%p955) target = $region92
        $region91: #{token_transformer_forward.5} parent=71 // pred_region
          _
        $region92: #{token_transformer_forward.5} parent=71 // pred_fallthru
          _
        // Predicated region
        $region93: #{token_transformer_forward.5} parent=71 // pred_check
          %p958 = pneg %p351
        $region94: #{token_transformer_forward.5} parent=71 // pred_check_branch
          %960 = sbr.rel (%p958) target = $region96
        $region95: #{token_transformer_forward.5} parent=71 // pred_region
          _
        $region96: #{token_transformer_forward.5} parent=71 // pred_fallthru
          _
      $region72: #{token_transformer_forward.5} parent=5 // pred_fallthru
        _
      %p961 = scmp.le.s32.totalorder 2, %s24
      // Predicated region
      $region97: #{token_transformer_forward.5} parent=5 // pred_check
        %p962 = pneg %p961
      $region98: #{token_transformer_forward.5} parent=5 // pred_check_branch
        %964 = sbr.rel (%p962) target = $region100
      $region99: #{token_transformer_forward.5} parent=5 // pred_region
        %s965 = ssub.s32 %s24, 2
        // Predicated region
        $region101: #{token_transformer_forward.5} parent=99 // pred_check
          %p966 = pneg %p331
        $region102: #{token_transformer_forward.5} parent=99 // pred_check_branch
          %968 = sbr.rel (%p966) target = $region104
        $region103: #{token_transformer_forward.5} parent=99 // pred_region
          %p969 = scmp.lt.s32.totalorder %s30, 1
          %s970 = scalar_select %p969, %s30, 1
          %s971 = smul.addr %s970, 2
          %s972 = smul.addr %s971, 8
          %s973 = scalar_lea.vmem %s13, %s972
        $region104: #{token_transformer_forward.5} parent=99 // pred_fallthru
          _
        // Predicated region
        $region105: #{token_transformer_forward.5} parent=99 // pred_check
          %p974 = pneg %p357
        $region106: #{token_transformer_forward.5} parent=99 // pred_check_branch
          %976 = sbr.rel (%p974) target = $region108
        $region107: #{token_transformer_forward.5} parent=99 // pred_region
          %p977 = scmp.lt.s32.totalorder %s30, 1
          %s978 = scalar_select %p977, %s30, 1
          %s979 = smul.addr %s978, 2
          %s980 = smul.addr %s979, 8
          %s981 = scalar_lea.vmem %s14, %s980
        $region108: #{token_transformer_forward.5} parent=99 // pred_fallthru
          _
      $region100: #{token_transformer_forward.5} parent=5 // pred_fallthru
        _
    $region6: #{token_transformer_forward.5} parent=1 // loop_footer
      %s28 = sadd.s32 1, %s24
    $region7: #{token_transformer_forward.5} parent=1 // loop_footer_branch
      %23 = sbr.rel target = $region3
    $region8: #{token_transformer_forward.5} parent=1 // loop_exit
      _
    %982 = vsyncpa [#allocation3], 1
    %s983 = scalar_lea.sflag [#allocation3], 1
    %984 = vsyncpa %s983, 1
    %985 = vsyncpa [#allocation5], 1
    %986 = vsyncpa [#allocation8], 1

// kernel: token_transformer_forward.4
$region0: #{token_transformer_forward.4}
  #allocation0 [shape = 'u32[]', space=smem, size = 0x4, offset = 0x4, fixed_abs, tag = 'smem constant byte address 0x4 - core index']
  #allocation1 [shape = 'u32[72,128]{1,0:T(1,128)}', space=vmem, size = 0x9000, scoped, tag = 'internal scratch']
  #allocation2 [shape = 'f32[1,10,32]{2,1,0:T(8,128)}', space=vmem, size = 0x2000, scoped, tag = 'scratch operand']
  #allocation3 [shape = 'bf16[1,10,32]{2,1,0:T(8,128)(2,1)}', space=vmem, size = 0x1000, scoped, tag = 'scratch operand']
  %s0 = inlined_call_operand.vmem [shape: f32[2,8,32], index: 0, kind: input, shape index: {}]
  %s1 = inlined_call_operand.vmem [shape: f32[1,32], index: 1, kind: input, shape index: {}]
  %s2 = inlined_call_operand.vmem [shape: f32[1,32], index: 2, kind: input, shape index: {}]
  %s3 = inlined_call_operand.vmem [shape: f32[2,1,32], index: 3, kind: input, shape index: {}]
  %s4 = inlined_call_operand.vmem [shape: f32[2,1,32], index: 4, kind: input, shape index: {}]
  %s5 = inlined_call_operand.vmem [shape: bf16[2,32,96], index: 5, kind: input, shape index: {}]
  %s6 = inlined_call_operand.vmem [shape: bf16[2,32,32], index: 6, kind: input, shape index: {}]
  %s7 = inlined_call_operand.hbm [shape: f32[2,1,32], index: 7, kind: input, shape index: {}]
  %s8 = inlined_call_operand.vmem [shape: f32[2,1,32], index: 8, kind: input, shape index: {}]
  %s9 = inlined_call_operand.hbm [shape: f32[2,1,32], index: 9, kind: input, shape index: {}]
  %s10 = inlined_call_operand.vmem [shape: bf16[2,32,96], index: 10, kind: input, shape index: {}]
  %s11 = inlined_call_operand.hbm [shape: f32[2,1,96], index: 11, kind: input, shape index: {}]
  %s12 = inlined_call_operand.vmem [shape: bf16[2,96,32], index: 12, kind: input, shape index: {}]
  %s13 = inlined_call_operand.hbm [shape: f32[2,1,32], index: 13, kind: input, shape index: {}]
  %s14 = inlined_call_operand.vmem [shape: f32[1,32], index: 14, kind: input, shape index: {}]
  %s15 = inlined_call_operand.vmem [shape: f32[1,32], index: 15, kind: input, shape index: {}]
  %s16 = inlined_call_operand.vmem [shape: f32[2,10,32], index: 16, kind: output, shape index: {}]
  %s17 = sld [smem:[#allocation0]]
  $region121: #{token_transformer_forward.4} parent=0
    _
  %s19 = ssub.s32 1, %s17
  %s20 = scalar_select 0, %s19, %s17
  $region1: #{token_transformer_forward.4} parent=0
    #allocation4 [shape = 'u8[1024]{0}', space=vmem, size = 0x400, scoped, tag = 'input window, operand 7']
    #allocation5 [shape = 's32[2]{0}', space=sflag, size = 0x8, scoped, tag = 'scoped memory for token_transformer_forward.4']
    #allocation6 [shape = 'u8[1024]{0}', space=vmem, size = 0x400, scoped, tag = 'input window, operand 9']
    #allocation7 [shape = 's32[2]{0}', space=sflag, size = 0x8, scoped, tag = 'scoped memory for token_transformer_forward.4']
    #allocation8 [shape = 'u8[1024]{0}', space=vmem, size = 0x400, scoped, tag = 'input window, operand 11']
    #allocation9 [shape = 'u8[1024]{0}', space=vmem, size = 0x400, scoped, tag = 'input window, operand 13']
    #allocation10 [shape = 's32[2]{0}', space=sflag, size = 0x8, scoped, tag = 'scoped memory for token_transformer_forward.4']
    %21 = vsyncpa [#allocation5], 0
    %s22 = scalar_lea.sflag [#allocation5], 1
    %23 = vsyncpa %s22, 0
    %24 = vsyncpa [#allocation7], 0
    %s25 = scalar_lea.sflag [#allocation7], 1
    %26 = vsyncpa %s25, 0
    %27 = vsyncpa [#allocation10], 0
    %s28 = scalar_lea.sflag [#allocation10], 1
    %29 = vsyncpa %s28, 0
    loop: start=0, step=1, limit=6
    $region2: #{token_transformer_forward.4} parent=1 // loop_pre_header
      _
    $region3: #{token_transformer_forward.4} parent=1 // loop_header
      %s31 = sphi 0, %s35
      %p32 = scmp.ge.s32.totalorder %s31, 6
      %s38 = sphi 0, %s50
      %s39 = sphi 0, %s46
      %s40 = sphi 0, %s38
      %s41 = sphi 0, %s39
      %s42 = sphi 0, %s40
      %s43 = sphi 0, %s41
      %s53 = sphi 0, %s55
      %s56 = sphi 0, %s53
      %s57 = sphi 0, %s56
      %s73 = sphi 0, %s57
      %s77 = sphi 0, %s77
      %s79 = sphi 0, %s77
      %s80 = sphi 0, %s79
      %s94 = sphi 0, %s80
      %s98 = sphi 0, %s98
      %s100 = sphi 0, %s98
      %s101 = sphi 0, %s100
      %s115 = sphi 0, %s101
      %s121 = sphi 0, %s123
      %s124 = sphi 0, %s121
      %s125 = sphi 0, %s124
      %s141 = sphi 0, %s125
      %s147 = sphi 0, %s149
      %s150 = sphi 0, %s147
      %s151 = sphi 0, %s150
      %s167 = sphi 0, %s151
      %s173 = sphi 0, %s175
      %s176 = sphi 0, %s173
      %s177 = sphi 0, %s176
      %s193 = sphi 0, %s177
      %s199 = sphi 0, %s201
      %s202 = sphi 0, %s199
      %s203 = sphi 0, %s202
      %s219 = sphi 0, %s203
      %s225 = sphi 0, %s227
      %s228 = sphi 0, %s225
      %s229 = sphi 0, %s228
      %s245 = sphi 0, %s229
      %s251 = sphi 0, %s253
      %s254 = sphi 0, %s251
      %s255 = sphi 0, %s254
      %s271 = sphi 0, %s255
      %s277 = sphi 0, %s279
      %s280 = sphi 0, %s277
      %s281 = sphi 0, %s280
      %s297 = sphi 0, %s281
      %s303 = sphi 0, %s305
      %s306 = sphi 0, %s303
      %s307 = sphi 0, %s306
      %s323 = sphi 0, %s307
      %s329 = sphi 0, %s331
      %s332 = sphi 0, %s329
      %s333 = sphi 0, %s332
      %s349 = sphi 0, %s333
      %s355 = sphi 0, %s357
      %s358 = sphi 0, %s355
      %s359 = sphi 0, %s358
      %s375 = sphi 0, %s359
      %s381 = sphi 0, %s383
      %s384 = sphi 0, %s381
      %s385 = sphi 0, %s384
      %s401 = sphi 0, %s385
      %s405 = sphi 0, %s405
      %s407 = sphi 0, %s405
      %s408 = sphi 0, %s407
      %s422 = sphi 0, %s408
      %s426 = sphi 0, %s426
      %s428 = sphi 0, %s426
      %s429 = sphi 0, %s428
      %s443 = sphi 0, %s429
      %s449 = sphi 0, %s451
      %s452 = sphi 0, %s449
      %s453 = sphi 0, %s452
      %s469 = sphi 0, %s453
    $region4: #{token_transformer_forward.4} parent=1 // loop_header_branch
      %34 = sbr.rel (%p32) target = $region8
    $region5: #{token_transformer_forward.4} parent=1 // loop_body
      %s36 = ssub.s32 %s31, 1
      %s37 = ssub.s32 %s31, 2
      %s44 = sadd.s32 1, %s39
      %p45 = scmp.ge.s32.totalorder %s44, 2
      %s46 = scalar_select %p45, 0, %s44
      %s47 = sadd.s32 1, %s38
      %s48 = scalar_select %p45, %s47, %s38
      %p49 = scmp.ge.s32.totalorder %s48, 2
      %s50 = scalar_select %p49, 0, %s48
      %s51 = ssub.s32 %s38, %s50
      %p52 = scmp.eq.s32.totalorder %s51, 0
      %s54 = sadd.s32 %s53, 1
      %s55 = scalar_select %p52, %s53, %s54
      %p58 = pneg %p52
      %p59 = scmp.eq.s32.totalorder %s31, 3
      %p60 = por %p58, %p59
      %p61 = scmp.ne.s32.totalorder %s53, %s56
      %p62 = scmp.eq.s32.totalorder %s31, 0
      %p63 = por %p61, %p62
      %p64 = scmp.ne.s32.totalorder %s53, %s56
      %p65 = scmp.eq.s32.totalorder %s36, 3
      %p66 = por %p64, %p65
      %p67 = scmp.ne.s32.totalorder %s56, %s57
      %p68 = scmp.eq.s32.totalorder %s36, 0
      %p69 = por %p67, %p68
      %p70 = scmp.ne.s32.totalorder %s56, %s57
      %p71 = scmp.eq.s32.totalorder %s37, 3
      %p72 = por %p70, %p71
      %p74 = scmp.ne.s32.totalorder %s57, %s73
      %p75 = scmp.eq.s32.totalorder %s37, 0
      %p76 = por %p74, %p75
      %s78 = sadd.s32 %s77, 1
      %p81 = scmp.eq.s32.totalorder %s31, 3
      %p82 = scmp.ne.s32.totalorder %s77, %s79
      %p83 = scmp.eq.s32.totalorder %s31, 0
      %p84 = por %p82, %p83
      %p85 = scmp.ne.s32.totalorder %s77, %s79
      %p86 = scmp.eq.s32.totalorder %s36, 3
      %p87 = por %p85, %p86
      %p88 = scmp.ne.s32.totalorder %s79, %s80
      %p89 = scmp.eq.s32.totalorder %s36, 0
      %p90 = por %p88, %p89
      %p91 = scmp.ne.s32.totalorder %s79, %s80
      %p92 = scmp.eq.s32.totalorder %s37, 3
      %p93 = por %p91, %p92
      %p95 = scmp.ne.s32.totalorder %s80, %s94
      %p96 = scmp.eq.s32.totalorder %s37, 0
      %p97 = por %p95, %p96
      %s99 = sadd.s32 %s98, 1
      %p102 = scmp.eq.s32.totalorder %s31, 3
      %p103 = scmp.ne.s32.totalorder %s98, %s100
      %p104 = scmp.eq.s32.totalorder %s31, 0
      %p105 = por %p103, %p104
      %p106 = scmp.ne.s32.totalorder %s98, %s100
      %p107 = scmp.eq.s32.totalorder %s36, 3
      %p108 = por %p106, %p107
      %p109 = scmp.ne.s32.totalorder %s100, %s101
      %p110 = scmp.eq.s32.totalorder %s36, 0
      %p111 = por %p109, %p110
      %p112 = scmp.ne.s32.totalorder %s100, %s101
      %p113 = scmp.eq.s32.totalorder %s37, 3
      %p114 = por %p112, %p113
      %p116 = scmp.ne.s32.totalorder %s101, %s115
      %p117 = scmp.eq.s32.totalorder %s37, 0
      %p118 = por %p116, %p117
      %s119 = ssub.s32 %s39, %s46
      %p120 = scmp.eq.s32.totalorder %s119, 0
      %s122 = sadd.s32 %s121, 1
      %s123 = scalar_select %p120, %s121, %s122
      %p126 = pneg %p120
      %p127 = scmp.eq.s32.totalorder %s31, 3
      %p128 = por %p126, %p127
      %p129 = scmp.ne.s32.totalorder %s121, %s124
      %p130 = scmp.eq.s32.totalorder %s31, 0
      %p131 = por %p129, %p130
      %p132 = scmp.ne.s32.totalorder %s121, %s124
      %p133 = scmp.eq.s32.totalorder %s36, 3
      %p134 = por %p132, %p133
      %p135 = scmp.ne.s32.totalorder %s124, %s125
      %p136 = scmp.eq.s32.totalorder %s36, 0
      %p137 = por %p135, %p136
      %p138 = scmp.ne.s32.totalorder %s124, %s125
      %p139 = scmp.eq.s32.totalorder %s37, 3
      %p140 = por %p138, %p139
      %p142 = scmp.ne.s32.totalorder %s125, %s141
      %p143 = scmp.eq.s32.totalorder %s37, 0
      %p144 = por %p142, %p143
      %s145 = ssub.s32 %s39, %s46
      %p146 = scmp.eq.s32.totalorder %s145, 0
      %s148 = sadd.s32 %s147, 1
      %s149 = scalar_select %p146, %s147, %s148
      %p152 = pneg %p146
      %p153 = scmp.eq.s32.totalorder %s31, 3
      %p154 = por %p152, %p153
      %p155 = scmp.ne.s32.totalorder %s147, %s150
      %p156 = scmp.eq.s32.totalorder %s31, 0
      %p157 = por %p155, %p156
      %p158 = scmp.ne.s32.totalorder %s147, %s150
      %p159 = scmp.eq.s32.totalorder %s36, 3
      %p160 = por %p158, %p159
      %p161 = scmp.ne.s32.totalorder %s150, %s151
      %p162 = scmp.eq.s32.totalorder %s36, 0
      %p163 = por %p161, %p162
      %p164 = scmp.ne.s32.totalorder %s150, %s151
      %p165 = scmp.eq.s32.totalorder %s37, 3
      %p166 = por %p164, %p165
      %p168 = scmp.ne.s32.totalorder %s151, %s167
      %p169 = scmp.eq.s32.totalorder %s37, 0
      %p170 = por %p168, %p169
      %s171 = ssub.s32 %s39, %s46
      %p172 = scmp.eq.s32.totalorder %s171, 0
      %s174 = sadd.s32 %s173, 1
      %s175 = scalar_select %p172, %s173, %s174
      %p178 = pneg %p172
      %p179 = scmp.eq.s32.totalorder %s31, 3
      %p180 = por %p178, %p179
      %p181 = scmp.ne.s32.totalorder %s173, %s176
      %p182 = scmp.eq.s32.totalorder %s31, 0
      %p183 = por %p181, %p182
      %p184 = scmp.ne.s32.totalorder %s173, %s176
      %p185 = scmp.eq.s32.totalorder %s36, 3
      %p186 = por %p184, %p185
      %p187 = scmp.ne.s32.totalorder %s176, %s177
      %p188 = scmp.eq.s32.totalorder %s36, 0
      %p189 = por %p187, %p188
      %p190 = scmp.ne.s32.totalorder %s176, %s177
      %p191 = scmp.eq.s32.totalorder %s37, 3
      %p192 = por %p190, %p191
      %p194 = scmp.ne.s32.totalorder %s177, %s193
      %p195 = scmp.eq.s32.totalorder %s37, 0
      %p196 = por %p194, %p195
      %s197 = ssub.s32 %s39, %s46
      %p198 = scmp.eq.s32.totalorder %s197, 0
      %s200 = sadd.s32 %s199, 1
      %s201 = scalar_select %p198, %s199, %s200
      %p204 = pneg %p198
      %p205 = scmp.eq.s32.totalorder %s31, 3
      %p206 = por %p204, %p205
      %p207 = scmp.ne.s32.totalorder %s199, %s202
      %p208 = scmp.eq.s32.totalorder %s31, 0
      %p209 = por %p207, %p208
      %p210 = scmp.ne.s32.totalorder %s199, %s202
      %p211 = scmp.eq.s32.totalorder %s36, 3
      %p212 = por %p210, %p211
      %p213 = scmp.ne.s32.totalorder %s202, %s203
      %p214 = scmp.eq.s32.totalorder %s36, 0
      %p215 = por %p213, %p214
      %p216 = scmp.ne.s32.totalorder %s202, %s203
      %p217 = scmp.eq.s32.totalorder %s37, 3
      %p218 = por %p216, %p217
      %p220 = scmp.ne.s32.totalorder %s203, %s219
      %p221 = scmp.eq.s32.totalorder %s37, 0
      %p222 = por %p220, %p221
      %s223 = ssub.s32 %s39, %s46
      %p224 = scmp.eq.s32.totalorder %s223, 0
      %s226 = sadd.s32 %s225, 1
      %s227 = scalar_select %p224, %s225, %s226
      %p230 = pneg %p224
      %p231 = scmp.eq.s32.totalorder %s31, 3
      %p232 = por %p230, %p231
      %p233 = scmp.ne.s32.totalorder %s225, %s228
      %p234 = scmp.eq.s32.totalorder %s31, 0
      %p235 = por %p233, %p234
      %p236 = scmp.ne.s32.totalorder %s225, %s228
      %p237 = scmp.eq.s32.totalorder %s36, 3
      %p238 = por %p236, %p237
      %p239 = scmp.ne.s32.totalorder %s228, %s229
      %p240 = scmp.eq.s32.totalorder %s36, 0
      %p241 = por %p239, %p240
      %p242 = scmp.ne.s32.totalorder %s228, %s229
      %p243 = scmp.eq.s32.totalorder %s37, 3
      %p244 = por %p242, %p243
      %p246 = scmp.ne.s32.totalorder %s229, %s245
      %p247 = scmp.eq.s32.totalorder %s37, 0
      %p248 = por %p246, %p247
      %s249 = ssub.s32 %s39, %s46
      %p250 = scmp.eq.s32.totalorder %s249, 0
      %s252 = sadd.s32 %s251, 1
      %s253 = scalar_select %p250, %s251, %s252
      %p256 = pneg %p250
      %p257 = scmp.eq.s32.totalorder %s31, 3
      %p258 = por %p256, %p257
      %p259 = scmp.ne.s32.totalorder %s251, %s254
      %p260 = scmp.eq.s32.totalorder %s31, 0
      %p261 = por %p259, %p260
      %p262 = scmp.ne.s32.totalorder %s251, %s254
      %p263 = scmp.eq.s32.totalorder %s36, 3
      %p264 = por %p262, %p263
      %p265 = scmp.ne.s32.totalorder %s254, %s255
      %p266 = scmp.eq.s32.totalorder %s36, 0
      %p267 = por %p265, %p266
      %p268 = scmp.ne.s32.totalorder %s254, %s255
      %p269 = scmp.eq.s32.totalorder %s37, 3
      %p270 = por %p268, %p269
      %p272 = scmp.ne.s32.totalorder %s255, %s271
      %p273 = scmp.eq.s32.totalorder %s37, 0
      %p274 = por %p272, %p273
      %s275 = ssub.s32 %s39, %s46
      %p276 = scmp.eq.s32.totalorder %s275, 0
      %s278 = sadd.s32 %s277, 1
      %s279 = scalar_select %p276, %s277, %s278
      %p282 = pneg %p276
      %p283 = scmp.eq.s32.totalorder %s31, 3
      %p284 = por %p282, %p283
      %p285 = scmp.ne.s32.totalorder %s277, %s280
      %p286 = scmp.eq.s32.totalorder %s31, 0
      %p287 = por %p285, %p286
      %p288 = scmp.ne.s32.totalorder %s277, %s280
      %p289 = scmp.eq.s32.totalorder %s36, 3
      %p290 = por %p288, %p289
      %p291 = scmp.ne.s32.totalorder %s280, %s281
      %p292 = scmp.eq.s32.totalorder %s36, 0
      %p293 = por %p291, %p292
      %p294 = scmp.ne.s32.totalorder %s280, %s281
      %p295 = scmp.eq.s32.totalorder %s37, 3
      %p296 = por %p294, %p295
      %p298 = scmp.ne.s32.totalorder %s281, %s297
      %p299 = scmp.eq.s32.totalorder %s37, 0
      %p300 = por %p298, %p299
      %s301 = ssub.s32 %s39, %s46
      %p302 = scmp.eq.s32.totalorder %s301, 0
      %s304 = sadd.s32 %s303, 1
      %s305 = scalar_select %p302, %s303, %s304
      %p308 = pneg %p302
      %p309 = scmp.eq.s32.totalorder %s31, 3
      %p310 = por %p308, %p309
      %p311 = scmp.ne.s32.totalorder %s303, %s306
      %p312 = scmp.eq.s32.totalorder %s31, 0
      %p313 = por %p311, %p312
      %p314 = scmp.ne.s32.totalorder %s303, %s306
      %p315 = scmp.eq.s32.totalorder %s36, 3
      %p316 = por %p314, %p315
      %p317 = scmp.ne.s32.totalorder %s306, %s307
      %p318 = scmp.eq.s32.totalorder %s36, 0
      %p319 = por %p317, %p318
      %p320 = scmp.ne.s32.totalorder %s306, %s307
      %p321 = scmp.eq.s32.totalorder %s37, 3
      %p322 = por %p320, %p321
      %p324 = scmp.ne.s32.totalorder %s307, %s323
      %p325 = scmp.eq.s32.totalorder %s37, 0
      %p326 = por %p324, %p325
      %s327 = ssub.s32 %s39, %s46
      %p328 = scmp.eq.s32.totalorder %s327, 0
      %s330 = sadd.s32 %s329, 1
      %s331 = scalar_select %p328, %s329, %s330
      %p334 = pneg %p328
      %p335 = scmp.eq.s32.totalorder %s31, 3
      %p336 = por %p334, %p335
      %p337 = scmp.ne.s32.totalorder %s329, %s332
      %p338 = scmp.eq.s32.totalorder %s31, 0
      %p339 = por %p337, %p338
      %p340 = scmp.ne.s32.totalorder %s329, %s332
      %p341 = scmp.eq.s32.totalorder %s36, 3
      %p342 = por %p340, %p341
      %p343 = scmp.ne.s32.totalorder %s332, %s333
      %p344 = scmp.eq.s32.totalorder %s36, 0
      %p345 = por %p343, %p344
      %p346 = scmp.ne.s32.totalorder %s332, %s333
      %p347 = scmp.eq.s32.totalorder %s37, 3
      %p348 = por %p346, %p347
      %p350 = scmp.ne.s32.totalorder %s333, %s349
      %p351 = scmp.eq.s32.totalorder %s37, 0
      %p352 = por %p350, %p351
      %s353 = ssub.s32 %s39, %s46
      %p354 = scmp.eq.s32.totalorder %s353, 0
      %s356 = sadd.s32 %s355, 1
      %s357 = scalar_select %p354, %s355, %s356
      %p360 = pneg %p354
      %p361 = scmp.eq.s32.totalorder %s31, 3
      %p362 = por %p360, %p361
      %p363 = scmp.ne.s32.totalorder %s355, %s358
      %p364 = scmp.eq.s32.totalorder %s31, 0
      %p365 = por %p363, %p364
      %p366 = scmp.ne.s32.totalorder %s355, %s358
      %p367 = scmp.eq.s32.totalorder %s36, 3
      %p368 = por %p366, %p367
      %p369 = scmp.ne.s32.totalorder %s358, %s359
      %p370 = scmp.eq.s32.totalorder %s36, 0
      %p371 = por %p369, %p370
      %p372 = scmp.ne.s32.totalorder %s358, %s359
      %p373 = scmp.eq.s32.totalorder %s37, 3
      %p374 = por %p372, %p373
      %p376 = scmp.ne.s32.totalorder %s359, %s375
      %p377 = scmp.eq.s32.totalorder %s37, 0
      %p378 = por %p376, %p377
      %s379 = ssub.s32 %s39, %s46
      %p380 = scmp.eq.s32.totalorder %s379, 0
      %s382 = sadd.s32 %s381, 1
      %s383 = scalar_select %p380, %s381, %s382
      %p386 = pneg %p380
      %p387 = scmp.eq.s32.totalorder %s31, 3
      %p388 = por %p386, %p387
      %p389 = scmp.ne.s32.totalorder %s381, %s384
      %p390 = scmp.eq.s32.totalorder %s31, 0
      %p391 = por %p389, %p390
      %p392 = scmp.ne.s32.totalorder %s381, %s384
      %p393 = scmp.eq.s32.totalorder %s36, 3
      %p394 = por %p392, %p393
      %p395 = scmp.ne.s32.totalorder %s384, %s385
      %p396 = scmp.eq.s32.totalorder %s36, 0
      %p397 = por %p395, %p396
      %p398 = scmp.ne.s32.totalorder %s384, %s385
      %p399 = scmp.eq.s32.totalorder %s37, 3
      %p400 = por %p398, %p399
      %p402 = scmp.ne.s32.totalorder %s385, %s401
      %p403 = scmp.eq.s32.totalorder %s37, 0
      %p404 = por %p402, %p403
      %s406 = sadd.s32 %s405, 1
      %p409 = scmp.eq.s32.totalorder %s31, 3
      %p410 = scmp.ne.s32.totalorder %s405, %s407
      %p411 = scmp.eq.s32.totalorder %s31, 0
      %p412 = por %p410, %p411
      %p413 = scmp.ne.s32.totalorder %s405, %s407
      %p414 = scmp.eq.s32.totalorder %s36, 3
      %p415 = por %p413, %p414
      %p416 = scmp.ne.s32.totalorder %s407, %s408
      %p417 = scmp.eq.s32.totalorder %s36, 0
      %p418 = por %p416, %p417
      %p419 = scmp.ne.s32.totalorder %s407, %s408
      %p420 = scmp.eq.s32.totalorder %s37, 3
      %p421 = por %p419, %p420
      %p423 = scmp.ne.s32.totalorder %s408, %s422
      %p424 = scmp.eq.s32.totalorder %s37, 0
      %p425 = por %p423, %p424
      %s427 = sadd.s32 %s426, 1
      %p430 = scmp.eq.s32.totalorder %s31, 3
      %p431 = scmp.ne.s32.totalorder %s426, %s428
      %p432 = scmp.eq.s32.totalorder %s31, 0
      %p433 = por %p431, %p432
      %p434 = scmp.ne.s32.totalorder %s426, %s428
      %p435 = scmp.eq.s32.totalorder %s36, 3
      %p436 = por %p434, %p435
      %p437 = scmp.ne.s32.totalorder %s428, %s429
      %p438 = scmp.eq.s32.totalorder %s36, 0
      %p439 = por %p437, %p438
      %p440 = scmp.ne.s32.totalorder %s428, %s429
      %p441 = scmp.eq.s32.totalorder %s37, 3
      %p442 = por %p440, %p441
      %p444 = scmp.ne.s32.totalorder %s429, %s443
      %p445 = scmp.eq.s32.totalorder %s37, 0
      %p446 = por %p444, %p445
      %s447 = ssub.s32 %s38, %s50
      %p448 = scmp.eq.s32.totalorder %s447, 0
      %s450 = sadd.s32 %s449, 1
      %s451 = scalar_select %p448, %s449, %s450
      %p454 = pneg %p448
      %p455 = scmp.eq.s32.totalorder %s31, 3
      %p456 = por %p454, %p455
      %p457 = scmp.ne.s32.totalorder %s449, %s452
      %p458 = scmp.eq.s32.totalorder %s31, 0
      %p459 = por %p457, %p458
      %p460 = scmp.ne.s32.totalorder %s449, %s452
      %p461 = scmp.eq.s32.totalorder %s36, 3
      %p462 = por %p460, %p461
      %p463 = scmp.ne.s32.totalorder %s452, %s453
      %p464 = scmp.eq.s32.totalorder %s36, 0
      %p465 = por %p463, %p464
      %p466 = scmp.ne.s32.totalorder %s452, %s453
      %p467 = scmp.eq.s32.totalorder %s37, 3
      %p468 = por %p466, %p467
      %p470 = scmp.ne.s32.totalorder %s453, %s469
      %p471 = scmp.eq.s32.totalorder %s37, 0
      %p472 = por %p470, %p471
      %p473 = scmp.le.s32.totalorder 1, %s31
      %p474 = scmp.lt.s32.totalorder %s31, 5
      %p475 = pnand %p473, %p474
      %p476 = pneg %p475
      // Predicated region
      $region9: #{token_transformer_forward.4} parent=5 // pred_check
        _
      $region10: #{token_transformer_forward.4} parent=5 // pred_check_branch
        %478 = sbr.rel (%p475) target = $region12
      $region11: #{token_transformer_forward.4} parent=5 // pred_region
        %s479 = ssub.s32 %s31, 1
        // Predicated region
        $region13: #{token_transformer_forward.4} parent=11 // pred_check
          %p480 = pneg %p90
        $region14: #{token_transformer_forward.4} parent=11 // pred_check_branch
          %482 = sbr.rel (%p480) target = $region16
        $region15: #{token_transformer_forward.4} parent=11 // pred_region
          _
        $region16: #{token_transformer_forward.4} parent=11 // pred_fallthru
          _
        // Predicated region
        $region17: #{token_transformer_forward.4} parent=11 // pred_check
          %p483 = pneg %p111
        $region18: #{token_transformer_forward.4} parent=11 // pred_check_branch
          %485 = sbr.rel (%p483) target = $region20
        $region19: #{token_transformer_forward.4} parent=11 // pred_region
          _
        $region20: #{token_transformer_forward.4} parent=11 // pred_fallthru
          _
        // Predicated region
        $region21: #{token_transformer_forward.4} parent=11 // pred_check
          %p486 = pneg %p418
        $region22: #{token_transformer_forward.4} parent=11 // pred_check_branch
          %488 = sbr.rel (%p486) target = $region24
        $region23: #{token_transformer_forward.4} parent=11 // pred_region
          _
        $region24: #{token_transformer_forward.4} parent=11 // pred_fallthru
          _
        // Predicated region
        $region25: #{token_transformer_forward.4} parent=11 // pred_check
          %p489 = pneg %p439
        $region26: #{token_transformer_forward.4} parent=11 // pred_check_branch
          %491 = sbr.rel (%p489) target = $region28
        $region27: #{token_transformer_forward.4} parent=11 // pred_region
          _
        $region28: #{token_transformer_forward.4} parent=11 // pred_fallthru
          _
      $region12: #{token_transformer_forward.4} parent=5 // pred_fallthru
        _
      %p492 = scmp.lt.s32.totalorder %s31, 4
      // Predicated region
      $region29: #{token_transformer_forward.4} parent=5 // pred_check
        %p493 = pneg %p492
      $region30: #{token_transformer_forward.4} parent=5 // pred_check_branch
        %495 = sbr.rel (%p493) target = $region32
      $region31: #{token_transformer_forward.4} parent=5 // pred_region
        // Predicated region
        $region33: #{token_transformer_forward.4} parent=31 // pred_check
          %p496 = pneg %p63
        $region34: #{token_transformer_forward.4} parent=31 // pred_check_branch
          %498 = sbr.rel (%p496) target = $region36
        $region35: #{token_transformer_forward.4} parent=31 // pred_region
          %p499 = scmp.lt.s32.totalorder %s38, 1
          %s500 = scalar_select %p499, %s38, 1
          %s501 = smul.addr %s500, 8
          %s502 = scalar_lea.vmem %s0, %s501
        $region36: #{token_transformer_forward.4} parent=31 // pred_fallthru
          _
        // Predicated region
        $region37: #{token_transformer_forward.4} parent=31 // pred_check
          %p503 = pneg %p131
        $region38: #{token_transformer_forward.4} parent=31 // pred_check_branch
          %505 = sbr.rel (%p503) target = $region40
        $region39: #{token_transformer_forward.4} parent=31 // pred_region
          %p506 = scmp.lt.s32.totalorder %s39, 1
          %s507 = scalar_select %p506, %s39, 1
          %s508 = scalar_lea.vmem %s3, %s507
        $region40: #{token_transformer_forward.4} parent=31 // pred_fallthru
          _
        // Predicated region
        $region41: #{token_transformer_forward.4} parent=31 // pred_check
          %p509 = pneg %p157
        $region42: #{token_transformer_forward.4} parent=31 // pred_check_branch
          %511 = sbr.rel (%p509) target = $region44
        $region43: #{token_transformer_forward.4} parent=31 // pred_region
          %p512 = scmp.lt.s32.totalorder %s39, 1
          %s513 = scalar_select %p512, %s39, 1
          %s514 = scalar_lea.vmem %s4, %s513
        $region44: #{token_transformer_forward.4} parent=31 // pred_fallthru
          _
        // Predicated region
        $region45: #{token_transformer_forward.4} parent=31 // pred_check
          %p515 = pneg %p183
        $region46: #{token_transformer_forward.4} parent=31 // pred_check_branch
          %517 = sbr.rel (%p515) target = $region48
        $region47: #{token_transformer_forward.4} parent=31 // pred_region
          %p518 = scmp.lt.s32.totalorder %s39, 1
          %s519 = scalar_select %p518, %s39, 1
          %s520 = smul.addr %s519, 4
          %s521 = smul.addr %s520, 4
          %s522 = scalar_lea.vmem %s5, %s521
        $region48: #{token_transformer_forward.4} parent=31 // pred_fallthru
          _
        // Predicated region
        $region49: #{token_transformer_forward.4} parent=31 // pred_check
          %p523 = pneg %p209
        $region50: #{token_transformer_forward.4} parent=31 // pred_check_branch
          %525 = sbr.rel (%p523) target = $region52
        $region51: #{token_transformer_forward.4} parent=31 // pred_region
          %p526 = scmp.lt.s32.totalorder %s39, 1
          %s527 = scalar_select %p526, %s39, 1
          %s528 = smul.addr %s527, 4
          %s529 = smul.addr %s528, 4
          %s530 = scalar_lea.vmem %s6, %s529
        $region52: #{token_transformer_forward.4} parent=31 // pred_fallthru
          _
        // Predicated region
        $region53: #{token_transformer_forward.4} parent=31 // pred_check
          %p531 = pneg %p235
        $region54: #{token_transformer_forward.4} parent=31 // pred_check_branch
          %533 = sbr.rel (%p531) target = $region56
        $region55: #{token_transformer_forward.4} parent=31 // pred_region
          %s534 = sand.u32 %s225, 1
          %s535 = scalar_lea.sflag [#allocation5], %s534
          %s536 = sand.u32 %s225, 1
          %s537 = scalar_lea.vmem [#allocation4], %s536
          %539 = vsyncadd %s535, 0
          %s540 = scalar_lea.hbm %s7, %s39
          %s542 = sshll.u32 %s540, 4
          %s543 = int_to_ptr.hbm [resolvable:$true] %s542
          %s544 = sshll.u32 %s537, 4
          %s545 = int_to_ptr.vmem [resolvable:$true] %s544
          %547 = dma.hbm_to_vmem [thread:$0]  %s543, 16, %s545, %s535
        $region56: #{token_transformer_forward.4} parent=31 // pred_fallthru
          _
        // Predicated region
        $region57: #{token_transformer_forward.4} parent=31 // pred_check
          %p548 = pneg %p261
        $region58: #{token_transformer_forward.4} parent=31 // pred_check_branch
          %550 = sbr.rel (%p548) target = $region60
        $region59: #{token_transformer_forward.4} parent=31 // pred_region
          %p551 = scmp.lt.s32.totalorder %s39, 1
          %s552 = scalar_select %p551, %s39, 1
          %s553 = scalar_lea.vmem %s8, %s552
        $region60: #{token_transformer_forward.4} parent=31 // pred_fallthru
          _
        // Predicated region
        $region61: #{token_transformer_forward.4} parent=31 // pred_check
          %p554 = pneg %p287
        $region62: #{token_transformer_forward.4} parent=31 // pred_check_branch
          %556 = sbr.rel (%p554) target = $region64
        $region63: #{token_transformer_forward.4} parent=31 // pred_region
          %s557 = sand.u32 %s31, 1
          %s558 = scalar_lea.sflag [#allocation7], %s557
          %s559 = sand.u32 %s277, 1
          %s560 = scalar_lea.vmem [#allocation6], %s559
          %562 = vsyncadd %s558, 0
          %s563 = scalar_lea.hbm %s9, %s39
          %s565 = sshll.u32 %s563, 4
          %s566 = int_to_ptr.hbm [resolvable:$true] %s565
          %s567 = sshll.u32 %s560, 4
          %s568 = int_to_ptr.vmem [resolvable:$true] %s567
          %570 = dma.hbm_to_vmem [thread:$0]  %s566, 16, %s568, %s558
        $region64: #{token_transformer_forward.4} parent=31 // pred_fallthru
          _
        // Predicated region
        $region65: #{token_transformer_forward.4} parent=31 // pred_check
          %p571 = pneg %p313
        $region66: #{token_transformer_forward.4} parent=31 // pred_check_branch
          %573 = sbr.rel (%p571) target = $region68
        $region67: #{token_transformer_forward.4} parent=31 // pred_region
          %p574 = scmp.lt.s32.totalorder %s39, 1
          %s575 = scalar_select %p574, %s39, 1
          %s576 = smul.addr %s575, 4
          %s577 = smul.addr %s576, 4
          %s578 = scalar_lea.vmem %s10, %s577
        $region68: #{token_transformer_forward.4} parent=31 // pred_fallthru
          _
        // Predicated region
        $region69: #{token_transformer_forward.4} parent=31 // pred_check
          %p579 = pneg %p339
        $region70: #{token_transformer_forward.4} parent=31 // pred_check_branch
          %581 = sbr.rel (%p579) target = $region72
        $region71: #{token_transformer_forward.4} parent=31 // pred_region
          %s582 = sand.u32 %s31, 1
          %s583 = scalar_lea.sflag [#allocation7], %s582
          %s584 = sand.u32 %s329, 1
          %s585 = scalar_lea.vmem [#allocation8], %s584
          %587 = vsyncadd %s583, 0
          %s588 = scalar_lea.hbm %s11, %s39
          %s590 = sshll.u32 %s588, 4
          %s591 = int_to_ptr.hbm [resolvable:$true] %s590
          %s592 = sshll.u32 %s585, 4
          %s593 = int_to_ptr.vmem [resolvable:$true] %s592
          %595 = dma.hbm_to_vmem [thread:$0]  %s591, 16, %s593, %s583
        $region72: #{token_transformer_forward.4} parent=31 // pred_fallthru
          _
        // Predicated region
        $region73: #{token_transformer_forward.4} parent=31 // pred_check
          %p596 = pneg %p365
        $region74: #{token_transformer_forward.4} parent=31 // pred_check_branch
          %598 = sbr.rel (%p596) target = $region76
        $region75: #{token_transformer_forward.4} parent=31 // pred_region
          %p599 = scmp.lt.s32.totalorder %s39, 1
          %s600 = scalar_select %p599, %s39, 1
          %s601 = smul.addr %s600, 12
          %s602 = smul.addr %s601, 4
          %s603 = scalar_lea.vmem %s12, %s602
        $region76: #{token_transformer_forward.4} parent=31 // pred_fallthru
          _
        // Predicated region
        $region77: #{token_transformer_forward.4} parent=31 // pred_check
          %p604 = pneg %p391
        $region78: #{token_transformer_forward.4} parent=31 // pred_check_branch
          %606 = sbr.rel (%p604) target = $region80
        $region79: #{token_transformer_forward.4} parent=31 // pred_region
          %s607 = sand.u32 %s381, 1
          %s608 = scalar_lea.sflag [#allocation10], %s607
          %s609 = sand.u32 %s381, 1
          %s610 = scalar_lea.vmem [#allocation9], %s609
          %612 = vsyncadd %s608, 0
          %s613 = scalar_lea.hbm %s13, %s39
          %s615 = sshll.u32 %s613, 4
          %s616 = int_to_ptr.hbm [resolvable:$true] %s615
          %s617 = sshll.u32 %s610, 4
          %s618 = int_to_ptr.vmem [resolvable:$true] %s617
          %620 = dma.hbm_to_vmem [thread:$0]  %s616, 16, %s618, %s608
        $region80: #{token_transformer_forward.4} parent=31 // pred_fallthru
          _
      $region32: #{token_transformer_forward.4} parent=5 // pred_fallthru
        _
      %p621 = scmp.le.s32.totalorder 1, %s31
      %p622 = scmp.lt.s32.totalorder %s31, 5
      %p623 = pnand %p621, %p622
      %p624 = pneg %p623
      // Predicated region
      $region81: #{token_transformer_forward.4} parent=5 // pred_check
        _
      $region82: #{token_transformer_forward.4} parent=5 // pred_check_branch
        %626 = sbr.rel (%p623) target = $region84
      $region83: #{token_transformer_forward.4} parent=5 // pred_region
        %s627 = ssub.s32 %s31, 1
        %s628 = sand.u32 %s228, 1
        %s629 = scalar_lea.sflag [#allocation5], %s628
        %s630 = sand.u32 %s228, 1
        %s631 = scalar_lea.vmem [#allocation4], %s630
        // Predicated region
        $region85: #{token_transformer_forward.4} parent=83 // pred_check
          %p632 = pneg %p241
        $region86: #{token_transformer_forward.4} parent=83 // pred_check_branch
          %634 = sbr.rel (%p632) target = $region88
        $region87: #{token_transformer_forward.4} parent=83 // pred_region
          %636 = dma.done %s629, 16
        $region88: #{token_transformer_forward.4} parent=83 // pred_fallthru
          _
        %s637 = sand.u32 %s36, 1
        %s638 = scalar_lea.sflag [#allocation7], %s637
        %s639 = sand.u32 %s280, 1
        %s640 = scalar_lea.vmem [#allocation6], %s639
        // Predicated region
        $region89: #{token_transformer_forward.4} parent=83 // pred_check
          %p641 = pneg %p293
        $region90: #{token_transformer_forward.4} parent=83 // pred_check_branch
          %643 = sbr.rel (%p641) target = $region92
        $region91: #{token_transformer_forward.4} parent=83 // pred_region
          %645 = dma.done %s638, 16
        $region92: #{token_transformer_forward.4} parent=83 // pred_fallthru
          _
        %s646 = sand.u32 %s36, 1
        %s647 = scalar_lea.sflag [#allocation7], %s646
        %s648 = sand.u32 %s332, 1
        %s649 = scalar_lea.vmem [#allocation8], %s648
        // Predicated region
        $region93: #{token_transformer_forward.4} parent=83 // pred_check
          %p650 = pneg %p345
        $region94: #{token_transformer_forward.4} parent=83 // pred_check_branch
          %652 = sbr.rel (%p650) target = $region96
        $region95: #{token_transformer_forward.4} parent=83 // pred_region
          %654 = dma.done %s647, 16
        $region96: #{token_transformer_forward.4} parent=83 // pred_fallthru
          _
        %s655 = sand.u32 %s384, 1
        %s656 = scalar_lea.sflag [#allocation10], %s655
        %s657 = sand.u32 %s384, 1
        %s658 = scalar_lea.vmem [#allocation9], %s657
        // Predicated region
        $region97: #{token_transformer_forward.4} parent=83 // pred_check
          %p659 = pneg %p397
        $region98: #{token_transformer_forward.4} parent=83 // pred_check_branch
          %661 = sbr.rel (%p659) target = $region100
        $region99: #{token_transformer_forward.4} parent=83 // pred_region
          %663 = dma.done %s656, 16
        $region100: #{token_transformer_forward.4} parent=83 // pred_fallthru
          _
        %p664 = scmp.lt.s32.totalorder %s40, 1
        %s665 = scalar_select %p664, %s40, 1
        %s666 = smul.addr %s665, 8
        %s667 = scalar_lea.vmem %s0, %s666
        %p668 = pneg %p69
        %p669 = pneg %p66
        %p670 = pneg %p90
        %p671 = pneg %p87
        %p672 = pneg %p111
        %p673 = pneg %p108
        %p674 = scmp.lt.s32.totalorder %s41, 1
        %s675 = scalar_select %p674, %s41, 1
        %s676 = scalar_lea.vmem %s3, %s675
        %p677 = pneg %p137
        %p678 = pneg %p134
        %p679 = scmp.lt.s32.totalorder %s41, 1
        %s680 = scalar_select %p679, %s41, 1
        %s681 = scalar_lea.vmem %s4, %s680
        %p682 = pneg %p163
        %p683 = pneg %p160
        %p684 = scmp.lt.s32.totalorder %s41, 1
        %s685 = scalar_select %p684, %s41, 1
        %s686 = smul.addr %s685, 4
        %s687 = smul.addr %s686, 4
        %s688 = scalar_lea.vmem %s5, %s687
        %p689 = pneg %p189
        %p690 = pneg %p186
        %p691 = scmp.lt.s32.totalorder %s41, 1
        %s692 = scalar_select %p691, %s41, 1
        %s693 = smul.addr %s692, 4
        %s694 = smul.addr %s693, 4
        %s695 = scalar_lea.vmem %s6, %s694
        %p696 = pneg %p215
        %p697 = pneg %p212
        %s698 = sand.u32 %s228, 1
        %s699 = scalar_lea.sflag [#allocation5], %s698
        %s700 = sand.u32 %s228, 1
        %s701 = scalar_lea.vmem [#allocation4], %s700
        %p702 = pneg %p241
        %p703 = pneg %p238
        %p704 = scmp.lt.s32.totalorder %s41, 1
        %s705 = scalar_select %p704, %s41, 1
        %s706 = scalar_lea.vmem %s8, %s705
        %p707 = pneg %p267
        %p708 = pneg %p264
        %s709 = sand.u32 %s36, 1
        %s710 = scalar_lea.sflag [#allocation7], %s709
        %s711 = sand.u32 %s280, 1
        %s712 = scalar_lea.vmem [#allocation6], %s711
        %p713 = pneg %p293
        %p714 = pneg %p290
        %p715 = scmp.lt.s32.totalorder %s41, 1
        %s716 = scalar_select %p715, %s41, 1
        %s717 = smul.addr %s716, 4
        %s718 = smul.addr %s717, 4
        %s719 = scalar_lea.vmem %s10, %s718
        %p720 = pneg %p319
        %p721 = pneg %p316
        %s722 = sand.u32 %s36, 1
        %s723 = scalar_lea.sflag [#allocation7], %s722
        %s724 = sand.u32 %s332, 1
        %s725 = scalar_lea.vmem [#allocation8], %s724
        %p726 = pneg %p345
        %p727 = pneg %p342
        %p728 = scmp.lt.s32.totalorder %s41, 1
        %s729 = scalar_select %p728, %s41, 1
        %s730 = smul.addr %s729, 12
        %s731 = smul.addr %s730, 4
        %s732 = scalar_lea.vmem %s12, %s731
        %p733 = pneg %p371
        %p734 = pneg %p368
        %s735 = sand.u32 %s384, 1
        %s736 = scalar_lea.sflag [#allocation10], %s735
        %s737 = sand.u32 %s384, 1
        %s738 = scalar_lea.vmem [#allocation9], %s737
        %p739 = pneg %p397
        %p740 = pneg %p394
        %p741 = pneg %p418
        %p742 = pneg %p415
        %p743 = pneg %p439
        %p744 = pneg %p436
        %p745 = pneg %p465
        %p746 = pneg %p462
        %p747 = scmp.lt.s32.totalorder %s40, 1
        %s748 = scalar_select %p747, %s40, 1
        %s749 = smul.addr %s748, 2
        %s750 = smul.addr %s749, 8
        %s751 = scalar_lea.vmem %s16, %s750
        %p752 = scmp.lt.s32.totalorder %s40, 1
        %s753 = scalar_select %p752, %s40, 1
        %s754 = smul.addr %s753, 8
        %s755 = scalar_lea.vmem %s0, %s754
        %p756 = scmp.lt.s32.totalorder %s41, 1
        %s757 = scalar_select %p756, %s41, 1
        %s758 = scalar_lea.vmem %s3, %s757
        %p759 = scmp.lt.s32.totalorder %s41, 1
        %s760 = scalar_select %p759, %s41, 1
        %s761 = scalar_lea.vmem %s4, %s760
        %p762 = scmp.lt.s32.totalorder %s41, 1
        %s763 = scalar_select %p762, %s41, 1
        %s764 = smul.addr %s763, 4
        %s765 = smul.addr %s764, 4
        %s766 = scalar_lea.vmem %s5, %s765
        %p767 = scmp.lt.s32.totalorder %s41, 1
        %s768 = scalar_select %p767, %s41, 1
        %s769 = smul.addr %s768, 4
        %s770 = smul.addr %s769, 4
        %s771 = scalar_lea.vmem %s6, %s770
        %p772 = scmp.lt.s32.totalorder %s41, 1
        %s773 = scalar_select %p772, %s41, 1
        %s774 = scalar_lea.vmem %s8, %s773
        %p775 = scmp.lt.s32.totalorder %s41, 1
        %s776 = scalar_select %p775, %s41, 1
        %s777 = smul.addr %s776, 4
        %s778 = smul.addr %s777, 4
        %s779 = scalar_lea.vmem %s10, %s778
        %p780 = scmp.lt.s32.totalorder %s41, 1
        %s781 = scalar_select %p780, %s41, 1
        %s782 = smul.addr %s781, 12
        %s783 = smul.addr %s782, 4
        %s784 = scalar_lea.vmem %s12, %s783
        %p785 = scmp.lt.s32.totalorder %s40, 1
        %s786 = scalar_select %p785, %s40, 1
        %s787 = smul.addr %s786, 2
        %s788 = smul.addr %s787, 8
        %s789 = scalar_lea.vmem %s16, %s788
        %p791 = scmp.eq.s32.totalorder %s41, 0
        // Predicated region
        $region101: #{token_transformer_forward.4} parent=83 // pred_check
          %p792 = pneg %p791
        $region102: #{token_transformer_forward.4} parent=83 // pred_check_branch
          %794 = sbr.rel (%p792) target = $region104
        $region103: #{token_transformer_forward.4} parent=83 // pred_region
          %v795 = vld [vmem:[%s1] sm:$0x1]
          %vm796 = vcmask 253952
          %797 = vst.msk [vmem:[#allocation2] sm:$0x1] %vm796, %v795
          %v798 = vld [vmem:[%s755] sm:$0xff]
          %vm799 = vcmask 261120
          %800 = vst.msk [vmem:[#allocation2 + $0x1] sm:$0xff] %vm799, %v798
          %v801 = vld [vmem:[%s2] sm:$0x1]
          %802 = vst.msk [vmem:[#allocation2 + $0x9] sm:$0x1] %vm796, %v801
        $region104: #{token_transformer_forward.4} parent=83 // pred_fallthru
          _
        %v803 = vld [vmem:[#allocation2] sm:$0xff]
        %v804 = vld [vmem:[#allocation2 + $0x8] sm:$0x3]
        %v805 = vld [vmem:[%s758] sm:$0x1]
        %v806 = vld [vmem:[%s761] sm:$0x1]
        %vm807 = vcmask 261120
        %v808 = vsel %vm807, %v803, 0.0
        %809 = vadd.xlane.f32.xlu0 %v808
        %v810 = vpop.xlane.xlu0 %809
        %vm811 = vcmask 254976
        %v812 = vsel %vm811, %v804, 0.0
        %813 = vadd.xlane.f32.xlu0 %v812
        %v814 = vpop.xlane.xlu0 %813
        %v815 = vrcp.pop 32.0
        %v816 = vmul.f32 32.0, %v815
        %v817 = vsub.f32 1.0, %v816
        %v818 = vmul.f32 %v815, %v817
        %v819 = vadd.f32 %v815, %v818
        %vm820 = vweird.f32 %v815
        %v821 = vsel %vm820, %v815, %v819
        %v822 = vmul.f32 %v810, %v821
        %v823 = vmul.f32 %v814, %v821
        %v824 = vsub.f32 %v803, %v822
        %v825 = vsub.f32 %v804, %v823
        %v826 = vmul.f32 %v824, %v824
        %v827 = vmul.f32 %v825, %v825
        %v828 = vsel %vm807, %v826, 0.0
        %829 = vadd.xlane.f32.xlu0 %v828
        %v830 = vpop.xlane.xlu0 %829
        %v831 = vsel %vm811, %v827, 0.0
        %832 = vadd.xlane.f32.xlu0 %v831
        %v833 = vpop.xlane.xlu0 %832
        %v834 = vmul.f32 %v830, %v821
        %v835 = vmul.f32 %v833, %v821
        %v836 = vadd.f32 %v834, 1e-05
        %v837 = vadd.f32 %v835, 1e-05
        %v838 = vrsqrt.pop %v836
        %v839 = vmul.f32 %v838, %v836
        %v840 = vmul.f32 %v839, %v838
        %v841 = vmul.f32 0.5, %v840
        %v842 = vsub.f32 1.5, %v841
        %v843 = vmul.f32 %v838, %v842
        %vm844 = vweird.f32 %v836
        %vm845 = vweird.f32 %v838
        %vm846 = vmor %vm844, %vm845
        %v847 = vsel %vm846, %v838, %v843
        %v848 = vrsqrt.pop %v837
        %v849 = vmul.f32 %v848, %v837
        %v850 = vmul.f32 %v849, %v848
        %v851 = vmul.f32 0.5, %v850
        %v852 = vsub.f32 1.5, %v851
        %v853 = vmul.f32 %v848, %v852
        %vm854 = vweird.f32 %v837
        %vm855 = vweird.f32 %v848
        %vm856 = vmor %vm854, %vm855
        %v857 = vsel %vm856, %v848, %v853
        %v858 = vmul.f32 %v824, %v847
        %v859 = vmul.f32 %v825, %v857
        %v861 = vperm.slane %v805, 0
        %v863 = vmul.f32 %v858, %v861
        %v864 = vmul.f32 %v859, %v861
        %v866 = vperm.slane %v806, 0
        %v868 = vadd.f32 %v863, %v866
        %v869 = vadd.f32 %v864, %v866
        %v870 = vpack.c.bf16 %v869, %v868
        %v871 = vld [vmem:[%s766] sm:$0xf]
        %v872 = vld [vmem:[%s766 + $0x4] sm:$0xf]
        %v873 = vld [vmem:[%s766 + $0x8] sm:$0xf]
        %v874 = vld [vmem:[%s766 + $0xc] sm:$0xf]
        %v879 = vunpack.c.l.b16 %v871
        %v880 = vunpack.c.l.b16 %v872
        %v881 = vunpack.c.l.b16 %v873
        %v882 = vunpack.c.l.b16 %v874
        %v883 = vpack.c.b16 %v880, %v879
        %v884 = vpack.c.b16 %v882, %v881
        %v888 = vsel %vm807, %v870, 0
        %890 = vmatpush.bf16.msra.mxu0 0
        %891 = vmatpush.bf16.msra.mxu0 0
        %892 = vmatpush.bf16.msra.mxu0 0
        %893 = vmatpush.bf16.msra.mxu0 0
        %894 = vmatpush.bf16.msra.mxu0 0
        %895 = vmatpush.bf16.msra.mxu0 0
        %896 = vmatpush.bf16.msra.mxu0 %v884
        %897 = vmatpush.bf16.msra.mxu0 %v883
        %898 = vmatmul.bf16.gmra.mxu0 %v888
        %v899 = vpop.f32.mrf.mxu0
        %v900 = vadd.f32 0.0, %v899
        %v901 = vpop.f32.mrf.mxu0
        %v902 = vadd.f32 0.0, %v901
        %903 = vdwg.mxu0
        %v904 = vpack.c.bf16 %v900, %v900
        %v905 = vpack.c.bf16 %v902, %v902
        %v908 = vunpack.c.l.b16 %v904
        %v909 = vunpack.c.l.b16 %v905
        %v910 = vpack.c.b16 %v909, %v908
        %911 = vrot.lane.b32.xlu0 %v910, 96
        %v912 = vpop.permute.xlu0 %911
        %vm913 = vcmask 130048
        %v915 = vsel %vm913, %v910, 0
        %v918 = vsel %vm913, %v912, 0
        %920 = vmatpush.bf16.xpose.msra.mxu0 0
        %921 = vmatpush.bf16.xpose.msra.mxu0 0
        %922 = vmatpush.bf16.xpose.msra.mxu0 0
        %923 = vmatpush.bf16.xpose.msra.mxu0 0
        %924 = vmatpush.bf16.xpose.msra.mxu0 0
        %925 = vmatpush.bf16.xpose.msra.mxu0 0
        %926 = vmatpush.bf16.xpose.msra.mxu0 0
        %927 = vmatpush.bf16.xpose.msra.mxu0 %v918
        %928 = vmatmul.bf16.gmra.mxu0 %v915
        %v929 = vpop.f32.mrf.mxu0
        %v930 = vadd.f32 0.0, %v929
        %v931 = vpop.f32.mrf.mxu0
        %v932 = vadd.f32 0.0, %v931
        %933 = vdwg.mxu0
        %vm934 = vcmask 80896
        %v935 = vsel %vm934, %v930, -inf
        %936 = vmax.xlane.f32.xlu0 %v935
        %v937 = vpop.xlane.xlu0 %936
        %vm938 = vcmask 74752
        %v939 = vsel %vm938, %v932, -inf
        %940 = vmax.xlane.f32.xlu0 %v939
        %v941 = vpop.xlane.xlu0 %940
        %v942 = vsub.f32 %v930, %v937
        %v943 = vsub.f32 %v932, %v941
        %v944 = vmul.f32 %v942, 1.442695
        %v945 = vpow.pop %v944
        %v946 = vmul.f32 %v943, 1.442695
        %v947 = vpow.pop %v946
        %v948 = vsel %vm934, %v945, 0.0
        %949 = vadd.xlane.f32.xlu0 %v948
        %v950 = vpop.xlane.xlu0 %949
        %v951 = vsel %vm938, %v947, 0.0
        %952 = vadd.xlane.f32.xlu0 %v951
        %v953 = vpop.xlane.xlu0 %952
        %v954 = vrcp.pop %v950
        %v955 = vrcp.pop %v953
        %v956 = vmul.f32 %v945, %v954
        %v957 = vmul.f32 %v947, %v955
        %v958 = vpack.c.bf16 %v957, %v956
        %959 = vrot.lane.b32.xlu0 %v910, 64
        %v960 = vpop.permute.xlu0 %959
        %v962 = vsel %vm934, %v958, 0
        %vm964 = vcmask 1044480
        %v966 = vsel %vm964, %v960, 0
        %968 = vmatpush.bf16.msra.mxu0 0
        %969 = vmatpush.bf16.msra.mxu0 0
        %970 = vmatpush.bf16.msra.mxu0 0
        %971 = vmatpush.bf16.msra.mxu0 0
        %972 = vmatpush.bf16.msra.mxu0 0
        %973 = vmatpush.bf16.msra.mxu0 0
        %974 = vmatpush.bf16.msra.mxu0 0
        %975 = vmatpush.bf16.msra.mxu0 %v966
        %976 = vmatmul.bf16.gmra.mxu0 %v962
        %v977 = vpop.f32.mrf.mxu0
        %v978 = vadd.f32 0.0, %v977
        %v979 = vpop.f32.mrf.mxu0
        %v980 = vadd.f32 0.0, %v979
        %981 = vdwg.mxu0
        %v982 = vpack.c.bf16 %v978, %v978
        %v983 = vpack.c.bf16 %v980, %v980
        %vm984 = vcmask 125952
        %985 = vst.msk [vmem:[#allocation3] sm:$0xf] %vm984, %v982
        %vm986 = vcmask 122880
        %987 = vst.msk [vmem:[#allocation3 + $0x4] sm:$0x1] %vm986, %v983
        %988 = vrot.lane.b32.xlu0 %v910, 112
        %v989 = vpop.permute.xlu0 %988
        %990 = vrot.lane.b32.xlu0 %v910, 80
        %v991 = vpop.permute.xlu0 %990
        %v993 = vsel %vm913, %v989, 0
        %v996 = vsel %vm913, %v991, 0
        %998 = vmatpush.bf16.xpose.msra.mxu0 0
        %999 = vmatpush.bf16.xpose.msra.mxu0 0
        %1000 = vmatpush.bf16.xpose.msra.mxu0 0
        %1001 = vmatpush.bf16.xpose.msra.mxu0 0
        %1002 = vmatpush.bf16.xpose.msra.mxu0 0
        %1003 = vmatpush.bf16.xpose.msra.mxu0 0
        %1004 = vmatpush.bf16.xpose.msra.mxu0 0
        %1005 = vmatpush.bf16.xpose.msra.mxu0 %v996
        %1006 = vmatmul.bf16.gmra.mxu0 %v993
        %v1007 = vpop.f32.mrf.mxu0
        %v1008 = vadd.f32 0.0, %v1007
        %v1009 = vpop.f32.mrf.mxu0
        %v1010 = vadd.f32 0.0, %v1009
        %1011 = vdwg.mxu0
        %v1012 = vsel %vm934, %v1008, -inf
        %1013 = vmax.xlane.f32.xlu0 %v1012
        %v1014 = vpop.xlane.xlu0 %1013
        %v1015 = vsel %vm938, %v1010, -inf
        %1016 = vmax.xlane.f32.xlu0 %v1015
        %v1017 = vpop.xlane.xlu0 %1016
        %v1018 = vsub.f32 %v1008, %v1014
        %v1019 = vsub.f32 %v1010, %v1017
        %v1020 = vmul.f32 %v1018, 1.442695
        %v1021 = vpow.pop %v1020
        %v1022 = vmul.f32 %v1019, 1.442695
        %v1023 = vpow.pop %v1022
        %v1024 = vsel %vm934, %v1021, 0.0
        %1025 = vadd.xlane.f32.xlu0 %v1024
        %v1026 = vpop.xlane.xlu0 %1025
        %v1027 = vsel %vm938, %v1023, 0.0
        %1028 = vadd.xlane.f32.xlu0 %v1027
        %v1029 = vpop.xlane.xlu0 %1028
        %v1030 = vrcp.pop %v1026
        %v1031 = vrcp.pop %v1029
        %v1032 = vmul.f32 %v1021, %v1030
        %v1033 = vmul.f32 %v1023, %v1031
        %v1034 = vpack.c.bf16 %v1033, %v1032
        %1035 = vrot.lane.b32.xlu0 %v910, 48
        %v1036 = vpop.permute.xlu0 %1035
        %v1038 = vsel %vm934, %v1034, 0
        %v1041 = vsel %vm964, %v1036, 0
        %1043 = vmatpush.bf16.msra.mxu0 0
        %1044 = vmatpush.bf16.msra.mxu0 0
        %1045 = vmatpush.bf16.msra.mxu0 0
        %1046 = vmatpush.bf16.msra.mxu0 0
        %1047 = vmatpush.bf16.msra.mxu0 0
        %1048 = vmatpush.bf16.msra.mxu0 0
        %1049 = vmatpush.bf16.msra.mxu0 0
        %1050 = vmatpush.bf16.msra.mxu0 %v1041
        %1051 = vmatmul.bf16.gmra.mxu0 %v1038
        %v1052 = vpop.f32.mrf.mxu0
        %v1053 = vadd.f32 0.0, %v1052
        %v1054 = vpop.f32.mrf.mxu0
        %v1055 = vadd.f32 0.0, %v1054
        %1056 = vdwg.mxu0
        %v1057 = vpack.c.bf16 %v1053, %v1053
        %v1058 = vpack.c.bf16 %v1055, %v1055
        %1061 = vrot.lane.b32.xlu0 %v1057, 16
        %v1062 = vpop.permute.xlu0 %1061
        %1063 = vrot.lane.b32.xlu0 %v1058, 16
        %v1064 = vpop.permute.xlu0 %1063
        %vm1067 = vcmask 257152
        %1068 = vst.msk [vmem:[#allocation3] sm:$0xf] %vm1067, %v1062
        %vm1069 = vcmask 254080
        %1070 = vst.msk [vmem:[#allocation3 + $0x4] sm:$0x1] %vm1069, %v1064
        %v1071 = vld [vmem:[#allocation3] sm:$0xf]
        %v1072 = vld [vmem:[#allocation3 + $0x4] sm:$0x1]
        %v1073 = vld [vmem:[%s771] sm:$0xf]
        %v1074 = vld [vmem:[%s771 + $0x4] sm:$0xf]
        %v1075 = vld [vmem:[%s771 + $0x8] sm:$0xf]
        %v1076 = vld [vmem:[%s771 + $0xc] sm:$0xf]
        %v1079 = vunpack.c.l.b16 %v1071
        %v1080 = vunpack.c.l.b16 %v1072
        %v1081 = vpack.c.b16 %v1080, %v1079
        %v1086 = vunpack.c.l.b16 %v1073
        %v1087 = vunpack.c.l.b16 %v1074
        %v1088 = vunpack.c.l.b16 %v1075
        %v1089 = vunpack.c.l.b16 %v1076
        %v1090 = vpack.c.b16 %v1087, %v1086
        %v1091 = vpack.c.b16 %v1089, %v1088
        %v1095 = vsel %vm807, %v1081, 0
        %1097 = vmatpush.bf16.msra.mxu0 0
        %1098 = vmatpush.bf16.msra.mxu0 0
        %1099 = vmatpush.bf16.msra.mxu0 0
        %1100 = vmatpush.bf16.msra.mxu0 0
        %1101 = vmatpush.bf16.msra.mxu0 0
        %1102 = vmatpush.bf16.msra.mxu0 0
        %1103 = vmatpush.bf16.msra.mxu0 %v1091
        %1104 = vmatpush.bf16.msra.mxu0 %v1090
        %1105 = vmatmul.bf16.gmra.mxu0 %v1095
        %v1106 = vpop.f32.mrf.mxu0
        %v1107 = vadd.f32 0.0, %v1106
        %v1108 = vpop.f32.mrf.mxu0
        %v1109 = vadd.f32 0.0, %v1108
        %1110 = vdwg.mxu0
        %v1111 = vadd.f32 %v803, %v1107
        %v1112 = vadd.f32 %v804, %v1109
        %v1113 = vld [vmem:[%s631] sm:$0x1]
        %v1115 = vperm.slane %v1113, 0
        %v1117 = vadd.f32 %v1111, %v1115
        %v1118 = vadd.f32 %v1112, %v1115
        %v1119 = vld [vmem:[%s774] sm:$0x1]
        %v1120 = vld [vmem:[%s640] sm:$0x1]
        %v1121 = vsel %vm807, %v1117, 0.0
        %1122 = vadd.xlane.f32.xlu0 %v1121
        %v1123 = vpop.xlane.xlu0 %1122
        %v1124 = vsel %vm811, %v1118, 0.0
        %1125 = vadd.xlane.f32.xlu0 %v1124
        %v1126 = vpop.xlane.xlu0 %1125
        %v1127 = vmul.f32 %v1123, %v821
        %v1128 = vmul.f32 %v1126, %v821
        %v1129 = vsub.f32 %v1117, %v1127
        %v1130 = vsub.f32 %v1118, %v1128
        %v1131 = vmul.f32 %v1129, %v1129
        %v1132 = vmul.f32 %v1130, %v1130
        %v1133 = vsel %vm807, %v1131, 0.0
        %1134 = vadd.xlane.f32.xlu0 %v1133
        %v1135 = vpop.xlane.xlu0 %1134
        %v1136 = vsel %vm811, %v1132, 0.0
        %1137 = vadd.xlane.f32.xlu0 %v1136
        %v1138 = vpop.xlane.xlu0 %1137
        %v1139 = vmul.f32 %v1135, %v821
        %v1140 = vmul.f32 %v1138, %v821
        %v1141 = vadd.f32 %v1139, 1e-05
        %v1142 = vadd.f32 %v1140, 1e-05
        %v1143 = vrsqrt.pop %v1141
        %v1144 = vmul.f32 %v1143, %v1141
        %v1145 = vmul.f32 %v1144, %v1143
        %v1146 = vmul.f32 0.5, %v1145
        %v1147 = vsub.f32 1.5, %v1146
        %v1148 = vmul.f32 %v1143, %v1147
        %vm1149 = vweird.f32 %v1141
        %vm1150 = vweird.f32 %v1143
        %vm1151 = vmor %vm1149, %vm1150
        %v1152 = vsel %vm1151, %v1143, %v1148
        %v1153 = vrsqrt.pop %v1142
        %v1154 = vmul.f32 %v1153, %v1142
        %v1155 = vmul.f32 %v1154, %v1153
        %v1156 = vmul.f32 0.5, %v1155
        %v1157 = vsub.f32 1.5, %v1156
        %v1158 = vmul.f32 %v1153, %v1157
        %vm1159 = vweird.f32 %v1142
        %vm1160 = vweird.f32 %v1153
        %vm1161 = vmor %vm1159, %vm1160
        %v1162 = vsel %vm1161, %v1153, %v1158
        %v1163 = vmul.f32 %v1129, %v1152
        %v1164 = vmul.f32 %v1130, %v1162
        %v1166 = vperm.slane %v1119, 0
        %v1168 = vmul.f32 %v1163, %v1166
        %v1169 = vmul.f32 %v1164, %v1166
        %v1171 = vperm.slane %v1120, 0
        %v1173 = vadd.f32 %v1168, %v1171
        %v1174 = vadd.f32 %v1169, %v1171
        %v1175 = vpack.c.bf16 %v1174, %v1173
        %v1176 = vld [vmem:[%s779] sm:$0xf]
        %v1177 = vld [vmem:[%s779 + $0x4] sm:$0xf]
        %v1178 = vld [vmem:[%s779 + $0x8] sm:$0xf]
        %v1179 = vld [vmem:[%s779 + $0xc] sm:$0xf]
        %v1180 = vld [vmem:[%s649] sm:$0x1]
        %v1182 = vperm.slane %v1180, 0
        %v1188 = vunpack.c.l.b16 %v1176
        %v1189 = vunpack.c.l.b16 %v1177
        %v1190 = vunpack.c.l.b16 %v1178
        %v1191 = vunpack.c.l.b16 %v1179
        %v1192 = vpack.c.b16 %v1189, %v1188
        %v1193 = vpack.c.b16 %v1191, %v1190
        %v1197 = vsel %vm807, %v1175, 0
        %1199 = vmatpush.bf16.msra.mxu0 0
        %1200 = vmatpush.bf16.msra.mxu0 0
        %1201 = vmatpush.bf16.msra.mxu0 0
        %1202 = vmatpush.bf16.msra.mxu0 0
        %1203 = vmatpush.bf16.msra.mxu0 0
        %1204 = vmatpush.bf16.msra.mxu0 0
        %1205 = vmatpush.bf16.msra.mxu0 %v1193
        %1206 = vmatpush.bf16.msra.mxu0 %v1192
        %1207 = vmatmul.bf16.gmra.mxu0 %v1197
        %v1208 = vpop.f32.mrf.mxu0
        %v1209 = vadd.f32 %v1182, %v1208
        %v1210 = vpop.f32.mrf.mxu0
        %v1211 = vadd.f32 %v1182, %v1210
        %1212 = vdwg.mxu0
        %v1213 = vmul.f32 %v1209, %v1209
        %v1214 = vmul.f32 %v1211, %v1211
        %v1215 = vmul.f32 %v1209, %v1213
        %v1216 = vmul.f32 %v1211, %v1214
        %v1217 = vmul.f32 %v1215, 0.044715
        %v1218 = vmul.f32 %v1216, 0.044715
        %v1219 = vadd.f32 %v1209, %v1217
        %v1220 = vadd.f32 %v1211, %v1218
        %v1221 = vmul.f32 %v1219, 0.7978846
        %v1222 = vmul.f32 %v1220, 0.7978846
        %v1223 = vtanh.pop %v1221
        %v1224 = vtanh.pop %v1222
        %v1225 = vadd.f32 %v1223, 1.0
        %v1226 = vadd.f32 %v1224, 1.0
        %v1227 = vmul.f32 %v1225, 0.5
        %v1228 = vmul.f32 %v1226, 0.5
        %v1229 = vmul.f32 %v1209, %v1227
        %v1230 = vmul.f32 %v1211, %v1228
        %v1231 = vpack.c.bf16 %v1230, %v1229
        %v1232 = vld [vmem:[%s784] sm:$0xf]
        %v1233 = vld [vmem:[%s784 + $0x4] sm:$0xf]
        %v1234 = vld [vmem:[%s784 + $0x8] sm:$0xf]
        %v1235 = vld [vmem:[%s784 + $0xc] sm:$0xf]
        %v1236 = vld [vmem:[%s784 + $0x10] sm:$0xf]
        %v1237 = vld [vmem:[%s784 + $0x14] sm:$0xf]
        %v1238 = vld [vmem:[%s784 + $0x18] sm:$0xf]
        %v1239 = vld [vmem:[%s784 + $0x1c] sm:$0xf]
        %v1240 = vld [vmem:[%s784 + $0x20] sm:$0xf]
        %v1241 = vld [vmem:[%s784 + $0x24] sm:$0xf]
        %v1242 = vld [vmem:[%s784 + $0x28] sm:$0xf]
        %v1243 = vld [vmem:[%s784 + $0x2c] sm:$0xf]
        %v1256 = vunpack.c.l.b16 %v1232
        %v1257 = vunpack.c.l.b16 %v1233
        %v1258 = vunpack.c.l.b16 %v1234
        %v1259 = vunpack.c.l.b16 %v1235
        %v1260 = vunpack.c.l.b16 %v1236
        %v1261 = vunpack.c.l.b16 %v1237
        %v1262 = vunpack.c.l.b16 %v1238
        %v1263 = vunpack.c.l.b16 %v1239
        %v1264 = vunpack.c.l.b16 %v1240
        %v1265 = vunpack.c.l.b16 %v1241
        %v1266 = vunpack.c.l.b16 %v1242
        %v1267 = vunpack.c.l.b16 %v1243
        %v1268 = vpack.c.b16 %v1257, %v1256
        %v1269 = vpack.c.b16 %v1259, %v1258
        %v1270 = vpack.c.b16 %v1261, %v1260
        %v1271 = vpack.c.b16 %v1263, %v1262
        %v1272 = vpack.c.b16 %v1265, %v1264
        %v1273 = vpack.c.b16 %v1267, %v1266
        %vm1280 = vcmask 785408
        %v1282 = vsel %vm1280, %v1231, 0
        %1284 = vmatpush.bf16.msra.mxu0 0
        %1285 = vmatpush.bf16.msra.mxu0 0
        %1286 = vmatpush.bf16.msra.mxu0 %v1273
        %1287 = vmatpush.bf16.msra.mxu0 %v1272
        %1288 = vmatpush.bf16.msra.mxu0 %v1271
        %1289 = vmatpush.bf16.msra.mxu0 %v1270
        %1290 = vmatpush.bf16.msra.mxu0 %v1269
        %1291 = vmatpush.bf16.msra.mxu0 %v1268
        %1292 = vmatmul.bf16.gmra.mxu0 %v1282
        %v1293 = vpop.f32.mrf.mxu0
        %v1294 = vadd.f32 0.0, %v1293
        %v1295 = vpop.f32.mrf.mxu0
        %v1296 = vadd.f32 0.0, %v1295
        %1297 = vdwg.mxu0
        %v1298 = vadd.f32 %v1117, %v1294
        %v1299 = vadd.f32 %v1118, %v1296
        %v1300 = vld [vmem:[%s658] sm:$0x1]
        %v1302 = vperm.slane %v1300, 0
        %v1304 = vadd.f32 %v1298, %v1302
        %v1305 = vadd.f32 %v1299, %v1302
        %1306 = vst.msk [vmem:[#allocation2] sm:$0xff] %vm807, %v1304
        %1307 = vst.msk [vmem:[#allocation2 + $0x8] sm:$0x3] %vm811, %v1305
        %p1308 = scmp.eq.s32.totalorder %s41, 1
        // Predicated region
        $region105: #{token_transformer_forward.4} parent=83 // pred_check
          %p1309 = pneg %p1308
        $region106: #{token_transformer_forward.4} parent=83 // pred_check_branch
          %1311 = sbr.rel (%p1309) target = $region108
        $region107: #{token_transformer_forward.4} parent=83 // pred_region
          %v1312 = vld [vmem:[#allocation2] sm:$0xff]
          %v1313 = vld [vmem:[#allocation2 + $0x8] sm:$0x3]
          %v1314 = vld [vmem:[%s14] sm:$0x1]
          %v1315 = vld [vmem:[%s15] sm:$0x1]
          %v1316 = vsel %vm807, %v1312, 0.0
          %1317 = vadd.xlane.f32.xlu0 %v1316
          %v1318 = vpop.xlane.xlu0 %1317
          %v1319 = vsel %vm811, %v1313, 0.0
          %1320 = vadd.xlane.f32.xlu0 %v1319
          %v1321 = vpop.xlane.xlu0 %1320
          %v1322 = vmul.f32 %v1318, %v821
          %v1323 = vmul.f32 %v1321, %v821
          %v1324 = vsub.f32 %v1312, %v1322
          %v1325 = vsub.f32 %v1313, %v1323
          %v1326 = vmul.f32 %v1324, %v1324
          %v1327 = vmul.f32 %v1325, %v1325
          %v1328 = vsel %vm807, %v1326, 0.0
          %1329 = vadd.xlane.f32.xlu0 %v1328
          %v1330 = vpop.xlane.xlu0 %1329
          %v1331 = vsel %vm811, %v1327, 0.0
          %1332 = vadd.xlane.f32.xlu0 %v1331
          %v1333 = vpop.xlane.xlu0 %1332
          %v1334 = vmul.f32 %v1330, %v821
          %v1335 = vmul.f32 %v1333, %v821
          %v1336 = vadd.f32 %v1334, 1e-05
          %v1337 = vadd.f32 %v1335, 1e-05
          %v1338 = vrsqrt.pop %v1336
          %v1339 = vmul.f32 %v1338, %v1336
          %v1340 = vmul.f32 %v1339, %v1338
          %v1341 = vmul.f32 0.5, %v1340
          %v1342 = vsub.f32 1.5, %v1341
          %v1343 = vmul.f32 %v1338, %v1342
          %vm1344 = vweird.f32 %v1336
          %vm1345 = vweird.f32 %v1338
          %vm1346 = vmor %vm1344, %vm1345
          %v1347 = vsel %vm1346, %v1338, %v1343
          %v1348 = vrsqrt.pop %v1337
          %v1349 = vmul.f32 %v1348, %v1337
          %v1350 = vmul.f32 %v1349, %v1348
          %v1351 = vmul.f32 0.5, %v1350
          %v1352 = vsub.f32 1.5, %v1351
          %v1353 = vmul.f32 %v1348, %v1352
          %vm1354 = vweird.f32 %v1337
          %vm1355 = vweird.f32 %v1348
          %vm1356 = vmor %vm1354, %vm1355
          %v1357 = vsel %vm1356, %v1348, %v1353
          %v1358 = vmul.f32 %v1324, %v1347
          %v1359 = vmul.f32 %v1325, %v1357
          %v1361 = vperm.slane %v1314, 0
          %v1363 = vmul.f32 %v1358, %v1361
          %v1364 = vmul.f32 %v1359, %v1361
          %v1366 = vperm.slane %v1315, 0
          %v1368 = vadd.f32 %v1363, %v1366
          %v1369 = vadd.f32 %v1364, %v1366
          %1370 = vst.msk [vmem:[%s789] sm:$0xff] %vm807, %v1368
          %1371 = vst.msk [vmem:[%s789 + $0x8] sm:$0x3] %vm811, %v1369
        $region108: #{token_transformer_forward.4} parent=83 // pred_fallthru
          _
        %p1372 = scmp.lt.s32.totalorder %s40, 1
        %s1373 = scalar_select %p1372, %s40, 1
        %s1374 = smul.addr %s1373, 2
        %s1375 = smul.addr %s1374, 8
        %s1376 = scalar_lea.vmem %s16, %s1375
        // Predicated region
        $region109: #{token_transformer_forward.4} parent=83 // pred_check
          %p1377 = pneg %p462
        $region110: #{token_transformer_forward.4} parent=83 // pred_check_branch
          %1379 = sbr.rel (%p1377) target = $region112
        $region111: #{token_transformer_forward.4} parent=83 // pred_region
          _
        $region112: #{token_transformer_forward.4} parent=83 // pred_fallthru
          _
      $region84: #{token_transformer_forward.4} parent=5 // pred_fallthru
        _
      %p1380 = scmp.le.s32.totalorder 2, %s31
      // Predicated region
      $region113: #{token_transformer_forward.4} parent=5 // pred_check
        %p1381 = pneg %p1380
      $region114: #{token_transformer_forward.4} parent=5 // pred_check_branch
        %1383 = sbr.rel (%p1381) target = $region116
      $region115: #{token_transformer_forward.4} parent=5 // pred_region
        %s1384 = ssub.s32 %s31, 2
        // Predicated region
        $region117: #{token_transformer_forward.4} parent=115 // pred_check
          %p1385 = pneg %p468
        $region118: #{token_transformer_forward.4} parent=115 // pred_check_branch
          %1387 = sbr.rel (%p1385) target = $region120
        $region119: #{token_transformer_forward.4} parent=115 // pred_region
          %p1388 = scmp.lt.s32.totalorder %s42, 1
          %s1389 = scalar_select %p1388, %s42, 1
          %s1390 = smul.addr %s1389, 2
          %s1391 = smul.addr %s1390, 8
          %s1392 = scalar_lea.vmem %s16, %s1391
        $region120: #{token_transformer_forward.4} parent=115 // pred_fallthru
          _
      $region116: #{token_transformer_forward.4} parent=5 // pred_fallthru
        _
    $region6: #{token_transformer_forward.4} parent=1 // loop_footer
      %s35 = sadd.s32 1, %s31
    $region7: #{token_transformer_forward.4} parent=1 // loop_footer_branch
      %30 = sbr.rel target = $region3
    $region8: #{token_transformer_forward.4} parent=1 // loop_exit
      _
    %1393 = vsyncpa [#allocation5], 1
    %s1394 = scalar_lea.sflag [#allocation5], 1
    %1395 = vsyncpa %s1394, 1
    %1396 = vsyncpa [#allocation7], 1
    %s1397 = scalar_lea.sflag [#allocation7], 1
    %1398 = vsyncpa %s1397, 1
    %1399 = vsyncpa [#allocation10], 1
    %s1400 = scalar_lea.sflag [#allocation10], 1
    %1401 = vsyncpa %s1400, 1

</llo_original>
